<compile_context>
chip_gen: v7x
topology: tpu7x:2x2x1
jax: 0.10.0
libtpu: 0.0.40
codegen_flags: <defaults>
</compile_context>

<pallas_src>
import math
import numpy as np
import jax
import jax.numpy as jnp
from jax.experimental import pallas as pl
from jax.experimental.pallas import tpu as pltpu

BN_EPS = 1e-5          # nn.BatchNorm1d default eps
LRELU_SLOPE = 0.01     # nn.LeakyReLU default negative_slope
MASK_FILL = -900000000.0
NEG_LARGE = -3.0e38    # finite "-inf" for the masked row-argmax
OUT_PAD = 128          # lane-dense classifier output width (>= num_classes)
MAX_UNROLL_LAYERS = 3  # static unroll up to this many SimtaPlus layers, fori_loop beyond


# ---------------------------------------------------------------------------
# One fused Pallas kernel for the entire forward pass
# ---------------------------------------------------------------------------

def _simta_fused_kernel(
    t_ref, rmask_ref, xt_ref, xs_ref,                      # data
    aw1_ref, ag1_ref, abt1_ref, aw2_ref, ab2_ref,          # attn_mlp (SMEM scalars)
    wt0_ref, bt0_ref, gt0_ref, bet0_ref,                   # stage-1 non_linear_temp
    ws0_ref, bs0_ref, gs0_ref, bes0_ref,                   # stage-1 non_linear_stat
    lwtt_ref, lwts_ref, lbt_ref, lgt_ref, lbet_ref,        # per-layer non_linear_temp (stacked)
    lws_ref, lbs_ref, lgs_ref, lbes_ref,                   # per-layer non_linear_stat (stacked)
    cwt_ref, cws_ref, cb_ref,                              # classifier (split + lane padded)
    out_ref, outmax_ref,                                   # (B,T,OUT_PAD) and (B,OUT_PAD)
):
    f32 = jnp.float32
    B, T = t_ref.shape
    temp_h = wt0_ref.shape[1]
    num_layers = lwtt_ref.shape[0]

    rmask = rmask_ref[...]                                 # (B, T)  1.0 valid / 0.0 padding
    rmask3 = rmask[:, :, None]                             # (B, T, 1)
    kmask2 = rmask[:, None, :] > 0.0                       # (B, 1, T) key mask (broadcasts)
    n_valid = jnp.sum(rmask)                               # == sum(lengths)
    inv_n = 1.0 / jnp.maximum(n_valid, 1.0)                # one exact divide at kernel entry

    def lrelu(v):
        return jnp.where(v >= 0.0, v, LRELU_SLOPE * v)

    def bn_lrelu_rows(y, gamma, beta):
        # BatchNorm1d (training-mode forward of a fresh module: batch stats, biased var) + LeakyReLU
        mu = jnp.mean(y, axis=0, keepdims=True)
        yc = y - mu
        var = jnp.mean(yc * yc, axis=0, keepdims=True)
        return lrelu(yc * (jax.lax.rsqrt(var + BN_EPS) * gamma) + beta)

    def bn_lrelu_packed(y, gamma, beta):
        # BatchNorm1d over the packed (valid) rows of a padded (B,T,C) tensor + LeakyReLU.
        mu = jnp.sum(y * rmask3, axis=(0, 1)) * inv_n      # (C,)
        yc = y - mu
        var = jnp.sum(yc * yc * rmask3, axis=(0, 1)) * inv_n
        return lrelu(yc * (jax.lax.rsqrt(var + BN_EPS) * gamma) + beta)

    def time_linear(x3, w):
        # (B,T,Cin) @ (Cin,Cout) -> (B,T,Cout) as a single flat M=B*T MXU matmul
        Bt, Tt, Cin = x3.shape
        y = jnp.dot(x3.reshape(Bt * Tt, Cin), w, preferred_element_type=f32)
        return y.reshape(Bt, Tt, w.shape[1])

    # ---- temporal attention: attn_mlp(dt) with Linear(1,H)+BN folded to one FMA per unit ----
    # dt max and BN statistics intentionally run over ALL B*T*T entries (including padded
    # time steps), exactly like the PyTorch reference which sees the full dt tensor.
    t = t_ref[...]                                         # (B, T)
    dt = t[:, None, :] - t[:, :, None]                     # dt[b,i,j] = t[b,j] - t[b,i]
    dt = dt * (1.0 / (jnp.max(dt) + 1e-8))
    mu_dt = jnp.mean(dt)
    var_dt = jnp.mean((dt - mu_dt) ** 2)

    # Read the SMEM scalars once and hoist all per-unit BN-fold math out of the vector loop:
    # z_k = alpha_k*dt + beta_k  (Linear(1,H) bias cancels under BatchNorm).
    H = aw1_ref.shape[0]
    b2 = ab2_ref[0]
    alphas, betas, w2s = [], [], []
    for k in range(H):
        w1k = aw1_ref[k]
        a_k = w1k * ag1_ref[k] * jax.lax.rsqrt(var_dt * (w1k * w1k) + BN_EPS)
        alphas.append(a_k)
        betas.append(abt1_ref[k] - mu_dt * a_k)
        w2s.append(aw2_ref[k])

    logits = lrelu(dt * alphas[0] + betas[0]) * w2s[0] + b2
    for k in range(1, H):
        logits = logits + lrelu(dt * alphas[k] + betas[k]) * w2s[k]

    logits = jnp.where(kmask2, logits, MASK_FILL)          # masked_fill(~mask, -9e8)
    logits = logits - jnp.max(logits, axis=-1, keepdims=True)
    e = jnp.exp(logits)
    # exact softmax denominator (parity with torch); masked once, reused by every layer
    temp_attn_masked = jnp.where(kmask2, e / jnp.sum(e, axis=-1, keepdims=True), 0.0)

    # ---- stage-1 MLPs ----------------------------------------------------------------
    x_t = bn_lrelu_packed(time_linear(xt_ref[...], wt0_ref[...]) + bt0_ref[...],
                          gt0_ref[...], bet0_ref[...])                      # (B, T, temp_h)
    x_s = bn_lrelu_rows(jnp.dot(xs_ref[...], ws0_ref[...],
                                preferred_element_type=f32) + bs0_ref[...],
                        gs0_ref[...], bes0_ref[...])                        # (B, stat_h)

    inv_sqrt_d = 1.0 / math.sqrt(float(temp_h))

    # ---- SimtaPlus layers --------------------------------------------------------------
    def layer_step(wtt, wts, bt, gt, bet, ws, bs, gs, bes, x_t, x_s):
        # non_linear_temp(cat(x_temp, repeat(x_stat))) via split weights: the x_stat_repeat
        # branch reduces to a per-batch projection broadcast over time (no concat / repeat).
        y3 = time_linear(x_t, wtt)
        y3 = y3 + jnp.dot(x_s, wts, preferred_element_type=f32)[:, None, :]
        y3 = y3 + bt
        x_t = bn_lrelu_packed(y3, gt, bet)
        # TODO(synk): nn.Dropout(drop_prob) after each MLPLayer is stochastic; modeled as identity (p=0 / eval).
        x_t = x_t * rmask3        # pad_packed_sequences: padded rows are exact zeros

        # self-attention softmax(x x^T / sqrt(d)); padded (zero) key rows stay in the softmax
        # denominator exactly like the reference, masking happens only after adding temp_attn.
        qk = jnp.einsum('bic,bjc->bij', x_t, x_t, preferred_element_type=f32) * inv_sqrt_d
        qk = qk - jnp.max(qk, axis=-1, keepdims=True)
        eq = jnp.exp(qk)
        self_attn = eq / jnp.sum(eq, axis=-1, keepdims=True)
        attn = jnp.where(kmask2, self_attn, 0.0) + temp_attn_masked
        x_t = jnp.einsum('bij,bjc->bic', attn, x_t, preferred_element_type=f32)

        # non_linear_stat (uses this layer's *input* x_stat, matching the reference ordering)
        x_s = bn_lrelu_rows(jnp.dot(x_s, ws, preferred_element_type=f32) + bs, gs, bes)
        return x_t, x_s

    if num_layers <= MAX_UNROLL_LAYERS:
        for l in range(num_layers):
            x_t, x_s = layer_step(lwtt_ref[l], lwts_ref[l], lbt_ref[l], lgt_ref[l],
                                  lbet_ref[l], lws_ref[l], lbs_ref[l], lgs_ref[l],
                                  lbes_ref[l], x_t, x_s)
    else:
        # fori_loop bounds the per-layer live set (qk/eq temporaries) at larger L
        def loop_body(l, carry):
            xt_c, xs_c = carry
            return layer_step(lwtt_ref[l], lwts_ref[l], lbt_ref[l], lgt_ref[l],
                              lbet_ref[l], lws_ref[l], lbs_ref[l], lgs_ref[l],
                              lbes_ref[l], xt_c, xs_c)
        x_t, x_s = jax.lax.fori_loop(0, num_layers, loop_body, (x_t, x_s))

    # ---- classifier on cat(x_temp, x_stat_repeat), lane-dense 128-wide output slab -----
    out3 = time_linear(x_t, cwt_ref[...])
    out3 = out3 + jnp.dot(x_s, cws_ref[...], preferred_element_type=f32)[:, None, :]
    out3 = out3 + cb_ref[...]
    out_ref[...] = out3

    # ---- fused output_max: per-sequence row with max(out[:,1]-out[:,0]) over valid rows ----
    lane = jax.lax.broadcasted_iota(jnp.int32, (1, 1, out3.shape[-1]), 2)
    sel = (lane == 1).astype(f32) - (lane == 0).astype(f32)       # picks class1 - class0
    diff = jnp.sum(out3 * sel, axis=2)                            # (B, T)
    diff = jnp.where(rmask > 0.0, diff, NEG_LARGE)
    dmax = jnp.max(diff, axis=1, keepdims=True)                   # (B, 1)
    tids = jax.lax.broadcasted_iota(jnp.int32, (B, T), 1).astype(f32)
    idx = jnp.min(jnp.where(diff >= dmax, tids, float(T)), axis=1, keepdims=True)  # first max
    onehot = (tids == idx).astype(f32)                            # (B, T), exactly one 1/row
    outmax_ref[...] = jnp.sum(out3 * onehot[:, :, None], axis=1)  # (B, OUT_PAD)


# ---------------------------------------------------------------------------
# Parameter init (deterministic, PyTorch-Linear-style uniform; BN gamma=1, beta=0)
# ---------------------------------------------------------------------------

def _linear_init(key, fan_in, fan_out):
    kw, kb = jax.random.split(key)
    bound = 1.0 / math.sqrt(fan_in)
    w = jax.random.uniform(kw, (fan_in, fan_out), jnp.float32, -bound, bound)
    b = jax.random.uniform(kb, (fan_out,), jnp.float32, -bound, bound)
    return w, b


def _mlp_layer_init(key, fan_in, fan_out):
    w, b = _linear_init(key, fan_in, fan_out)
    return dict(w=w, b=b,
                gamma=jnp.ones((fan_out,), jnp.float32),
                beta=jnp.zeros((fan_out,), jnp.float32))


def init_simta_plus_params(key, temp_in, stat_in, temp_h, stat_h, attn_h,
                           num_layers, num_classes):
    keys = jax.random.split(key, 5 + 2 * num_layers)
    w1, b1 = _linear_init(keys[0], 1, attn_h)            # attn_mlp Linear(1, attn_h)
    w2, b2 = _linear_init(keys[1], attn_h, 1)            # attn_mlp Linear(attn_h, 1)
    attn_mlp = dict(w1=w1.reshape(-1), b1=b1,            # b1 cancels under BatchNorm
                    g1=jnp.ones((attn_h,), jnp.float32),
                    bt1=jnp.zeros((attn_h,), jnp.float32),
                    w2=w2.reshape(-1), b2=b2)
    nl_temp = _mlp_layer_init(keys[2], temp_in, temp_h)
    nl_stat = _mlp_layer_init(keys[3], stat_in, stat_h)
    layers = []
    for i in range(num_layers):
        layers.append(dict(
            nl_temp=_mlp_layer_init(keys[4 + 2 * i], temp_h + stat_h, temp_h),
            nl_stat=_mlp_layer_init(keys[5 + 2 * i], stat_h, stat_h)))
    clf_w, clf_b = _linear_init(keys[-1], temp_h + stat_h, num_classes)
    return dict(attn_mlp=attn_mlp, nl_temp=nl_temp, nl_stat=nl_stat,
                layers=layers, clf_w=clf_w, clf_b=clf_b)


def pack_params(params, out_pad=OUT_PAD):
    """One-time repack into kernel-ready operands: stacked per-layer weights, split
    'concat' weights (temp / stat halves), zero-padded lane-dense classifier."""
    am = params["attn_mlp"]
    p0t, p0s = params["nl_temp"], params["nl_stat"]
    lyrs = params["layers"]
    temp_h = p0t["w"].shape[1]

    lwtt = jnp.stack([l["nl_temp"]["w"][:temp_h] for l in lyrs])                 # (L, temp_h, temp_h)
    lwts = jnp.stack([l["nl_temp"]["w"][temp_h:] for l in lyrs])                 # (L, stat_h, temp_h)
    lbt = jnp.stack([l["nl_temp"]["b"].reshape(1, -1) for l in lyrs])            # (L, 1, temp_h)
    lgt = jnp.stack([l["nl_temp"]["gamma"].reshape(1, -1) for l in lyrs])
    lbet = jnp.stack([l["nl_temp"]["beta"].reshape(1, -1) for l in lyrs])
    lws = jnp.stack([l["nl_stat"]["w"] for l in lyrs])                           # (L, stat_h, stat_h)
    lbs = jnp.stack([l["nl_stat"]["b"].reshape(1, -1) for l in lyrs])
    lgs = jnp.stack([l["nl_stat"]["gamma"].reshape(1, -1) for l in lyrs])
    lbes = jnp.stack([l["nl_stat"]["beta"].reshape(1, -1) for l in lyrs])

    clf_w, clf_b = params["clf_w"], params["clf_b"]
    nc = clf_w.shape[1]
    cwt = jnp.zeros((temp_h, out_pad), jnp.float32).at[:, :nc].set(clf_w[:temp_h])
    cws = jnp.zeros((clf_w.shape[0] - temp_h, out_pad), jnp.float32).at[:, :nc].set(clf_w[temp_h:])
    cb = jnp.zeros((1, out_pad), jnp.float32).at[0, :nc].set(clf_b)

    return dict(
        aw1=am["w1"], ag1=am["g1"], abt1=am["bt1"], aw2=am["w2"], ab2=am["b2"],
        wt0=p0t["w"], bt0=p0t["b"].reshape(1, -1),
        gt0=p0t["gamma"].reshape(1, -1), bet0=p0t["beta"].reshape(1, -1),
        ws0=p0s["w"], bs0=p0s["b"].reshape(1, -1),
        gs0=p0s["gamma"].reshape(1, -1), bes0=p0s["beta"].reshape(1, -1),
        lwtt=lwtt, lwts=lwts, lbt=lbt, lgt=lgt, lbet=lbet,
        lws=lws, lbs=lbs, lgs=lgs, lbes=lbes,
        cwt=cwt, cws=cws, cb=cb)


# ---------------------------------------------------------------------------
# Forward (mirrors SimtaPlus.forward); single fused pallas_call + one constant-index gather
# ---------------------------------------------------------------------------

def simta_plus_forward(kparams, x_temp, x_stat, t, masks, lengths, num_classes):
    B, T = t.shape
    lengths = [int(l) for l in lengths]
    bidx = np.concatenate([np.full(l, i, np.int32) for i, l in enumerate(lengths)])
    tidx = np.concatenate([np.arange(l, dtype=np.int32) for l in lengths])

    row_mask = jnp.any(masks, axis=-1)                               # (B, T) bool
    rmask = row_mask.astype(jnp.float32)
    # pack -> pad: one scatter with compile-time indices (padded rows stay exact zeros)
    x_temp_pad = jnp.zeros((B, T, x_temp.shape[-1]), jnp.float32).at[bidx, tidx].set(x_temp)

    operands = (t, rmask, x_temp_pad, x_stat,
                kparams["aw1"], kparams["ag1"], kparams["abt1"], kparams["aw2"], kparams["ab2"],
                kparams["wt0"], kparams["bt0"], kparams["gt0"], kparams["bet0"],
                kparams["ws0"], kparams["bs0"], kparams["gs0"], kparams["bes0"],
                kparams["lwtt"], kparams["lwts"], kparams["lbt"], kparams["lgt"], kparams["lbet"],
                kparams["lws"], kparams["lbs"], kparams["lgs"], kparams["lbes"],
                kparams["cwt"], kparams["cws"], kparams["cb"])

    vmem = pl.BlockSpec(memory_space=pltpu.MemorySpace.VMEM)
    smem = pl.BlockSpec(memory_space=pltpu.MemorySpace.SMEM)
    in_specs = [vmem] * 4 + [smem] * 5 + [vmem] * (len(operands) - 9)

    # Explicit VMEM budget: ~4 live B*T*T f32 attention tensors + activations + params,
    # clamped to 64 MiB so the fully-resident design also fits v7x's VMEM.
    # TODO(synk): a batch grid (dimension_semantics=("parallel",)) would use v7x's second
    # TensorCore, but BatchNorm batch statistics couple the whole batch, so that needs a
    # two-pass stats scheme; kept as a single grid-less call for exact semantics.
    H = kparams["aw1"].shape[0]
    TI, TH = kparams["wt0"].shape
    SI, SH = kparams["ws0"].shape
    L = kparams["lwtt"].shape[0]
    OP = kparams["cwt"].shape[1]
    param_bytes = 4 * sum(int(np.prod(v.shape)) for v in kparams.values())
    live_bytes = 4 * (4 * B * T * T + B * T * (2 * TH + TI + OP) + 2 * B * SH)
    vmem_limit = int(min(64 << 20, max(32 << 20, 2 * (param_bytes + live_bytes))))

    flops = int(B * T * T * (6 * H + 12)
                + 2 * B * T * TI * TH + 2 * B * SI * SH
                + L * (2 * B * T * TH * TH + 2 * B * SH * TH + 4 * B * T * T * TH
                       + 2 * B * SH * SH + 10 * B * T * T)
                + 2 * B * T * TH * OP + 2 * B * SH * OP)
    transcendentals = int((L + 1) * B * T * (T + 1) + H + 8 * (L + 1))
    bytes_accessed = int(4 * (sum(int(a.size) for a in operands) + B * T * OP + B * OP))

    out_pad, out_max_pad = pl.pallas_call(
        _simta_fused_kernel,
        out_shape=(jax.ShapeDtypeStruct((B, T, OUT_PAD), jnp.float32),
                   jax.ShapeDtypeStruct((B, OUT_PAD), jnp.float32)),
        in_specs=in_specs,
        out_specs=(vmem, vmem),
        compiler_params=pltpu.CompilerParams(vmem_limit_bytes=vmem_limit),
        cost_estimate=pl.CostEstimate(flops=flops,
                                      transcendentals=transcendentals,
                                      bytes_accessed=bytes_accessed),
    )(*operands)

    # pad -> pack: one gather with compile-time indices (single readback of the slab)
    output = out_pad[bidx, tidx][:, :num_classes]                    # (N, num_classes)
    output_max = out_max_pad[:, :num_classes]                        # (B, num_classes)
    return output, output_max


# ---------------------------------------------------------------------------

if __name__ == "__main__":
    TEMP_IN, STAT_IN = 6, 5
    TEMP_H, STAT_H, ATTN_H = 16, 8, 8
    NUM_LAYERS, NUM_CLASSES = 2, 3
    B, T = 2, 8
    lengths = [8, 6]            # max(lengths) == T (required by the reference model)
    N = sum(lengths)

    key = jax.random.PRNGKey(0)
    kp, kx, ks, kt = jax.random.split(key, 4)
    params = init_simta_plus_params(kp, TEMP_IN, STAT_IN, TEMP_H, STAT_H, ATTN_H,
                                    NUM_LAYERS, NUM_CLASSES)
    kparams = pack_params(params)

    x_temp = jax.random.normal(kx, (N, TEMP_IN), jnp.float32)        # packed sequences
    x_stat = jax.random.normal(ks, (B, STAT_IN), jnp.float32)
    t = jax.random.uniform(kt, (B, T), jnp.float32, 0.0, 10.0)
    masks = (jnp.arange(T)[None, :, None] < jnp.asarray(lengths)[:, None, None])
    masks = jnp.broadcast_to(masks, (B, T, 4))                       # (B, T, 4) bool

    fwd = jax.jit(lambda kp_, xt_, xs_, t_, m_: simta_plus_forward(
        kp_, xt_, xs_, t_, m_, lengths, NUM_CLASSES))
    output, output_max = fwd(kparams, x_temp, x_stat, t, masks)
    jax.block_until_ready((output, output_max))
    assert output.shape == (N, NUM_CLASSES)
    assert output_max.shape == (B, NUM_CLASSES)
    print("KERNEL_OK")
</pallas_src>

<mosaic_0001>
module attributes {stable_mosaic.version = 11 : i64} {
  func.func @_simta_fused_kernel(%arg0: memref<2x8xf32, #tpu.memory_space<vmem>>, %arg1: memref<2x8xf32, #tpu.memory_space<vmem>>, %arg2: memref<2x8x6xf32, #tpu.memory_space<vmem>>, %arg3: memref<2x5xf32, #tpu.memory_space<vmem>>, %arg4: memref<8xf32, #tpu.memory_space<smem>>, %arg5: memref<8xf32, #tpu.memory_space<smem>>, %arg6: memref<8xf32, #tpu.memory_space<smem>>, %arg7: memref<8xf32, #tpu.memory_space<smem>>, %arg8: memref<1xf32, #tpu.memory_space<smem>>, %arg9: memref<6x16xf32, #tpu.memory_space<vmem>>, %arg10: memref<1x16xf32, #tpu.memory_space<vmem>>, %arg11: memref<1x16xf32, #tpu.memory_space<vmem>>, %arg12: memref<1x16xf32, #tpu.memory_space<vmem>>, %arg13: memref<5x8xf32, #tpu.memory_space<vmem>>, %arg14: memref<1x8xf32, #tpu.memory_space<vmem>>, %arg15: memref<1x8xf32, #tpu.memory_space<vmem>>, %arg16: memref<1x8xf32, #tpu.memory_space<vmem>>, %arg17: memref<2x16x16xf32, #tpu.memory_space<vmem>>, %arg18: memref<2x8x16xf32, #tpu.memory_space<vmem>>, %arg19: memref<2x1x16xf32, #tpu.memory_space<vmem>>, %arg20: memref<2x1x16xf32, #tpu.memory_space<vmem>>, %arg21: memref<2x1x16xf32, #tpu.memory_space<vmem>>, %arg22: memref<2x8x8xf32, #tpu.memory_space<vmem>>, %arg23: memref<2x1x8xf32, #tpu.memory_space<vmem>>, %arg24: memref<2x1x8xf32, #tpu.memory_space<vmem>>, %arg25: memref<2x1x8xf32, #tpu.memory_space<vmem>>, %arg26: memref<16x128xf32, #tpu.memory_space<vmem>>, %arg27: memref<8x128xf32, #tpu.memory_space<vmem>>, %arg28: memref<1x128xf32, #tpu.memory_space<vmem>>, %arg29: memref<2x8x128xf32, #tpu.memory_space<vmem>>, %arg30: memref<2x128xf32, #tpu.memory_space<vmem>>) attributes {dimension_semantics = [], scalar_prefetch = 0 : i64, scratch_operands = 0 : i64, tpu.core_type = #tpu.core_type<tc>} {
    %c0 = arith.constant 0 : index
    %c0_0 = arith.constant 0 : index
    %0 = vector.load %arg1[%c0, %c0_0] : memref<2x8xf32, #tpu.memory_space<vmem>>, vector<2x8xf32>
    %1 = vector.shape_cast %0 : vector<2x8xf32> to vector<2x8x1xf32>
    %2 = vector.shape_cast %0 : vector<2x8xf32> to vector<2x1x8xf32>
    %cst = arith.constant 0.000000e+00 : f32
    %3 = vector.broadcast %cst : f32 to vector<2x1x8xf32>
    %4 = arith.cmpf ogt, %2, %3 : vector<2x1x8xf32>
    %5 = vector.shape_cast %0 : vector<2x8xf32> to vector<1x2x8xf32>
    %cst_1 = arith.constant dense<0.000000e+00> : vector<1xf32>
    %6 = vector.multi_reduction <add>, %5, %cst_1 [1, 2] : vector<1x2x8xf32> to vector<1xf32>
    %7 = vector.shape_cast %6 : vector<1xf32> to vector<1x1x1xf32>
    %8 = vector.extract %7[0, 0, 0] : f32 from vector<1x1x1xf32>
    %cst_2 = arith.constant 1.000000e+00 : f32
    %9 = arith.maximumf %8, %cst_2 : f32
    %cst_3 = arith.constant 1.000000e+00 : f32
    %10 = arith.divf %cst_3, %9 : f32
    %c0_4 = arith.constant 0 : index
    %c0_5 = arith.constant 0 : index
    %11 = vector.load %arg0[%c0_4, %c0_5] : memref<2x8xf32, #tpu.memory_space<vmem>>, vector<2x8xf32>
    %12 = vector.shape_cast %11 : vector<2x8xf32> to vector<2x1x8xf32>
    %13 = vector.shape_cast %11 : vector<2x8xf32> to vector<2x8x1xf32>
    %14 = vector.broadcast %12 : vector<2x1x8xf32> to vector<2x8x8xf32>
    %15 = vector.broadcast %13 : vector<2x8x1xf32> to vector<2x8x8xf32>
    %16 = arith.subf %14, %15 : vector<2x8x8xf32>
    %17 = vector.shape_cast %16 : vector<2x8x8xf32> to vector<1x2x8x8xf32>
    %cst_6 = arith.constant dense<0xFF800000> : vector<1xf32>
    %18 = vector.multi_reduction <maximumf>, %17, %cst_6 [1, 2, 3] : vector<1x2x8x8xf32> to vector<1xf32>
    %19 = vector.shape_cast %18 : vector<1xf32> to vector<1x1x1x1xf32>
    %20 = vector.extract %19[0, 0, 0, 0] : f32 from vector<1x1x1x1xf32>
    %cst_7 = arith.constant 9.99999993E-9 : f32
    %21 = arith.addf %20, %cst_7 : f32
    %cst_8 = arith.constant 1.000000e+00 : f32
    %22 = arith.divf %cst_8, %21 : f32
    %23 = vector.broadcast %22 : f32 to vector<2x8x8xf32>
    %24 = arith.mulf %16, %23 : vector<2x8x8xf32>
    %25 = vector.shape_cast %24 : vector<2x8x8xf32> to vector<1x2x8x8xf32>
    %cst_9 = arith.constant dense<0.000000e+00> : vector<1xf32>
    %26 = vector.multi_reduction <add>, %25, %cst_9 [1, 2, 3] : vector<1x2x8x8xf32> to vector<1xf32>
    %27 = vector.shape_cast %26 : vector<1xf32> to vector<1x1x1x1xf32>
    %28 = vector.extract %27[0, 0, 0, 0] : f32 from vector<1x1x1x1xf32>
    %cst_10 = arith.constant 1.280000e+02 : f32
    %29 = arith.divf %28, %cst_10 : f32
    %30 = vector.broadcast %29 : f32 to vector<2x8x8xf32>
    %31 = arith.subf %24, %30 : vector<2x8x8xf32>
    %32 = arith.mulf %31, %31 : vector<2x8x8xf32>
    %33 = vector.shape_cast %32 : vector<2x8x8xf32> to vector<1x2x8x8xf32>
    %cst_11 = arith.constant dense<0.000000e+00> : vector<1xf32>
    %34 = vector.multi_reduction <add>, %33, %cst_11 [1, 2, 3] : vector<1x2x8x8xf32> to vector<1xf32>
    %35 = vector.shape_cast %34 : vector<1xf32> to vector<1x1x1x1xf32>
    %36 = vector.extract %35[0, 0, 0, 0] : f32 from vector<1x1x1x1xf32>
    %cst_12 = arith.constant 1.280000e+02 : f32
    %37 = arith.divf %36, %cst_12 : f32
    %c0_13 = arith.constant 0 : index
    %38 = memref.load %arg8[%c0_13] : memref<1xf32, #tpu.memory_space<smem>>
    %c0_14 = arith.constant 0 : index
    %39 = memref.load %arg4[%c0_14] : memref<8xf32, #tpu.memory_space<smem>>
    %c0_15 = arith.constant 0 : index
    %40 = memref.load %arg5[%c0_15] : memref<8xf32, #tpu.memory_space<smem>>
    %41 = arith.mulf %39, %40 : f32
    %42 = arith.mulf %39, %39 : f32
    %43 = arith.mulf %37, %42 : f32
    %cst_16 = arith.constant 9.99999974E-6 : f32
    %44 = arith.addf %43, %cst_16 : f32
    %45 = math.rsqrt %44 : f32
    %46 = arith.mulf %41, %45 : f32
    %c0_17 = arith.constant 0 : index
    %47 = memref.load %arg6[%c0_17] : memref<8xf32, #tpu.memory_space<smem>>
    %48 = arith.mulf %29, %46 : f32
    %49 = arith.subf %47, %48 : f32
    %c0_18 = arith.constant 0 : index
    %50 = memref.load %arg7[%c0_18] : memref<8xf32, #tpu.memory_space<smem>>
    %c1 = arith.constant 1 : index
    %51 = memref.load %arg4[%c1] : memref<8xf32, #tpu.memory_space<smem>>
    %c1_19 = arith.constant 1 : index
    %52 = memref.load %arg5[%c1_19] : memref<8xf32, #tpu.memory_space<smem>>
    %53 = arith.mulf %51, %52 : f32
    %54 = arith.mulf %51, %51 : f32
    %55 = arith.mulf %37, %54 : f32
    %cst_20 = arith.constant 9.99999974E-6 : f32
    %56 = arith.addf %55, %cst_20 : f32
    %57 = math.rsqrt %56 : f32
    %58 = arith.mulf %53, %57 : f32
    %c1_21 = arith.constant 1 : index
    %59 = memref.load %arg6[%c1_21] : memref<8xf32, #tpu.memory_space<smem>>
    %60 = arith.mulf %29, %58 : f32
    %61 = arith.subf %59, %60 : f32
    %c1_22 = arith.constant 1 : index
    %62 = memref.load %arg7[%c1_22] : memref<8xf32, #tpu.memory_space<smem>>
    %c2 = arith.constant 2 : index
    %63 = memref.load %arg4[%c2] : memref<8xf32, #tpu.memory_space<smem>>
    %c2_23 = arith.constant 2 : index
    %64 = memref.load %arg5[%c2_23] : memref<8xf32, #tpu.memory_space<smem>>
    %65 = arith.mulf %63, %64 : f32
    %66 = arith.mulf %63, %63 : f32
    %67 = arith.mulf %37, %66 : f32
    %cst_24 = arith.constant 9.99999974E-6 : f32
    %68 = arith.addf %67, %cst_24 : f32
    %69 = math.rsqrt %68 : f32
    %70 = arith.mulf %65, %69 : f32
    %c2_25 = arith.constant 2 : index
    %71 = memref.load %arg6[%c2_25] : memref<8xf32, #tpu.memory_space<smem>>
    %72 = arith.mulf %29, %70 : f32
    %73 = arith.subf %71, %72 : f32
    %c2_26 = arith.constant 2 : index
    %74 = memref.load %arg7[%c2_26] : memref<8xf32, #tpu.memory_space<smem>>
    %c3 = arith.constant 3 : index
    %75 = memref.load %arg4[%c3] : memref<8xf32, #tpu.memory_space<smem>>
    %c3_27 = arith.constant 3 : index
    %76 = memref.load %arg5[%c3_27] : memref<8xf32, #tpu.memory_space<smem>>
    %77 = arith.mulf %75, %76 : f32
    %78 = arith.mulf %75, %75 : f32
    %79 = arith.mulf %37, %78 : f32
    %cst_28 = arith.constant 9.99999974E-6 : f32
    %80 = arith.addf %79, %cst_28 : f32
    %81 = math.rsqrt %80 : f32
    %82 = arith.mulf %77, %81 : f32
    %c3_29 = arith.constant 3 : index
    %83 = memref.load %arg6[%c3_29] : memref<8xf32, #tpu.memory_space<smem>>
    %84 = arith.mulf %29, %82 : f32
    %85 = arith.subf %83, %84 : f32
    %c3_30 = arith.constant 3 : index
    %86 = memref.load %arg7[%c3_30] : memref<8xf32, #tpu.memory_space<smem>>
    %c4 = arith.constant 4 : index
    %87 = memref.load %arg4[%c4] : memref<8xf32, #tpu.memory_space<smem>>
    %c4_31 = arith.constant 4 : index
    %88 = memref.load %arg5[%c4_31] : memref<8xf32, #tpu.memory_space<smem>>
    %89 = arith.mulf %87, %88 : f32
    %90 = arith.mulf %87, %87 : f32
    %91 = arith.mulf %37, %90 : f32
    %cst_32 = arith.constant 9.99999974E-6 : f32
    %92 = arith.addf %91, %cst_32 : f32
    %93 = math.rsqrt %92 : f32
    %94 = arith.mulf %89, %93 : f32
    %c4_33 = arith.constant 4 : index
    %95 = memref.load %arg6[%c4_33] : memref<8xf32, #tpu.memory_space<smem>>
    %96 = arith.mulf %29, %94 : f32
    %97 = arith.subf %95, %96 : f32
    %c4_34 = arith.constant 4 : index
    %98 = memref.load %arg7[%c4_34] : memref<8xf32, #tpu.memory_space<smem>>
    %c5 = arith.constant 5 : index
    %99 = memref.load %arg4[%c5] : memref<8xf32, #tpu.memory_space<smem>>
    %c5_35 = arith.constant 5 : index
    %100 = memref.load %arg5[%c5_35] : memref<8xf32, #tpu.memory_space<smem>>
    %101 = arith.mulf %99, %100 : f32
    %102 = arith.mulf %99, %99 : f32
    %103 = arith.mulf %37, %102 : f32
    %cst_36 = arith.constant 9.99999974E-6 : f32
    %104 = arith.addf %103, %cst_36 : f32
    %105 = math.rsqrt %104 : f32
    %106 = arith.mulf %101, %105 : f32
    %c5_37 = arith.constant 5 : index
    %107 = memref.load %arg6[%c5_37] : memref<8xf32, #tpu.memory_space<smem>>
    %108 = arith.mulf %29, %106 : f32
    %109 = arith.subf %107, %108 : f32
    %c5_38 = arith.constant 5 : index
    %110 = memref.load %arg7[%c5_38] : memref<8xf32, #tpu.memory_space<smem>>
    %c6 = arith.constant 6 : index
    %111 = memref.load %arg4[%c6] : memref<8xf32, #tpu.memory_space<smem>>
    %c6_39 = arith.constant 6 : index
    %112 = memref.load %arg5[%c6_39] : memref<8xf32, #tpu.memory_space<smem>>
    %113 = arith.mulf %111, %112 : f32
    %114 = arith.mulf %111, %111 : f32
    %115 = arith.mulf %37, %114 : f32
    %cst_40 = arith.constant 9.99999974E-6 : f32
    %116 = arith.addf %115, %cst_40 : f32
    %117 = math.rsqrt %116 : f32
    %118 = arith.mulf %113, %117 : f32
    %c6_41 = arith.constant 6 : index
    %119 = memref.load %arg6[%c6_41] : memref<8xf32, #tpu.memory_space<smem>>
    %120 = arith.mulf %29, %118 : f32
    %121 = arith.subf %119, %120 : f32
    %c6_42 = arith.constant 6 : index
    %122 = memref.load %arg7[%c6_42] : memref<8xf32, #tpu.memory_space<smem>>
    %c7 = arith.constant 7 : index
    %123 = memref.load %arg4[%c7] : memref<8xf32, #tpu.memory_space<smem>>
    %c7_43 = arith.constant 7 : index
    %124 = memref.load %arg5[%c7_43] : memref<8xf32, #tpu.memory_space<smem>>
    %125 = arith.mulf %123, %124 : f32
    %126 = arith.mulf %123, %123 : f32
    %127 = arith.mulf %37, %126 : f32
    %cst_44 = arith.constant 9.99999974E-6 : f32
    %128 = arith.addf %127, %cst_44 : f32
    %129 = math.rsqrt %128 : f32
    %130 = arith.mulf %125, %129 : f32
    %c7_45 = arith.constant 7 : index
    %131 = memref.load %arg6[%c7_45] : memref<8xf32, #tpu.memory_space<smem>>
    %132 = arith.mulf %29, %130 : f32
    %133 = arith.subf %131, %132 : f32
    %c7_46 = arith.constant 7 : index
    %134 = memref.load %arg7[%c7_46] : memref<8xf32, #tpu.memory_space<smem>>
    %135 = vector.broadcast %46 : f32 to vector<2x8x8xf32>
    %136 = arith.mulf %24, %135 : vector<2x8x8xf32>
    %137 = vector.broadcast %49 : f32 to vector<2x8x8xf32>
    %138 = arith.addf %136, %137 : vector<2x8x8xf32>
    %cst_47 = arith.constant 0.000000e+00 : f32
    %139 = vector.broadcast %cst_47 : f32 to vector<2x8x8xf32>
    %140 = arith.cmpf oge, %138, %139 : vector<2x8x8xf32>
    %cst_48 = arith.constant 0.00999999977 : f32
    %141 = vector.broadcast %cst_48 : f32 to vector<2x8x8xf32>
    %142 = arith.mulf %141, %138 : vector<2x8x8xf32>
    %143 = arith.select %140, %138, %142 : vector<2x8x8xi1>, vector<2x8x8xf32>
    %144 = vector.broadcast %50 : f32 to vector<2x8x8xf32>
    %145 = arith.mulf %143, %144 : vector<2x8x8xf32>
    %146 = vector.broadcast %38 : f32 to vector<2x8x8xf32>
    %147 = arith.addf %145, %146 : vector<2x8x8xf32>
    %148 = vector.broadcast %58 : f32 to vector<2x8x8xf32>
    %149 = arith.mulf %24, %148 : vector<2x8x8xf32>
    %150 = vector.broadcast %61 : f32 to vector<2x8x8xf32>
    %151 = arith.addf %149, %150 : vector<2x8x8xf32>
    %cst_49 = arith.constant 0.000000e+00 : f32
    %152 = vector.broadcast %cst_49 : f32 to vector<2x8x8xf32>
    %153 = arith.cmpf oge, %151, %152 : vector<2x8x8xf32>
    %cst_50 = arith.constant 0.00999999977 : f32
    %154 = vector.broadcast %cst_50 : f32 to vector<2x8x8xf32>
    %155 = arith.mulf %154, %151 : vector<2x8x8xf32>
    %156 = arith.select %153, %151, %155 : vector<2x8x8xi1>, vector<2x8x8xf32>
    %157 = vector.broadcast %62 : f32 to vector<2x8x8xf32>
    %158 = arith.mulf %156, %157 : vector<2x8x8xf32>
    %159 = arith.addf %147, %158 : vector<2x8x8xf32>
    %160 = vector.broadcast %70 : f32 to vector<2x8x8xf32>
    %161 = arith.mulf %24, %160 : vector<2x8x8xf32>
    %162 = vector.broadcast %73 : f32 to vector<2x8x8xf32>
    %163 = arith.addf %161, %162 : vector<2x8x8xf32>
    %cst_51 = arith.constant 0.000000e+00 : f32
    %164 = vector.broadcast %cst_51 : f32 to vector<2x8x8xf32>
    %165 = arith.cmpf oge, %163, %164 : vector<2x8x8xf32>
    %cst_52 = arith.constant 0.00999999977 : f32
    %166 = vector.broadcast %cst_52 : f32 to vector<2x8x8xf32>
    %167 = arith.mulf %166, %163 : vector<2x8x8xf32>
    %168 = arith.select %165, %163, %167 : vector<2x8x8xi1>, vector<2x8x8xf32>
    %169 = vector.broadcast %74 : f32 to vector<2x8x8xf32>
    %170 = arith.mulf %168, %169 : vector<2x8x8xf32>
    %171 = arith.addf %159, %170 : vector<2x8x8xf32>
    %172 = vector.broadcast %82 : f32 to vector<2x8x8xf32>
    %173 = arith.mulf %24, %172 : vector<2x8x8xf32>
    %174 = vector.broadcast %85 : f32 to vector<2x8x8xf32>
    %175 = arith.addf %173, %174 : vector<2x8x8xf32>
    %cst_53 = arith.constant 0.000000e+00 : f32
    %176 = vector.broadcast %cst_53 : f32 to vector<2x8x8xf32>
    %177 = arith.cmpf oge, %175, %176 : vector<2x8x8xf32>
    %cst_54 = arith.constant 0.00999999977 : f32
    %178 = vector.broadcast %cst_54 : f32 to vector<2x8x8xf32>
    %179 = arith.mulf %178, %175 : vector<2x8x8xf32>
    %180 = arith.select %177, %175, %179 : vector<2x8x8xi1>, vector<2x8x8xf32>
    %181 = vector.broadcast %86 : f32 to vector<2x8x8xf32>
    %182 = arith.mulf %180, %181 : vector<2x8x8xf32>
    %183 = arith.addf %171, %182 : vector<2x8x8xf32>
    %184 = vector.broadcast %94 : f32 to vector<2x8x8xf32>
    %185 = arith.mulf %24, %184 : vector<2x8x8xf32>
    %186 = vector.broadcast %97 : f32 to vector<2x8x8xf32>
    %187 = arith.addf %185, %186 : vector<2x8x8xf32>
    %cst_55 = arith.constant 0.000000e+00 : f32
    %188 = vector.broadcast %cst_55 : f32 to vector<2x8x8xf32>
    %189 = arith.cmpf oge, %187, %188 : vector<2x8x8xf32>
    %cst_56 = arith.constant 0.00999999977 : f32
    %190 = vector.broadcast %cst_56 : f32 to vector<2x8x8xf32>
    %191 = arith.mulf %190, %187 : vector<2x8x8xf32>
    %192 = arith.select %189, %187, %191 : vector<2x8x8xi1>, vector<2x8x8xf32>
    %193 = vector.broadcast %98 : f32 to vector<2x8x8xf32>
    %194 = arith.mulf %192, %193 : vector<2x8x8xf32>
    %195 = arith.addf %183, %194 : vector<2x8x8xf32>
    %196 = vector.broadcast %106 : f32 to vector<2x8x8xf32>
    %197 = arith.mulf %24, %196 : vector<2x8x8xf32>
    %198 = vector.broadcast %109 : f32 to vector<2x8x8xf32>
    %199 = arith.addf %197, %198 : vector<2x8x8xf32>
    %cst_57 = arith.constant 0.000000e+00 : f32
    %200 = vector.broadcast %cst_57 : f32 to vector<2x8x8xf32>
    %201 = arith.cmpf oge, %199, %200 : vector<2x8x8xf32>
    %cst_58 = arith.constant 0.00999999977 : f32
    %202 = vector.broadcast %cst_58 : f32 to vector<2x8x8xf32>
    %203 = arith.mulf %202, %199 : vector<2x8x8xf32>
    %204 = arith.select %201, %199, %203 : vector<2x8x8xi1>, vector<2x8x8xf32>
    %205 = vector.broadcast %110 : f32 to vector<2x8x8xf32>
    %206 = arith.mulf %204, %205 : vector<2x8x8xf32>
    %207 = arith.addf %195, %206 : vector<2x8x8xf32>
    %208 = vector.broadcast %118 : f32 to vector<2x8x8xf32>
    %209 = arith.mulf %24, %208 : vector<2x8x8xf32>
    %210 = vector.broadcast %121 : f32 to vector<2x8x8xf32>
    %211 = arith.addf %209, %210 : vector<2x8x8xf32>
    %cst_59 = arith.constant 0.000000e+00 : f32
    %212 = vector.broadcast %cst_59 : f32 to vector<2x8x8xf32>
    %213 = arith.cmpf oge, %211, %212 : vector<2x8x8xf32>
    %cst_60 = arith.constant 0.00999999977 : f32
    %214 = vector.broadcast %cst_60 : f32 to vector<2x8x8xf32>
    %215 = arith.mulf %214, %211 : vector<2x8x8xf32>
    %216 = arith.select %213, %211, %215 : vector<2x8x8xi1>, vector<2x8x8xf32>
    %217 = vector.broadcast %122 : f32 to vector<2x8x8xf32>
    %218 = arith.mulf %216, %217 : vector<2x8x8xf32>
    %219 = arith.addf %207, %218 : vector<2x8x8xf32>
    %220 = vector.broadcast %130 : f32 to vector<2x8x8xf32>
    %221 = arith.mulf %24, %220 : vector<2x8x8xf32>
    %222 = vector.broadcast %133 : f32 to vector<2x8x8xf32>
    %223 = arith.addf %221, %222 : vector<2x8x8xf32>
    %cst_61 = arith.constant 0.000000e+00 : f32
    %224 = vector.broadcast %cst_61 : f32 to vector<2x8x8xf32>
    %225 = arith.cmpf oge, %223, %224 : vector<2x8x8xf32>
    %cst_62 = arith.constant 0.00999999977 : f32
    %226 = vector.broadcast %cst_62 : f32 to vector<2x8x8xf32>
    %227 = arith.mulf %226, %223 : vector<2x8x8xf32>
    %228 = arith.select %225, %223, %227 : vector<2x8x8xi1>, vector<2x8x8xf32>
    %229 = vector.broadcast %134 : f32 to vector<2x8x8xf32>
    %230 = arith.mulf %228, %229 : vector<2x8x8xf32>
    %231 = arith.addf %219, %230 : vector<2x8x8xf32>
    %cst_63 = arith.constant -9.000000e+08 : f32
    %232 = vector.shape_cast %4 : vector<2x1x8xi1> to vector<2x1x8xi1>
    %233 = vector.broadcast %232 : vector<2x1x8xi1> to vector<2x8x8xi1>
    %234 = vector.broadcast %cst_63 : f32 to vector<2x8x8xf32>
    %235 = arith.select %233, %231, %234 : vector<2x8x8xi1>, vector<2x8x8xf32>
    %cst_64 = arith.constant dense<0xFF800000> : vector<2x8xf32>
    %236 = vector.multi_reduction <maximumf>, %235, %cst_64 [2] : vector<2x8x8xf32> to vector<2x8xf32>
    %237 = vector.shape_cast %236 : vector<2x8xf32> to vector<2x8x1xf32>
    %238 = vector.broadcast %237 : vector<2x8x1xf32> to vector<2x8x8xf32>
    %239 = arith.subf %235, %238 : vector<2x8x8xf32>
    %240 = math.exp %239 : vector<2x8x8xf32>
    %cst_65 = arith.constant dense<0.000000e+00> : vector<2x8xf32>
    %241 = vector.multi_reduction <add>, %240, %cst_65 [2] : vector<2x8x8xf32> to vector<2x8xf32>
    %242 = vector.shape_cast %241 : vector<2x8xf32> to vector<2x8x1xf32>
    %243 = vector.broadcast %242 : vector<2x8x1xf32> to vector<2x8x8xf32>
    %244 = arith.divf %240, %243 : vector<2x8x8xf32>
    %cst_66 = arith.constant 0.000000e+00 : f32
    %245 = vector.shape_cast %4 : vector<2x1x8xi1> to vector<2x1x8xi1>
    %246 = vector.broadcast %245 : vector<2x1x8xi1> to vector<2x8x8xi1>
    %247 = vector.broadcast %cst_66 : f32 to vector<2x8x8xf32>
    %248 = arith.select %246, %244, %247 : vector<2x8x8xi1>, vector<2x8x8xf32>
    %c0_67 = arith.constant 0 : index
    %c0_68 = arith.constant 0 : index
    %c0_69 = arith.constant 0 : index
    %249 = vector.load %arg2[%c0_67, %c0_68, %c0_69] : memref<2x8x6xf32, #tpu.memory_space<vmem>>, vector<2x8x6xf32>
    %c0_70 = arith.constant 0 : index
    %c0_71 = arith.constant 0 : index
    %250 = vector.load %arg9[%c0_70, %c0_71] : memref<6x16xf32, #tpu.memory_space<vmem>>, vector<6x16xf32>
    %251 = vector.shape_cast %249 : vector<2x8x6xf32> to vector<16x6xf32>
    %cst_72 = arith.constant dense<0.000000e+00> : vector<16x16xf32>
    %252 = tpu.matmul %251, %250, %cst_72 {dimension_numbers = #tpu.dot_dimension_numbers<[1], [0], [0], [1], [0, 0, 1, 1], [], []>} : vector<16x6xf32>, vector<6x16xf32>, vector<16x16xf32> -> vector<16x16xf32>
    %253 = vector.shape_cast %252 : vector<16x16xf32> to vector<2x8x16xf32>
    %c0_73 = arith.constant 0 : index
    %c0_74 = arith.constant 0 : index
    %254 = vector.load %arg10[%c0_73, %c0_74] : memref<1x16xf32, #tpu.memory_space<vmem>>, vector<1x16xf32>
    %255 = vector.shape_cast %254 : vector<1x16xf32> to vector<1x1x16xf32>
    %256 = vector.broadcast %255 : vector<1x1x16xf32> to vector<2x8x16xf32>
    %257 = arith.addf %253, %256 : vector<2x8x16xf32>
    %c0_75 = arith.constant 0 : index
    %c0_76 = arith.constant 0 : index
    %258 = vector.load %arg11[%c0_75, %c0_76] : memref<1x16xf32, #tpu.memory_space<vmem>>, vector<1x16xf32>
    %c0_77 = arith.constant 0 : index
    %c0_78 = arith.constant 0 : index
    %259 = vector.load %arg12[%c0_77, %c0_78] : memref<1x16xf32, #tpu.memory_space<vmem>>, vector<1x16xf32>
    %260 = vector.broadcast %1 : vector<2x8x1xf32> to vector<2x8x16xf32>
    %261 = arith.mulf %257, %260 : vector<2x8x16xf32>
    %cst_79 = arith.constant dense<0.000000e+00> : vector<16xf32>
    %262 = vector.multi_reduction <add>, %261, %cst_79 [0, 1] : vector<2x8x16xf32> to vector<16xf32>
    %263 = vector.broadcast %10 : f32 to vector<16xf32>
    %264 = arith.mulf %262, %263 : vector<16xf32>
    %265 = vector.shape_cast %264 : vector<16xf32> to vector<1x1x16xf32>
    %266 = vector.broadcast %265 : vector<1x1x16xf32> to vector<2x8x16xf32>
    %267 = arith.subf %257, %266 : vector<2x8x16xf32>
    %268 = arith.mulf %267, %267 : vector<2x8x16xf32>
    %269 = vector.broadcast %1 : vector<2x8x1xf32> to vector<2x8x16xf32>
    %270 = arith.mulf %268, %269 : vector<2x8x16xf32>
    %cst_80 = arith.constant dense<0.000000e+00> : vector<16xf32>
    %271 = vector.multi_reduction <add>, %270, %cst_80 [0, 1] : vector<2x8x16xf32> to vector<16xf32>
    %272 = vector.broadcast %10 : f32 to vector<16xf32>
    %273 = arith.mulf %271, %272 : vector<16xf32>
    %cst_81 = arith.constant 9.99999974E-6 : f32
    %274 = vector.broadcast %cst_81 : f32 to vector<16xf32>
    %275 = arith.addf %273, %274 : vector<16xf32>
    %276 = math.rsqrt %275 : vector<16xf32>
    %277 = vector.shape_cast %276 : vector<16xf32> to vector<1x16xf32>
    %278 = arith.mulf %277, %258 : vector<1x16xf32>
    %279 = vector.shape_cast %278 : vector<1x16xf32> to vector<1x1x16xf32>
    %280 = vector.broadcast %279 : vector<1x1x16xf32> to vector<2x8x16xf32>
    %281 = arith.mulf %267, %280 : vector<2x8x16xf32>
    %282 = vector.shape_cast %259 : vector<1x16xf32> to vector<1x1x16xf32>
    %283 = vector.broadcast %282 : vector<1x1x16xf32> to vector<2x8x16xf32>
    %284 = arith.addf %281, %283 : vector<2x8x16xf32>
    %cst_82 = arith.constant 0.000000e+00 : f32
    %285 = vector.broadcast %cst_82 : f32 to vector<2x8x16xf32>
    %286 = arith.cmpf oge, %284, %285 : vector<2x8x16xf32>
    %cst_83 = arith.constant 0.00999999977 : f32
    %287 = vector.broadcast %cst_83 : f32 to vector<2x8x16xf32>
    %288 = arith.mulf %287, %284 : vector<2x8x16xf32>
    %289 = arith.select %286, %284, %288 : vector<2x8x16xi1>, vector<2x8x16xf32>
    %c0_84 = arith.constant 0 : index
    %c0_85 = arith.constant 0 : index
    %290 = vector.load %arg3[%c0_84, %c0_85] : memref<2x5xf32, #tpu.memory_space<vmem>>, vector<2x5xf32>
    %c0_86 = arith.constant 0 : index
    %c0_87 = arith.constant 0 : index
    %291 = vector.load %arg13[%c0_86, %c0_87] : memref<5x8xf32, #tpu.memory_space<vmem>>, vector<5x8xf32>
    %cst_88 = arith.constant dense<0.000000e+00> : vector<2x8xf32>
    %292 = tpu.matmul %290, %291, %cst_88 {dimension_numbers = #tpu.dot_dimension_numbers<[1], [0], [0], [1], [0, 0, 1, 1], [], []>} : vector<2x5xf32>, vector<5x8xf32>, vector<2x8xf32> -> vector<2x8xf32>
    %c0_89 = arith.constant 0 : index
    %c0_90 = arith.constant 0 : index
    %293 = vector.load %arg14[%c0_89, %c0_90] : memref<1x8xf32, #tpu.memory_space<vmem>>, vector<1x8xf32>
    %294 = vector.broadcast %293 : vector<1x8xf32> to vector<2x8xf32>
    %295 = arith.addf %292, %294 : vector<2x8xf32>
    %c0_91 = arith.constant 0 : index
    %c0_92 = arith.constant 0 : index
    %296 = vector.load %arg15[%c0_91, %c0_92] : memref<1x8xf32, #tpu.memory_space<vmem>>, vector<1x8xf32>
    %c0_93 = arith.constant 0 : index
    %c0_94 = arith.constant 0 : index
    %297 = vector.load %arg16[%c0_93, %c0_94] : memref<1x8xf32, #tpu.memory_space<vmem>>, vector<1x8xf32>
    %cst_95 = arith.constant dense<0.000000e+00> : vector<8xf32>
    %298 = vector.multi_reduction <add>, %295, %cst_95 [0] : vector<2x8xf32> to vector<8xf32>
    %299 = vector.shape_cast %298 : vector<8xf32> to vector<1x8xf32>
    %cst_96 = arith.constant 2.000000e+00 : f32
    %300 = vector.broadcast %cst_96 : f32 to vector<1x8xf32>
    %301 = arith.divf %299, %300 : vector<1x8xf32>
    %302 = vector.broadcast %301 : vector<1x8xf32> to vector<2x8xf32>
    %303 = arith.subf %295, %302 : vector<2x8xf32>
    %304 = arith.mulf %303, %303 : vector<2x8xf32>
    %cst_97 = arith.constant dense<0.000000e+00> : vector<8xf32>
    %305 = vector.multi_reduction <add>, %304, %cst_97 [0] : vector<2x8xf32> to vector<8xf32>
    %306 = vector.shape_cast %305 : vector<8xf32> to vector<1x8xf32>
    %cst_98 = arith.constant 2.000000e+00 : f32
    %307 = vector.broadcast %cst_98 : f32 to vector<1x8xf32>
    %308 = arith.divf %306, %307 : vector<1x8xf32>
    %cst_99 = arith.constant 9.99999974E-6 : f32
    %309 = vector.broadcast %cst_99 : f32 to vector<1x8xf32>
    %310 = arith.addf %308, %309 : vector<1x8xf32>
    %311 = math.rsqrt %310 : vector<1x8xf32>
    %312 = arith.mulf %311, %296 : vector<1x8xf32>
    %313 = vector.broadcast %312 : vector<1x8xf32> to vector<2x8xf32>
    %314 = arith.mulf %303, %313 : vector<2x8xf32>
    %315 = vector.broadcast %297 : vector<1x8xf32> to vector<2x8xf32>
    %316 = arith.addf %314, %315 : vector<2x8xf32>
    %cst_100 = arith.constant 0.000000e+00 : f32
    %317 = vector.broadcast %cst_100 : f32 to vector<2x8xf32>
    %318 = arith.cmpf oge, %316, %317 : vector<2x8xf32>
    %cst_101 = arith.constant 0.00999999977 : f32
    %319 = vector.broadcast %cst_101 : f32 to vector<2x8xf32>
    %320 = arith.mulf %319, %316 : vector<2x8xf32>
    %321 = arith.select %318, %316, %320 : vector<2x8xi1>, vector<2x8xf32>
    %c0_102 = arith.constant 0 : index
    %c0_103 = arith.constant 0 : index
    %c0_104 = arith.constant 0 : index
    %322 = vector.load %arg17[%c0_102, %c0_103, %c0_104] : memref<2x16x16xf32, #tpu.memory_space<vmem>>, vector<1x16x16xf32>
    %323 = vector.shape_cast %322 : vector<1x16x16xf32> to vector<16x16xf32>
    %c0_105 = arith.constant 0 : index
    %c0_106 = arith.constant 0 : index
    %c0_107 = arith.constant 0 : index
    %324 = vector.load %arg18[%c0_105, %c0_106, %c0_107] : memref<2x8x16xf32, #tpu.memory_space<vmem>>, vector<1x8x16xf32>
    %325 = vector.shape_cast %324 : vector<1x8x16xf32> to vector<8x16xf32>
    %c0_108 = arith.constant 0 : index
    %c0_109 = arith.constant 0 : index
    %c0_110 = arith.constant 0 : index
    %326 = vector.load %arg19[%c0_108, %c0_109, %c0_110] : memref<2x1x16xf32, #tpu.memory_space<vmem>>, vector<1x1x16xf32>
    %327 = vector.shape_cast %326 : vector<1x1x16xf32> to vector<1x16xf32>
    %c0_111 = arith.constant 0 : index
    %c0_112 = arith.constant 0 : index
    %c0_113 = arith.constant 0 : index
    %328 = vector.load %arg20[%c0_111, %c0_112, %c0_113] : memref<2x1x16xf32, #tpu.memory_space<vmem>>, vector<1x1x16xf32>
    %329 = vector.shape_cast %328 : vector<1x1x16xf32> to vector<1x16xf32>
    %c0_114 = arith.constant 0 : index
    %c0_115 = arith.constant 0 : index
    %c0_116 = arith.constant 0 : index
    %330 = vector.load %arg21[%c0_114, %c0_115, %c0_116] : memref<2x1x16xf32, #tpu.memory_space<vmem>>, vector<1x1x16xf32>
    %331 = vector.shape_cast %330 : vector<1x1x16xf32> to vector<1x16xf32>
    %c0_117 = arith.constant 0 : index
    %c0_118 = arith.constant 0 : index
    %c0_119 = arith.constant 0 : index
    %332 = vector.load %arg22[%c0_117, %c0_118, %c0_119] : memref<2x8x8xf32, #tpu.memory_space<vmem>>, vector<1x8x8xf32>
    %333 = vector.shape_cast %332 : vector<1x8x8xf32> to vector<8x8xf32>
    %c0_120 = arith.constant 0 : index
    %c0_121 = arith.constant 0 : index
    %c0_122 = arith.constant 0 : index
    %334 = vector.load %arg23[%c0_120, %c0_121, %c0_122] : memref<2x1x8xf32, #tpu.memory_space<vmem>>, vector<1x1x8xf32>
    %335 = vector.shape_cast %334 : vector<1x1x8xf32> to vector<1x8xf32>
    %c0_123 = arith.constant 0 : index
    %c0_124 = arith.constant 0 : index
    %c0_125 = arith.constant 0 : index
    %336 = vector.load %arg24[%c0_123, %c0_124, %c0_125] : memref<2x1x8xf32, #tpu.memory_space<vmem>>, vector<1x1x8xf32>
    %337 = vector.shape_cast %336 : vector<1x1x8xf32> to vector<1x8xf32>
    %c0_126 = arith.constant 0 : index
    %c0_127 = arith.constant 0 : index
    %c0_128 = arith.constant 0 : index
    %338 = vector.load %arg25[%c0_126, %c0_127, %c0_128] : memref<2x1x8xf32, #tpu.memory_space<vmem>>, vector<1x1x8xf32>
    %339 = vector.shape_cast %338 : vector<1x1x8xf32> to vector<1x8xf32>
    %340 = vector.shape_cast %289 : vector<2x8x16xf32> to vector<16x16xf32>
    %cst_129 = arith.constant dense<0.000000e+00> : vector<16x16xf32>
    %341 = tpu.matmul %340, %323, %cst_129 {dimension_numbers = #tpu.dot_dimension_numbers<[1], [0], [0], [1], [0, 0, 1, 1], [], []>} : vector<16x16xf32>, vector<16x16xf32>, vector<16x16xf32> -> vector<16x16xf32>
    %342 = vector.shape_cast %341 : vector<16x16xf32> to vector<2x8x16xf32>
    %cst_130 = arith.constant dense<0.000000e+00> : vector<2x16xf32>
    %343 = tpu.matmul %321, %325, %cst_130 {dimension_numbers = #tpu.dot_dimension_numbers<[1], [0], [0], [1], [0, 0, 1, 1], [], []>} : vector<2x8xf32>, vector<8x16xf32>, vector<2x16xf32> -> vector<2x16xf32>
    %344 = vector.shape_cast %343 : vector<2x16xf32> to vector<2x1x16xf32>
    %345 = vector.broadcast %344 : vector<2x1x16xf32> to vector<2x8x16xf32>
    %346 = arith.addf %342, %345 : vector<2x8x16xf32>
    %347 = vector.shape_cast %327 : vector<1x16xf32> to vector<1x1x16xf32>
    %348 = vector.broadcast %347 : vector<1x1x16xf32> to vector<2x8x16xf32>
    %349 = arith.addf %346, %348 : vector<2x8x16xf32>
    %350 = vector.broadcast %1 : vector<2x8x1xf32> to vector<2x8x16xf32>
    %351 = arith.mulf %349, %350 : vector<2x8x16xf32>
    %cst_131 = arith.constant dense<0.000000e+00> : vector<16xf32>
    %352 = vector.multi_reduction <add>, %351, %cst_131 [0, 1] : vector<2x8x16xf32> to vector<16xf32>
    %353 = vector.broadcast %10 : f32 to vector<16xf32>
    %354 = arith.mulf %352, %353 : vector<16xf32>
    %355 = vector.shape_cast %354 : vector<16xf32> to vector<1x1x16xf32>
    %356 = vector.broadcast %355 : vector<1x1x16xf32> to vector<2x8x16xf32>
    %357 = arith.subf %349, %356 : vector<2x8x16xf32>
    %358 = arith.mulf %357, %357 : vector<2x8x16xf32>
    %359 = vector.broadcast %1 : vector<2x8x1xf32> to vector<2x8x16xf32>
    %360 = arith.mulf %358, %359 : vector<2x8x16xf32>
    %cst_132 = arith.constant dense<0.000000e+00> : vector<16xf32>
    %361 = vector.multi_reduction <add>, %360, %cst_132 [0, 1] : vector<2x8x16xf32> to vector<16xf32>
    %362 = vector.broadcast %10 : f32 to vector<16xf32>
    %363 = arith.mulf %361, %362 : vector<16xf32>
    %cst_133 = arith.constant 9.99999974E-6 : f32
    %364 = vector.broadcast %cst_133 : f32 to vector<16xf32>
    %365 = arith.addf %363, %364 : vector<16xf32>
    %366 = math.rsqrt %365 : vector<16xf32>
    %367 = vector.shape_cast %366 : vector<16xf32> to vector<1x16xf32>
    %368 = arith.mulf %367, %329 : vector<1x16xf32>
    %369 = vector.shape_cast %368 : vector<1x16xf32> to vector<1x1x16xf32>
    %370 = vector.broadcast %369 : vector<1x1x16xf32> to vector<2x8x16xf32>
    %371 = arith.mulf %357, %370 : vector<2x8x16xf32>
    %372 = vector.shape_cast %331 : vector<1x16xf32> to vector<1x1x16xf32>
    %373 = vector.broadcast %372 : vector<1x1x16xf32> to vector<2x8x16xf32>
    %374 = arith.addf %371, %373 : vector<2x8x16xf32>
    %cst_134 = arith.constant 0.000000e+00 : f32
    %375 = vector.broadcast %cst_134 : f32 to vector<2x8x16xf32>
    %376 = arith.cmpf oge, %374, %375 : vector<2x8x16xf32>
    %cst_135 = arith.constant 0.00999999977 : f32
    %377 = vector.broadcast %cst_135 : f32 to vector<2x8x16xf32>
    %378 = arith.mulf %377, %374 : vector<2x8x16xf32>
    %379 = arith.select %376, %374, %378 : vector<2x8x16xi1>, vector<2x8x16xf32>
    %380 = vector.broadcast %1 : vector<2x8x1xf32> to vector<2x8x16xf32>
    %381 = arith.mulf %379, %380 : vector<2x8x16xf32>
    "tpu.trace_start"() <{level = 10 : i32, message = "bic,bjc->bij"}> : () -> ()
    %cst_136 = arith.constant dense<0.000000e+00> : vector<2x8x8xf32>
    %382 = tpu.matmul %381, %381, %cst_136 {dimension_numbers = #tpu.dot_dimension_numbers<[2], [2], [1], [1], [0, 0, 0, 1, 1, 1], [0], [0]>} : vector<2x8x16xf32>, vector<2x8x16xf32>, vector<2x8x8xf32> -> vector<2x8x8xf32>
    "tpu.trace_stop"() : () -> ()
    %cst_137 = arith.constant 2.500000e-01 : f32
    %383 = vector.broadcast %cst_137 : f32 to vector<2x8x8xf32>
    %384 = arith.mulf %382, %383 : vector<2x8x8xf32>
    %cst_138 = arith.constant dense<0xFF800000> : vector<2x8xf32>
    %385 = vector.multi_reduction <maximumf>, %384, %cst_138 [2] : vector<2x8x8xf32> to vector<2x8xf32>
    %386 = vector.shape_cast %385 : vector<2x8xf32> to vector<2x8x1xf32>
    %387 = vector.broadcast %386 : vector<2x8x1xf32> to vector<2x8x8xf32>
    %388 = arith.subf %384, %387 : vector<2x8x8xf32>
    %389 = math.exp %388 : vector<2x8x8xf32>
    %cst_139 = arith.constant dense<0.000000e+00> : vector<2x8xf32>
    %390 = vector.multi_reduction <add>, %389, %cst_139 [2] : vector<2x8x8xf32> to vector<2x8xf32>
    %391 = vector.shape_cast %390 : vector<2x8xf32> to vector<2x8x1xf32>
    %392 = vector.broadcast %391 : vector<2x8x1xf32> to vector<2x8x8xf32>
    %393 = arith.divf %389, %392 : vector<2x8x8xf32>
    %cst_140 = arith.constant 0.000000e+00 : f32
    %394 = vector.shape_cast %4 : vector<2x1x8xi1> to vector<2x1x8xi1>
    %395 = vector.broadcast %394 : vector<2x1x8xi1> to vector<2x8x8xi1>
    %396 = vector.broadcast %cst_140 : f32 to vector<2x8x8xf32>
    %397 = arith.select %395, %393, %396 : vector<2x8x8xi1>, vector<2x8x8xf32>
    %398 = arith.addf %397, %248 : vector<2x8x8xf32>
    "tpu.trace_start"() <{level = 10 : i32, message = "bij,bjc->bic"}> : () -> ()
    %cst_141 = arith.constant dense<0.000000e+00> : vector<2x8x16xf32>
    %399 = tpu.matmul %398, %381, %cst_141 {dimension_numbers = #tpu.dot_dimension_numbers<[2], [1], [1], [2], [0, 0, 0, 1, 1, 2], [0], [0]>} : vector<2x8x8xf32>, vector<2x8x16xf32>, vector<2x8x16xf32> -> vector<2x8x16xf32>
    "tpu.trace_stop"() : () -> ()
    %cst_142 = arith.constant dense<0.000000e+00> : vector<2x8xf32>
    %400 = tpu.matmul %321, %333, %cst_142 {dimension_numbers = #tpu.dot_dimension_numbers<[1], [0], [0], [1], [0, 0, 1, 1], [], []>} : vector<2x8xf32>, vector<8x8xf32>, vector<2x8xf32> -> vector<2x8xf32>
    %401 = vector.broadcast %335 : vector<1x8xf32> to vector<2x8xf32>
    %402 = arith.addf %400, %401 : vector<2x8xf32>
    %cst_143 = arith.constant dense<0.000000e+00> : vector<8xf32>
    %403 = vector.multi_reduction <add>, %402, %cst_143 [0] : vector<2x8xf32> to vector<8xf32>
    %404 = vector.shape_cast %403 : vector<8xf32> to vector<1x8xf32>
    %cst_144 = arith.constant 2.000000e+00 : f32
    %405 = vector.broadcast %cst_144 : f32 to vector<1x8xf32>
    %406 = arith.divf %404, %405 : vector<1x8xf32>
    %407 = vector.broadcast %406 : vector<1x8xf32> to vector<2x8xf32>
    %408 = arith.subf %402, %407 : vector<2x8xf32>
    %409 = arith.mulf %408, %408 : vector<2x8xf32>
    %cst_145 = arith.constant dense<0.000000e+00> : vector<8xf32>
    %410 = vector.multi_reduction <add>, %409, %cst_145 [0] : vector<2x8xf32> to vector<8xf32>
    %411 = vector.shape_cast %410 : vector<8xf32> to vector<1x8xf32>
    %cst_146 = arith.constant 2.000000e+00 : f32
    %412 = vector.broadcast %cst_146 : f32 to vector<1x8xf32>
    %413 = arith.divf %411, %412 : vector<1x8xf32>
    %cst_147 = arith.constant 9.99999974E-6 : f32
    %414 = vector.broadcast %cst_147 : f32 to vector<1x8xf32>
    %415 = arith.addf %413, %414 : vector<1x8xf32>
    %416 = math.rsqrt %415 : vector<1x8xf32>
    %417 = arith.mulf %416, %337 : vector<1x8xf32>
    %418 = vector.broadcast %417 : vector<1x8xf32> to vector<2x8xf32>
    %419 = arith.mulf %408, %418 : vector<2x8xf32>
    %420 = vector.broadcast %339 : vector<1x8xf32> to vector<2x8xf32>
    %421 = arith.addf %419, %420 : vector<2x8xf32>
    %cst_148 = arith.constant 0.000000e+00 : f32
    %422 = vector.broadcast %cst_148 : f32 to vector<2x8xf32>
    %423 = arith.cmpf oge, %421, %422 : vector<2x8xf32>
    %cst_149 = arith.constant 0.00999999977 : f32
    %424 = vector.broadcast %cst_149 : f32 to vector<2x8xf32>
    %425 = arith.mulf %424, %421 : vector<2x8xf32>
    %426 = arith.select %423, %421, %425 : vector<2x8xi1>, vector<2x8xf32>
    %c1_150 = arith.constant 1 : index
    %c0_151 = arith.constant 0 : index
    %c0_152 = arith.constant 0 : index
    %427 = vector.load %arg17[%c1_150, %c0_151, %c0_152] : memref<2x16x16xf32, #tpu.memory_space<vmem>>, vector<1x16x16xf32>
    %428 = vector.shape_cast %427 : vector<1x16x16xf32> to vector<16x16xf32>
    %c1_153 = arith.constant 1 : index
    %c0_154 = arith.constant 0 : index
    %c0_155 = arith.constant 0 : index
    %429 = vector.load %arg18[%c1_153, %c0_154, %c0_155] : memref<2x8x16xf32, #tpu.memory_space<vmem>>, vector<1x8x16xf32>
    %430 = vector.shape_cast %429 : vector<1x8x16xf32> to vector<8x16xf32>
    %c1_156 = arith.constant 1 : index
    %c0_157 = arith.constant 0 : index
    %c0_158 = arith.constant 0 : index
    %431 = vector.load %arg19[%c1_156, %c0_157, %c0_158] : memref<2x1x16xf32, #tpu.memory_space<vmem>>, vector<1x1x16xf32>
    %432 = vector.shape_cast %431 : vector<1x1x16xf32> to vector<1x16xf32>
    %c1_159 = arith.constant 1 : index
    %c0_160 = arith.constant 0 : index
    %c0_161 = arith.constant 0 : index
    %433 = vector.load %arg20[%c1_159, %c0_160, %c0_161] : memref<2x1x16xf32, #tpu.memory_space<vmem>>, vector<1x1x16xf32>
    %434 = vector.shape_cast %433 : vector<1x1x16xf32> to vector<1x16xf32>
    %c1_162 = arith.constant 1 : index
    %c0_163 = arith.constant 0 : index
    %c0_164 = arith.constant 0 : index
    %435 = vector.load %arg21[%c1_162, %c0_163, %c0_164] : memref<2x1x16xf32, #tpu.memory_space<vmem>>, vector<1x1x16xf32>
    %436 = vector.shape_cast %435 : vector<1x1x16xf32> to vector<1x16xf32>
    %c1_165 = arith.constant 1 : index
    %c0_166 = arith.constant 0 : index
    %c0_167 = arith.constant 0 : index
    %437 = vector.load %arg22[%c1_165, %c0_166, %c0_167] : memref<2x8x8xf32, #tpu.memory_space<vmem>>, vector<1x8x8xf32>
    %438 = vector.shape_cast %437 : vector<1x8x8xf32> to vector<8x8xf32>
    %c1_168 = arith.constant 1 : index
    %c0_169 = arith.constant 0 : index
    %c0_170 = arith.constant 0 : index
    %439 = vector.load %arg23[%c1_168, %c0_169, %c0_170] : memref<2x1x8xf32, #tpu.memory_space<vmem>>, vector<1x1x8xf32>
    %440 = vector.shape_cast %439 : vector<1x1x8xf32> to vector<1x8xf32>
    %c1_171 = arith.constant 1 : index
    %c0_172 = arith.constant 0 : index
    %c0_173 = arith.constant 0 : index
    %441 = vector.load %arg24[%c1_171, %c0_172, %c0_173] : memref<2x1x8xf32, #tpu.memory_space<vmem>>, vector<1x1x8xf32>
    %442 = vector.shape_cast %441 : vector<1x1x8xf32> to vector<1x8xf32>
    %c1_174 = arith.constant 1 : index
    %c0_175 = arith.constant 0 : index
    %c0_176 = arith.constant 0 : index
    %443 = vector.load %arg25[%c1_174, %c0_175, %c0_176] : memref<2x1x8xf32, #tpu.memory_space<vmem>>, vector<1x1x8xf32>
    %444 = vector.shape_cast %443 : vector<1x1x8xf32> to vector<1x8xf32>
    %445 = vector.shape_cast %399 : vector<2x8x16xf32> to vector<16x16xf32>
    %cst_177 = arith.constant dense<0.000000e+00> : vector<16x16xf32>
    %446 = tpu.matmul %445, %428, %cst_177 {dimension_numbers = #tpu.dot_dimension_numbers<[1], [0], [0], [1], [0, 0, 1, 1], [], []>} : vector<16x16xf32>, vector<16x16xf32>, vector<16x16xf32> -> vector<16x16xf32>
    %447 = vector.shape_cast %446 : vector<16x16xf32> to vector<2x8x16xf32>
    %cst_178 = arith.constant dense<0.000000e+00> : vector<2x16xf32>
    %448 = tpu.matmul %426, %430, %cst_178 {dimension_numbers = #tpu.dot_dimension_numbers<[1], [0], [0], [1], [0, 0, 1, 1], [], []>} : vector<2x8xf32>, vector<8x16xf32>, vector<2x16xf32> -> vector<2x16xf32>
    %449 = vector.shape_cast %448 : vector<2x16xf32> to vector<2x1x16xf32>
    %450 = vector.broadcast %449 : vector<2x1x16xf32> to vector<2x8x16xf32>
    %451 = arith.addf %447, %450 : vector<2x8x16xf32>
    %452 = vector.shape_cast %432 : vector<1x16xf32> to vector<1x1x16xf32>
    %453 = vector.broadcast %452 : vector<1x1x16xf32> to vector<2x8x16xf32>
    %454 = arith.addf %451, %453 : vector<2x8x16xf32>
    %455 = vector.broadcast %1 : vector<2x8x1xf32> to vector<2x8x16xf32>
    %456 = arith.mulf %454, %455 : vector<2x8x16xf32>
    %cst_179 = arith.constant dense<0.000000e+00> : vector<16xf32>
    %457 = vector.multi_reduction <add>, %456, %cst_179 [0, 1] : vector<2x8x16xf32> to vector<16xf32>
    %458 = vector.broadcast %10 : f32 to vector<16xf32>
    %459 = arith.mulf %457, %458 : vector<16xf32>
    %460 = vector.shape_cast %459 : vector<16xf32> to vector<1x1x16xf32>
    %461 = vector.broadcast %460 : vector<1x1x16xf32> to vector<2x8x16xf32>
    %462 = arith.subf %454, %461 : vector<2x8x16xf32>
    %463 = arith.mulf %462, %462 : vector<2x8x16xf32>
    %464 = vector.broadcast %1 : vector<2x8x1xf32> to vector<2x8x16xf32>
    %465 = arith.mulf %463, %464 : vector<2x8x16xf32>
    %cst_180 = arith.constant dense<0.000000e+00> : vector<16xf32>
    %466 = vector.multi_reduction <add>, %465, %cst_180 [0, 1] : vector<2x8x16xf32> to vector<16xf32>
    %467 = vector.broadcast %10 : f32 to vector<16xf32>
    %468 = arith.mulf %466, %467 : vector<16xf32>
    %cst_181 = arith.constant 9.99999974E-6 : f32
    %469 = vector.broadcast %cst_181 : f32 to vector<16xf32>
    %470 = arith.addf %468, %469 : vector<16xf32>
    %471 = math.rsqrt %470 : vector<16xf32>
    %472 = vector.shape_cast %471 : vector<16xf32> to vector<1x16xf32>
    %473 = arith.mulf %472, %434 : vector<1x16xf32>
    %474 = vector.shape_cast %473 : vector<1x16xf32> to vector<1x1x16xf32>
    %475 = vector.broadcast %474 : vector<1x1x16xf32> to vector<2x8x16xf32>
    %476 = arith.mulf %462, %475 : vector<2x8x16xf32>
    %477 = vector.shape_cast %436 : vector<1x16xf32> to vector<1x1x16xf32>
    %478 = vector.broadcast %477 : vector<1x1x16xf32> to vector<2x8x16xf32>
    %479 = arith.addf %476, %478 : vector<2x8x16xf32>
    %cst_182 = arith.constant 0.000000e+00 : f32
    %480 = vector.broadcast %cst_182 : f32 to vector<2x8x16xf32>
    %481 = arith.cmpf oge, %479, %480 : vector<2x8x16xf32>
    %cst_183 = arith.constant 0.00999999977 : f32
    %482 = vector.broadcast %cst_183 : f32 to vector<2x8x16xf32>
    %483 = arith.mulf %482, %479 : vector<2x8x16xf32>
    %484 = arith.select %481, %479, %483 : vector<2x8x16xi1>, vector<2x8x16xf32>
    %485 = vector.broadcast %1 : vector<2x8x1xf32> to vector<2x8x16xf32>
    %486 = arith.mulf %484, %485 : vector<2x8x16xf32>
    "tpu.trace_start"() <{level = 10 : i32, message = "bic,bjc->bij"}> : () -> ()
    %cst_184 = arith.constant dense<0.000000e+00> : vector<2x8x8xf32>
    %487 = tpu.matmul %486, %486, %cst_184 {dimension_numbers = #tpu.dot_dimension_numbers<[2], [2], [1], [1], [0, 0, 0, 1, 1, 1], [0], [0]>} : vector<2x8x16xf32>, vector<2x8x16xf32>, vector<2x8x8xf32> -> vector<2x8x8xf32>
    "tpu.trace_stop"() : () -> ()
    %cst_185 = arith.constant 2.500000e-01 : f32
    %488 = vector.broadcast %cst_185 : f32 to vector<2x8x8xf32>
    %489 = arith.mulf %487, %488 : vector<2x8x8xf32>
    %cst_186 = arith.constant dense<0xFF800000> : vector<2x8xf32>
    %490 = vector.multi_reduction <maximumf>, %489, %cst_186 [2] : vector<2x8x8xf32> to vector<2x8xf32>
    %491 = vector.shape_cast %490 : vector<2x8xf32> to vector<2x8x1xf32>
    %492 = vector.broadcast %491 : vector<2x8x1xf32> to vector<2x8x8xf32>
    %493 = arith.subf %489, %492 : vector<2x8x8xf32>
    %494 = math.exp %493 : vector<2x8x8xf32>
    %cst_187 = arith.constant dense<0.000000e+00> : vector<2x8xf32>
    %495 = vector.multi_reduction <add>, %494, %cst_187 [2] : vector<2x8x8xf32> to vector<2x8xf32>
    %496 = vector.shape_cast %495 : vector<2x8xf32> to vector<2x8x1xf32>
    %497 = vector.broadcast %496 : vector<2x8x1xf32> to vector<2x8x8xf32>
    %498 = arith.divf %494, %497 : vector<2x8x8xf32>
    %cst_188 = arith.constant 0.000000e+00 : f32
    %499 = vector.shape_cast %4 : vector<2x1x8xi1> to vector<2x1x8xi1>
    %500 = vector.broadcast %499 : vector<2x1x8xi1> to vector<2x8x8xi1>
    %501 = vector.broadcast %cst_188 : f32 to vector<2x8x8xf32>
    %502 = arith.select %500, %498, %501 : vector<2x8x8xi1>, vector<2x8x8xf32>
    %503 = arith.addf %502, %248 : vector<2x8x8xf32>
    "tpu.trace_start"() <{level = 10 : i32, message = "bij,bjc->bic"}> : () -> ()
    %cst_189 = arith.constant dense<0.000000e+00> : vector<2x8x16xf32>
    %504 = tpu.matmul %503, %486, %cst_189 {dimension_numbers = #tpu.dot_dimension_numbers<[2], [1], [1], [2], [0, 0, 0, 1, 1, 2], [0], [0]>} : vector<2x8x8xf32>, vector<2x8x16xf32>, vector<2x8x16xf32> -> vector<2x8x16xf32>
    "tpu.trace_stop"() : () -> ()
    %cst_190 = arith.constant dense<0.000000e+00> : vector<2x8xf32>
    %505 = tpu.matmul %426, %438, %cst_190 {dimension_numbers = #tpu.dot_dimension_numbers<[1], [0], [0], [1], [0, 0, 1, 1], [], []>} : vector<2x8xf32>, vector<8x8xf32>, vector<2x8xf32> -> vector<2x8xf32>
    %506 = vector.broadcast %440 : vector<1x8xf32> to vector<2x8xf32>
    %507 = arith.addf %505, %506 : vector<2x8xf32>
    %cst_191 = arith.constant dense<0.000000e+00> : vector<8xf32>
    %508 = vector.multi_reduction <add>, %507, %cst_191 [0] : vector<2x8xf32> to vector<8xf32>
    %509 = vector.shape_cast %508 : vector<8xf32> to vector<1x8xf32>
    %cst_192 = arith.constant 2.000000e+00 : f32
    %510 = vector.broadcast %cst_192 : f32 to vector<1x8xf32>
    %511 = arith.divf %509, %510 : vector<1x8xf32>
    %512 = vector.broadcast %511 : vector<1x8xf32> to vector<2x8xf32>
    %513 = arith.subf %507, %512 : vector<2x8xf32>
    %514 = arith.mulf %513, %513 : vector<2x8xf32>
    %cst_193 = arith.constant dense<0.000000e+00> : vector<8xf32>
    %515 = vector.multi_reduction <add>, %514, %cst_193 [0] : vector<2x8xf32> to vector<8xf32>
    %516 = vector.shape_cast %515 : vector<8xf32> to vector<1x8xf32>
    %cst_194 = arith.constant 2.000000e+00 : f32
    %517 = vector.broadcast %cst_194 : f32 to vector<1x8xf32>
    %518 = arith.divf %516, %517 : vector<1x8xf32>
    %cst_195 = arith.constant 9.99999974E-6 : f32
    %519 = vector.broadcast %cst_195 : f32 to vector<1x8xf32>
    %520 = arith.addf %518, %519 : vector<1x8xf32>
    %521 = math.rsqrt %520 : vector<1x8xf32>
    %522 = arith.mulf %521, %442 : vector<1x8xf32>
    %523 = vector.broadcast %522 : vector<1x8xf32> to vector<2x8xf32>
    %524 = arith.mulf %513, %523 : vector<2x8xf32>
    %525 = vector.broadcast %444 : vector<1x8xf32> to vector<2x8xf32>
    %526 = arith.addf %524, %525 : vector<2x8xf32>
    %cst_196 = arith.constant 0.000000e+00 : f32
    %527 = vector.broadcast %cst_196 : f32 to vector<2x8xf32>
    %528 = arith.cmpf oge, %526, %527 : vector<2x8xf32>
    %cst_197 = arith.constant 0.00999999977 : f32
    %529 = vector.broadcast %cst_197 : f32 to vector<2x8xf32>
    %530 = arith.mulf %529, %526 : vector<2x8xf32>
    %531 = arith.select %528, %526, %530 : vector<2x8xi1>, vector<2x8xf32>
    %c0_198 = arith.constant 0 : index
    %c0_199 = arith.constant 0 : index
    %532 = vector.load %arg26[%c0_198, %c0_199] : memref<16x128xf32, #tpu.memory_space<vmem>>, vector<16x128xf32>
    %533 = vector.shape_cast %504 : vector<2x8x16xf32> to vector<16x16xf32>
    %cst_200 = arith.constant dense<0.000000e+00> : vector<16x128xf32>
    %534 = tpu.matmul %533, %532, %cst_200 {dimension_numbers = #tpu.dot_dimension_numbers<[1], [0], [0], [1], [0, 0, 1, 1], [], []>} : vector<16x16xf32>, vector<16x128xf32>, vector<16x128xf32> -> vector<16x128xf32>
    %535 = vector.shape_cast %534 : vector<16x128xf32> to vector<2x8x128xf32>
    %c0_201 = arith.constant 0 : index
    %c0_202 = arith.constant 0 : index
    %536 = vector.load %arg27[%c0_201, %c0_202] : memref<8x128xf32, #tpu.memory_space<vmem>>, vector<8x128xf32>
    %cst_203 = arith.constant dense<0.000000e+00> : vector<2x128xf32>
    %537 = tpu.matmul %531, %536, %cst_203 {dimension_numbers = #tpu.dot_dimension_numbers<[1], [0], [0], [1], [0, 0, 1, 1], [], []>} : vector<2x8xf32>, vector<8x128xf32>, vector<2x128xf32> -> vector<2x128xf32>
    %538 = vector.shape_cast %537 : vector<2x128xf32> to vector<2x1x128xf32>
    %539 = vector.broadcast %538 : vector<2x1x128xf32> to vector<2x8x128xf32>
    %540 = arith.addf %535, %539 : vector<2x8x128xf32>
    %c0_204 = arith.constant 0 : index
    %c0_205 = arith.constant 0 : index
    %541 = vector.load %arg28[%c0_204, %c0_205] : memref<1x128xf32, #tpu.memory_space<vmem>>, vector<1x128xf32>
    %542 = vector.shape_cast %541 : vector<1x128xf32> to vector<1x1x128xf32>
    %543 = vector.broadcast %542 : vector<1x1x128xf32> to vector<2x8x128xf32>
    %544 = arith.addf %540, %543 : vector<2x8x128xf32>
    %c0_206 = arith.constant 0 : index
    %c0_207 = arith.constant 0 : index
    %c0_208 = arith.constant 0 : index
    %545 = vector.load %arg29[%c0_206, %c0_207, %c0_208] : memref<2x8x128xf32, #tpu.memory_space<vmem>>, vector<2x8x128xf32>
    tpu.vector_store %arg29[%c0_206, %c0_207, %c0_208], %544 {strides = array<i32>} : memref<2x8x128xf32, #tpu.memory_space<vmem>>, vector<2x8x128xf32>,
    %546 = tpu.iota {dimensions = array<i32: 2>} : vector<1x1x128xi32>
    %c1_i32 = arith.constant 1 : i32
    %547 = vector.broadcast %c1_i32 : i32 to vector<1x1x128xi32>
    %548 = arith.cmpi eq, %546, %547 : vector<1x1x128xi32>
    %549 = arith.extui %548 : vector<1x1x128xi1> to vector<1x1x128xi32>
    %550 = arith.sitofp %549 : vector<1x1x128xi32> to vector<1x1x128xf32>
    %c0_i32 = arith.constant 0 : i32
    %551 = vector.broadcast %c0_i32 : i32 to vector<1x1x128xi32>
    %552 = arith.cmpi eq, %546, %551 : vector<1x1x128xi32>
    %553 = arith.extui %552 : vector<1x1x128xi1> to vector<1x1x128xi32>
    %554 = arith.sitofp %553 : vector<1x1x128xi32> to vector<1x1x128xf32>
    %555 = arith.subf %550, %554 : vector<1x1x128xf32>
    %556 = vector.broadcast %555 : vector<1x1x128xf32> to vector<2x8x128xf32>
    %557 = arith.mulf %544, %556 : vector<2x8x128xf32>
    %cst_209 = arith.constant dense<0.000000e+00> : vector<2x8xf32>
    %558 = vector.multi_reduction <add>, %557, %cst_209 [2] : vector<2x8x128xf32> to vector<2x8xf32>
    %cst_210 = arith.constant 0.000000e+00 : f32
    %559 = vector.broadcast %cst_210 : f32 to vector<2x8xf32>
    %560 = arith.cmpf ogt, %0, %559 : vector<2x8xf32>
    %cst_211 = arith.constant -3.000000e+38 : f32
    %561 = vector.broadcast %cst_211 : f32 to vector<2x8xf32>
    %562 = arith.select %560, %558, %561 : vector<2x8xi1>, vector<2x8xf32>
    %cst_212 = arith.constant dense<0xFF800000> : vector<2xf32>
    %563 = vector.multi_reduction <maximumf>, %562, %cst_212 [1] : vector<2x8xf32> to vector<2xf32>
    %564 = vector.shape_cast %563 : vector<2xf32> to vector<2x1xf32>
    %565 = tpu.iota {dimensions = array<i32: 1>} : vector<2x8xi32>
    %566 = arith.sitofp %565 : vector<2x8xi32> to vector<2x8xf32>
    %567 = vector.broadcast %564 : vector<2x1xf32> to vector<2x8xf32>
    %568 = arith.cmpf oge, %562, %567 : vector<2x8xf32>
    %cst_213 = arith.constant 8.000000e+00 : f32
    %569 = vector.broadcast %cst_213 : f32 to vector<2x8xf32>
    %570 = arith.select %568, %566, %569 : vector<2x8xi1>, vector<2x8xf32>
    %cst_214 = arith.constant dense<0x7F800000> : vector<2xf32>
    %571 = vector.multi_reduction <minimumf>, %570, %cst_214 [1] : vector<2x8xf32> to vector<2xf32>
    %572 = vector.shape_cast %571 : vector<2xf32> to vector<2x1xf32>
    %573 = vector.broadcast %572 : vector<2x1xf32> to vector<2x8xf32>
    %574 = arith.cmpf oeq, %566, %573 : vector<2x8xf32>
    %575 = arith.extui %574 : vector<2x8xi1> to vector<2x8xi32>
    %576 = arith.sitofp %575 : vector<2x8xi32> to vector<2x8xf32>
    %577 = vector.shape_cast %576 : vector<2x8xf32> to vector<2x8x1xf32>
    %578 = vector.broadcast %577 : vector<2x8x1xf32> to vector<2x8x128xf32>
    %579 = arith.mulf %544, %578 : vector<2x8x128xf32>
    %cst_215 = arith.constant dense<0.000000e+00> : vector<2x128xf32>
    %580 = vector.multi_reduction <add>, %579, %cst_215 [1] : vector<2x8x128xf32> to vector<2x128xf32>
    %c0_216 = arith.constant 0 : index
    %c0_217 = arith.constant 0 : index
    %581 = vector.load %arg30[%c0_216, %c0_217] : memref<2x128xf32, #tpu.memory_space<vmem>>, vector<2x128xf32>
    tpu.vector_store %arg30[%c0_216, %c0_217], %580 {strides = array<i32>} : memref<2x128xf32, #tpu.memory_space<vmem>>, vector<2x128xf32>,
    return
  }
}

</mosaic_0001>

<llo_original>
// kernel: _lambda_.1
$region0: #{_lambda_.1}
  #allocation0 [shape = 'u32[]', space=smem, size = 0x4, offset = 0x4, fixed_abs, tag = 'smem constant byte address 0x4 - core index']
  #allocation1 [shape = 'u32[144,128]{1,0:T(1,128)}', space=vmem, size = 0x12000, scoped, tag = 'internal scratch']
  #allocation2 [shape = 'f32[1]{0:T(128)S(6)}', space=smem, size = 0x200, scoped, tag = 'scoped memory for _lambda_.1']
  %s0 = inlined_call_operand.smem [shape: u32[31], index: -1, kind: input, shape index: {}]
  %s1 = sld [smem:[%s0]]
  %s2 = scalar_lea.smem %s0, 1
  %s3 = sld [smem:[%s2]]
  %s4 = scalar_lea.smem %s0, 2
  %s5 = sld [smem:[%s4]]
  %s6 = scalar_lea.smem %s0, 3
  %s7 = sld [smem:[%s6]]
  %s8 = scalar_lea.smem %s0, 4
  %s9 = sld [smem:[%s8]]
  %s10 = scalar_lea.smem %s0, 5
  %s11 = sld [smem:[%s10]]
  %s12 = scalar_lea.smem %s0, 6
  %s13 = sld [smem:[%s12]]
  %s14 = scalar_lea.smem %s0, 7
  %s15 = sld [smem:[%s14]]
  %s16 = scalar_lea.smem %s0, 8
  %s17 = sld [smem:[%s16]]
  %s18 = scalar_lea.smem %s0, 9
  %s19 = sld [smem:[%s18]]
  %s20 = scalar_lea.smem %s0, 10
  %s21 = sld [smem:[%s20]]
  %s22 = scalar_lea.smem %s0, 11
  %s23 = sld [smem:[%s22]]
  %s24 = scalar_lea.smem %s0, 12
  %s25 = sld [smem:[%s24]]
  %s26 = scalar_lea.smem %s0, 13
  %s27 = sld [smem:[%s26]]
  %s28 = scalar_lea.smem %s0, 14
  %s29 = sld [smem:[%s28]]
  %s30 = scalar_lea.smem %s0, 15
  %s31 = sld [smem:[%s30]]
  %s32 = scalar_lea.smem %s0, 16
  %s33 = sld [smem:[%s32]]
  %s34 = scalar_lea.smem %s0, 17
  %s35 = sld [smem:[%s34]]
  %s36 = scalar_lea.smem %s0, 18
  %s37 = sld [smem:[%s36]]
  %s38 = scalar_lea.smem %s0, 19
  %s39 = sld [smem:[%s38]]
  %s40 = scalar_lea.smem %s0, 20
  %s41 = sld [smem:[%s40]]
  %s42 = scalar_lea.smem %s0, 21
  %s43 = sld [smem:[%s42]]
  %s44 = scalar_lea.smem %s0, 22
  %s45 = sld [smem:[%s44]]
  %s46 = scalar_lea.smem %s0, 23
  %s47 = sld [smem:[%s46]]
  %s48 = scalar_lea.smem %s0, 24
  %s49 = sld [smem:[%s48]]
  %s50 = scalar_lea.smem %s0, 25
  %s51 = sld [smem:[%s50]]
  %s52 = scalar_lea.smem %s0, 26
  %s53 = sld [smem:[%s52]]
  %s54 = scalar_lea.smem %s0, 27
  %s55 = sld [smem:[%s54]]
  %s56 = scalar_lea.smem %s0, 28
  %s57 = sld [smem:[%s56]]
  %s58 = scalar_lea.smem %s0, 29
  %s59 = sld [smem:[%s58]]
  %s60 = scalar_lea.smem %s0, 30
  %s61 = sld [smem:[%s60]]
  %62 = xla_tuple %s59, %s61
  %s63 = sld [smem:[#allocation0]]
  $region150: #{_lambda_.1} parent=0
    _
  %s65 = ssub.s32 1, %s63
  %s66 = scalar_select 0, %s65, %s63
  %67 = sst [smem:[#allocation2]] %s17
  $region1: #{_lambda_.1} parent=0
    #allocation3 [shape = 'u8[512]{0}', space=smem, size = 0x200, scoped, tag = 'input window, operand 4, single buffered']
    #allocation4 [shape = 's32[1]{0}', space=sflag, size = 0x4, scoped, tag = 'scoped memory for _lambda_.1']
    #allocation5 [shape = 's32[1]{0}', space=sflag, size = 0x4, scoped, tag = 'scoped memory for _lambda_.1']
    #allocation6 [shape = 'u8[512]{0}', space=smem, size = 0x200, scoped, tag = 'input window, operand 5, single buffered']
    #allocation7 [shape = 's32[1]{0}', space=sflag, size = 0x4, scoped, tag = 'scoped memory for _lambda_.1']
    #allocation8 [shape = 'u8[512]{0}', space=smem, size = 0x200, scoped, tag = 'input window, operand 6, single buffered']
    #allocation9 [shape = 'u8[512]{0}', space=smem, size = 0x200, scoped, tag = 'input window, operand 7, single buffered']
    #allocation10 [shape = 's32[1]{0}', space=sflag, size = 0x4, scoped, tag = 'scoped memory for _lambda_.1']
    #allocation11 [shape = 'u8[1024]{0}', space=vmem, size = 0x400, scoped, tag = 'output window, operand 1, single buffered']
    %68 = vsyncpa [#allocation5], 0
    %69 = vsyncpa [#allocation7], 0
    %70 = vsyncpa [#allocation10], 0
    %71 = vsyncpa [#allocation4], 0
    // Predicated region
    $region2: #{_lambda_.1} parent=1 // pred_check
      _
    $region3: #{_lambda_.1} parent=1 // pred_check_branch
      %73 = sbr.rel (0) target = $region5
    $region4: #{_lambda_.1} parent=1 // pred_region
      _
    $region5: #{_lambda_.1} parent=1 // pred_fallthru
      _
    // Predicated region
    $region6: #{_lambda_.1} parent=1 // pred_check
      _
    $region7: #{_lambda_.1} parent=1 // pred_check_branch
      %75 = sbr.rel (0) target = $region9
    $region8: #{_lambda_.1} parent=1 // pred_region
      _
    $region9: #{_lambda_.1} parent=1 // pred_fallthru
      _
    // Predicated region
    $region10: #{_lambda_.1} parent=1 // pred_check
      _
    $region11: #{_lambda_.1} parent=1 // pred_check_branch
      %77 = sbr.rel (0) target = $region13
    $region12: #{_lambda_.1} parent=1 // pred_region
      _
    $region13: #{_lambda_.1} parent=1 // pred_fallthru
      _
    // Predicated region
    $region14: #{_lambda_.1} parent=1 // pred_check
      _
    $region15: #{_lambda_.1} parent=1 // pred_check_branch
      %79 = sbr.rel (0) target = $region17
    $region16: #{_lambda_.1} parent=1 // pred_region
      _
    $region17: #{_lambda_.1} parent=1 // pred_fallthru
      _
    // Predicated region
    $region18: #{_lambda_.1} parent=1 // pred_check
      _
    $region19: #{_lambda_.1} parent=1 // pred_check_branch
      %81 = sbr.rel (0) target = $region21
    $region20: #{_lambda_.1} parent=1 // pred_region
      %s83 = ssub.s32 16, 16
      %84 = vsyncadd [#allocation5], %s83
      %s86 = sshll.u32 %s9, 4
      %s87 = int_to_ptr.vmem [resolvable:$true] %s86
      %89 = dma.vmem_to_smem %s87, 16, [#allocation3], [#allocation5]
    $region21: #{_lambda_.1} parent=1 // pred_fallthru
      _
    // Predicated region
    $region22: #{_lambda_.1} parent=1 // pred_check
      _
    $region23: #{_lambda_.1} parent=1 // pred_check_branch
      %91 = sbr.rel (0) target = $region25
    $region24: #{_lambda_.1} parent=1 // pred_region
      %s93 = ssub.s32 16, 16
      %94 = vsyncadd [#allocation7], %s93
      %s96 = sshll.u32 %s11, 4
      %s97 = int_to_ptr.vmem [resolvable:$true] %s96
      %99 = dma.vmem_to_smem %s97, 16, [#allocation6], [#allocation7]
    $region25: #{_lambda_.1} parent=1 // pred_fallthru
      _
    // Predicated region
    $region26: #{_lambda_.1} parent=1 // pred_check
      _
    $region27: #{_lambda_.1} parent=1 // pred_check_branch
      %101 = sbr.rel (0) target = $region29
    $region28: #{_lambda_.1} parent=1 // pred_region
      %s103 = ssub.s32 16, 16
      %104 = vsyncadd [#allocation7], %s103
      %s106 = sshll.u32 %s13, 4
      %s107 = int_to_ptr.vmem [resolvable:$true] %s106
      %109 = dma.vmem_to_smem %s107, 16, [#allocation8], [#allocation7]
    $region29: #{_lambda_.1} parent=1 // pred_fallthru
      _
    // Predicated region
    $region30: #{_lambda_.1} parent=1 // pred_check
      _
    $region31: #{_lambda_.1} parent=1 // pred_check_branch
      %111 = sbr.rel (0) target = $region33
    $region32: #{_lambda_.1} parent=1 // pred_region
      %s113 = ssub.s32 16, 16
      %114 = vsyncadd [#allocation10], %s113
      %s116 = sshll.u32 %s15, 4
      %s117 = int_to_ptr.vmem [resolvable:$true] %s116
      %119 = dma.vmem_to_smem %s117, 16, [#allocation9], [#allocation10]
    $region33: #{_lambda_.1} parent=1 // pred_fallthru
      _
    // Predicated region
    $region34: #{_lambda_.1} parent=1 // pred_check
      _
    $region35: #{_lambda_.1} parent=1 // pred_check_branch
      %121 = sbr.rel (0) target = $region37
    $region36: #{_lambda_.1} parent=1 // pred_region
      _
    $region37: #{_lambda_.1} parent=1 // pred_fallthru
      _
    // Predicated region
    $region38: #{_lambda_.1} parent=1 // pred_check
      _
    $region39: #{_lambda_.1} parent=1 // pred_check_branch
      %123 = sbr.rel (0) target = $region41
    $region40: #{_lambda_.1} parent=1 // pred_region
      _
    $region41: #{_lambda_.1} parent=1 // pred_fallthru
      _
    // Predicated region
    $region42: #{_lambda_.1} parent=1 // pred_check
      _
    $region43: #{_lambda_.1} parent=1 // pred_check_branch
      %125 = sbr.rel (0) target = $region45
    $region44: #{_lambda_.1} parent=1 // pred_region
      _
    $region45: #{_lambda_.1} parent=1 // pred_fallthru
      _
    // Predicated region
    $region46: #{_lambda_.1} parent=1 // pred_check
      _
    $region47: #{_lambda_.1} parent=1 // pred_check_branch
      %127 = sbr.rel (0) target = $region49
    $region48: #{_lambda_.1} parent=1 // pred_region
      _
    $region49: #{_lambda_.1} parent=1 // pred_fallthru
      _
    // Predicated region
    $region50: #{_lambda_.1} parent=1 // pred_check
      _
    $region51: #{_lambda_.1} parent=1 // pred_check_branch
      %129 = sbr.rel (0) target = $region53
    $region52: #{_lambda_.1} parent=1 // pred_region
      _
    $region53: #{_lambda_.1} parent=1 // pred_fallthru
      _
    // Predicated region
    $region54: #{_lambda_.1} parent=1 // pred_check
      _
    $region55: #{_lambda_.1} parent=1 // pred_check_branch
      %131 = sbr.rel (0) target = $region57
    $region56: #{_lambda_.1} parent=1 // pred_region
      _
    $region57: #{_lambda_.1} parent=1 // pred_fallthru
      _
    // Predicated region
    $region58: #{_lambda_.1} parent=1 // pred_check
      _
    $region59: #{_lambda_.1} parent=1 // pred_check_branch
      %133 = sbr.rel (0) target = $region61
    $region60: #{_lambda_.1} parent=1 // pred_region
      _
    $region61: #{_lambda_.1} parent=1 // pred_fallthru
      _
    // Predicated region
    $region62: #{_lambda_.1} parent=1 // pred_check
      _
    $region63: #{_lambda_.1} parent=1 // pred_check_branch
      %135 = sbr.rel (0) target = $region65
    $region64: #{_lambda_.1} parent=1 // pred_region
      _
    $region65: #{_lambda_.1} parent=1 // pred_fallthru
      _
    // Predicated region
    $region66: #{_lambda_.1} parent=1 // pred_check
      _
    $region67: #{_lambda_.1} parent=1 // pred_check_branch
      %137 = sbr.rel (0) target = $region69
    $region68: #{_lambda_.1} parent=1 // pred_region
      _
    $region69: #{_lambda_.1} parent=1 // pred_fallthru
      _
    // Predicated region
    $region70: #{_lambda_.1} parent=1 // pred_check
      _
    $region71: #{_lambda_.1} parent=1 // pred_check_branch
      %139 = sbr.rel (0) target = $region73
    $region72: #{_lambda_.1} parent=1 // pred_region
      _
    $region73: #{_lambda_.1} parent=1 // pred_fallthru
      _
    // Predicated region
    $region74: #{_lambda_.1} parent=1 // pred_check
      _
    $region75: #{_lambda_.1} parent=1 // pred_check_branch
      %141 = sbr.rel (0) target = $region77
    $region76: #{_lambda_.1} parent=1 // pred_region
      _
    $region77: #{_lambda_.1} parent=1 // pred_fallthru
      _
    // Predicated region
    $region78: #{_lambda_.1} parent=1 // pred_check
      _
    $region79: #{_lambda_.1} parent=1 // pred_check_branch
      %143 = sbr.rel (0) target = $region81
    $region80: #{_lambda_.1} parent=1 // pred_region
      _
    $region81: #{_lambda_.1} parent=1 // pred_fallthru
      _
    // Predicated region
    $region82: #{_lambda_.1} parent=1 // pred_check
      _
    $region83: #{_lambda_.1} parent=1 // pred_check_branch
      %145 = sbr.rel (0) target = $region85
    $region84: #{_lambda_.1} parent=1 // pred_region
      _
    $region85: #{_lambda_.1} parent=1 // pred_fallthru
      _
    // Predicated region
    $region86: #{_lambda_.1} parent=1 // pred_check
      _
    $region87: #{_lambda_.1} parent=1 // pred_check_branch
      %147 = sbr.rel (0) target = $region89
    $region88: #{_lambda_.1} parent=1 // pred_region
      _
    $region89: #{_lambda_.1} parent=1 // pred_fallthru
      _
    // Predicated region
    $region90: #{_lambda_.1} parent=1 // pred_check
      _
    $region91: #{_lambda_.1} parent=1 // pred_check_branch
      %149 = sbr.rel (0) target = $region93
    $region92: #{_lambda_.1} parent=1 // pred_region
      _
    $region93: #{_lambda_.1} parent=1 // pred_fallthru
      _
    // Predicated region
    $region94: #{_lambda_.1} parent=1 // pred_check
      _
    $region95: #{_lambda_.1} parent=1 // pred_check_branch
      %151 = sbr.rel (0) target = $region97
    $region96: #{_lambda_.1} parent=1 // pred_region
      _
    $region97: #{_lambda_.1} parent=1 // pred_fallthru
      _
    // Predicated region
    $region98: #{_lambda_.1} parent=1 // pred_check
      _
    $region99: #{_lambda_.1} parent=1 // pred_check_branch
      %153 = sbr.rel (0) target = $region101
    $region100: #{_lambda_.1} parent=1 // pred_region
      _
    $region101: #{_lambda_.1} parent=1 // pred_fallthru
      _
    // Predicated region
    $region102: #{_lambda_.1} parent=1 // pred_check
      _
    $region103: #{_lambda_.1} parent=1 // pred_check_branch
      %155 = sbr.rel (0) target = $region105
    $region104: #{_lambda_.1} parent=1 // pred_region
      _
    $region105: #{_lambda_.1} parent=1 // pred_fallthru
      _
    // Predicated region
    $region106: #{_lambda_.1} parent=1 // pred_check
      _
    $region107: #{_lambda_.1} parent=1 // pred_check_branch
      %157 = sbr.rel (0) target = $region109
    $region108: #{_lambda_.1} parent=1 // pred_region
      _
    $region109: #{_lambda_.1} parent=1 // pred_fallthru
      _
    // Predicated region
    $region110: #{_lambda_.1} parent=1 // pred_check
      _
    $region111: #{_lambda_.1} parent=1 // pred_check_branch
      %159 = sbr.rel (0) target = $region113
    $region112: #{_lambda_.1} parent=1 // pred_region
      _
    $region113: #{_lambda_.1} parent=1 // pred_fallthru
      _
    // Predicated region
    $region114: #{_lambda_.1} parent=1 // pred_check
      _
    $region115: #{_lambda_.1} parent=1 // pred_check_branch
      %161 = sbr.rel (0) target = $region117
    $region116: #{_lambda_.1} parent=1 // pred_region
      _
    $region117: #{_lambda_.1} parent=1 // pred_fallthru
      _
    // Predicated region
    $region118: #{_lambda_.1} parent=1 // pred_check
      _
    $region119: #{_lambda_.1} parent=1 // pred_check_branch
      %163 = sbr.rel (0) target = $region121
    $region120: #{_lambda_.1} parent=1 // pred_region
      %164 = dma.done [#allocation5], 16
    $region121: #{_lambda_.1} parent=1 // pred_fallthru
      _
    // Predicated region
    $region122: #{_lambda_.1} parent=1 // pred_check
      _
    $region123: #{_lambda_.1} parent=1 // pred_check_branch
      %166 = sbr.rel (0) target = $region125
    $region124: #{_lambda_.1} parent=1 // pred_region
      %167 = dma.done [#allocation7], 16
    $region125: #{_lambda_.1} parent=1 // pred_fallthru
      _
    // Predicated region
    $region126: #{_lambda_.1} parent=1 // pred_check
      _
    $region127: #{_lambda_.1} parent=1 // pred_check_branch
      %169 = sbr.rel (0) target = $region129
    $region128: #{_lambda_.1} parent=1 // pred_region
      %170 = dma.done [#allocation7], 16
    $region129: #{_lambda_.1} parent=1 // pred_fallthru
      _
    // Predicated region
    $region130: #{_lambda_.1} parent=1 // pred_check
      _
    $region131: #{_lambda_.1} parent=1 // pred_check_branch
      %172 = sbr.rel (0) target = $region133
    $region132: #{_lambda_.1} parent=1 // pred_region
      %173 = dma.done [#allocation10], 16
    $region133: #{_lambda_.1} parent=1 // pred_fallthru
      _
    %174 = sfence
    %v175 = vld [vmem:[%s3] sm:$0x3]
    %v176 = vlaneseq
    %v177 = vshrl.u32 %v176, 7
    %v178 = vsub.s32 0, %v177
    %v179 = vrot.slane %v175, %v178
    %181 = vbcast.lane.b32.xlu0 %v179, 256
    %v182 = vpop.permute.xlu0 %181
    %v183 = vlaneseq
    %v184 = vshrl.u32 %v183, 7
    %v185 = vsub.s32 1, %v184
    %v186 = vrot.slane %v175, %v185
    %188 = vbcast.lane.b32.xlu0 %v186, 256
    %v189 = vpop.permute.xlu0 %188
    %v192 = vunpack.c.l.s4 1966171168
    %v193 = vunpack.c.0.s8 %v192
    %v194 = vlaneseq
    %v195 = vshrl.u32 %v194, 7
    %v196 = vsub.s32 %v193, %v195
    %v197 = vrot.slane %v175, %v196
    %v198 = vcombine.high %v197, %v197
    %v200 = vunpack.c.l.s4 1966171168
    %v201 = vunpack.c.0.s8 %v200
    %v202 = vlaneseq
    %v203 = vshrl.u32 %v202, 7
    %v204 = vsub.s32 %v201, %v203
    %v205 = vrot.slane %v197, %v204
    %v207 = vunpack.c.l.s4 1966171168
    %v208 = vunpack.c.0.s8 %v207
    %v209 = vlaneseq
    %v210 = vshrl.u32 %v209, 7
    %v211 = vsub.s32 %v208, %v210
    %v212 = vrot.slane %v198, %v211
    %vm215 = vcmp.gt.f32.partialorder %v205, 0.0
    %vm216 = vcmp.gt.f32.partialorder %v212, 0.0
    %vm217 = vcmask 58368
    %v218 = vsel %vm217, %v175, 0.0
    %219 = vadd.xlane.f32.xlu0 %v218
    %v220 = vpop.xlane.xlu0 %219
    %v221 = vrot.slane %v220, 4
    %v222 = vadd.f32 %v220, %v221
    %v223 = vrot.slane %v222, 2
    %v224 = vadd.f32 %v222, %v223
    %v225 = vrot.slane %v224, 1
    %v226 = vadd.f32 %v224, %v225
    %s227 = vtos %v226
    %s228 = smax.f32 %s227, 1.0
    %v229 = vstv %s228
    %v230 = vrcp.pop %v229
    %s231 = vtos %v230
    %v232 = vld [vmem:[%s1] sm:$0x3]
    %v235 = vunpack.c.l.s4 1966171168
    %v236 = vunpack.c.0.s8 %v235
    %v237 = vlaneseq
    %v238 = vshrl.u32 %v237, 7
    %v239 = vsub.s32 %v236, %v238
    %v240 = vrot.slane %v232, %v239
    %v241 = vcombine.high %v240, %v240
    %v243 = vunpack.c.l.s4 1966171168
    %v244 = vunpack.c.0.s8 %v243
    %v245 = vlaneseq
    %v246 = vshrl.u32 %v245, 7
    %v247 = vsub.s32 %v244, %v246
    %v248 = vrot.slane %v240, %v247
    %v250 = vunpack.c.l.s4 1966171168
    %v251 = vunpack.c.0.s8 %v250
    %v252 = vlaneseq
    %v253 = vshrl.u32 %v252, 7
    %v254 = vsub.s32 %v251, %v253
    %v255 = vrot.slane %v241, %v254
    %v256 = vlaneseq
    %v257 = vshrl.u32 %v256, 7
    %v258 = vsub.s32 0, %v257
    %v259 = vrot.slane %v232, %v258
    %261 = vbcast.lane.b32.xlu0 %v259, 256
    %v262 = vpop.permute.xlu0 %261
    %v263 = vlaneseq
    %v264 = vshrl.u32 %v263, 7
    %v265 = vsub.s32 1, %v264
    %v266 = vrot.slane %v232, %v265
    %268 = vbcast.lane.b32.xlu0 %v266, 256
    %v269 = vpop.permute.xlu0 %268
    %v270 = vlaneseq
    %v271 = vshrl.u32 %v270, 7
    %v272 = vsub.s32 0, %v271
    %v273 = vrot.slane %v248, %v272
    %v274 = vlaneseq
    %v275 = vshrl.u32 %v274, 7
    %v276 = vsub.s32 0, %v275
    %v277 = vrot.slane %v255, %v276
    %v280 = vsub.f32 %v273, %v262
    %v281 = vsub.f32 %v277, %v269
    %vm282 = vcmask 64512
    %v283 = vsel %vm282, %v280, -inf
    %v284 = vsel %vm282, %v281, -inf
    %v285 = vmax.f32 %v283, %v284
    %286 = vmax.xlane.f32.xlu0 %v285
    %v287 = vpop.xlane.xlu0 %286
    %v288 = vrot.slane %v287, 4
    %v289 = vmax.f32 %v287, %v288
    %v290 = vrot.slane %v289, 2
    %v291 = vmax.f32 %v289, %v290
    %v292 = vrot.slane %v291, 1
    %v293 = vmax.f32 %v291, %v292
    %s294 = vtos %v293
    %s295 = sadd.f32 %s294, 1e-08
    %v296 = vstv %s295
    %v297 = vrcp.pop %v296
    %s298 = vtos %v297
    %v299 = vstv %s298
    %v300 = vmul.f32 %v280, %v299
    %v301 = vmul.f32 %v281, %v299
    %v302 = vsel %vm282, %v300, 0.0
    %v303 = vsel %vm282, %v301, 0.0
    %v304 = vadd.f32 %v302, %v303
    %305 = vadd.xlane.f32.xlu0 %v304
    %v306 = vpop.xlane.xlu0 %305
    %v307 = vrot.slane %v306, 4
    %v308 = vadd.f32 %v306, %v307
    %v309 = vrot.slane %v308, 2
    %v310 = vadd.f32 %v308, %v309
    %v311 = vrot.slane %v310, 1
    %v312 = vadd.f32 %v310, %v311
    %s313 = vtos %v312
    %v314 = vrcp.pop 128.0
    %s315 = vtos %v314
    %s316 = smul.f32 %s313, %s315
    %v317 = vstv %s316
    %v318 = vsub.f32 %v300, %v317
    %v319 = vsub.f32 %v301, %v317
    %v320 = vmul.f32 %v318, %v318
    %v321 = vmul.f32 %v319, %v319
    %v322 = vsel %vm282, %v320, 0.0
    %v323 = vsel %vm282, %v321, 0.0
    %v324 = vadd.f32 %v322, %v323
    %325 = vadd.xlane.f32.xlu0 %v324
    %v326 = vpop.xlane.xlu0 %325
    %v327 = vrot.slane %v326, 4
    %v328 = vadd.f32 %v326, %v327
    %v329 = vrot.slane %v328, 2
    %v330 = vadd.f32 %v328, %v329
    %v331 = vrot.slane %v330, 1
    %v332 = vadd.f32 %v330, %v331
    %s333 = vtos %v332
    %v334 = vrcp.pop 128.0
    %s335 = vtos %v334
    %s336 = smul.f32 %s333, %s335
    %s337 = sld [smem:[#allocation2]]
    %s338 = sld [smem:[#allocation3]]
    %s339 = sld [smem:[#allocation6]]
    %s340 = smul.f32 %s338, %s339
    %s341 = smul.f32 %s338, %s338
    %s342 = smul.f32 %s336, %s341
    %s343 = sadd.f32 %s342, 1e-05
    %v344 = vstv %s343
    %v345 = vrsqrt.pop %v344
    %s346 = vtos %v345
    %s347 = smul.f32 %s340, %s346
    %s348 = sld [smem:[#allocation8]]
    %s349 = smul.f32 %s316, %s347
    %s350 = ssub.f32 %s348, %s349
    %s351 = sld [smem:[#allocation9]]
    %s352 = sld [smem:[#allocation3 + $0x1]]
    %s353 = sld [smem:[#allocation6 + $0x1]]
    %s354 = smul.f32 %s352, %s353
    %s355 = smul.f32 %s352, %s352
    %s356 = smul.f32 %s336, %s355
    %s357 = sadd.f32 %s356, 1e-05
    %v358 = vstv %s357
    %v359 = vrsqrt.pop %v358
    %s360 = vtos %v359
    %s361 = smul.f32 %s354, %s360
    %s362 = sld [smem:[#allocation8 + $0x1]]
    %s363 = smul.f32 %s316, %s361
    %s364 = ssub.f32 %s362, %s363
    %s365 = sld [smem:[#allocation9 + $0x1]]
    %s366 = sld [smem:[#allocation3 + $0x2]]
    %s367 = sld [smem:[#allocation6 + $0x2]]
    %s368 = smul.f32 %s366, %s367
    %s369 = smul.f32 %s366, %s366
    %s370 = smul.f32 %s336, %s369
    %s371 = sadd.f32 %s370, 1e-05
    %v372 = vstv %s371
    %v373 = vrsqrt.pop %v372
    %s374 = vtos %v373
    %s375 = smul.f32 %s368, %s374
    %s376 = sld [smem:[#allocation8 + $0x2]]
    %s377 = smul.f32 %s316, %s375
    %s378 = ssub.f32 %s376, %s377
    %s379 = sld [smem:[#allocation9 + $0x2]]
    %s380 = sld [smem:[#allocation3 + $0x3]]
    %s381 = sld [smem:[#allocation6 + $0x3]]
    %s382 = smul.f32 %s380, %s381
    %s383 = smul.f32 %s380, %s380
    %s384 = smul.f32 %s336, %s383
    %s385 = sadd.f32 %s384, 1e-05
    %v386 = vstv %s385
    %v387 = vrsqrt.pop %v386
    %s388 = vtos %v387
    %s389 = smul.f32 %s382, %s388
    %s390 = sld [smem:[#allocation8 + $0x3]]
    %s391 = smul.f32 %s316, %s389
    %s392 = ssub.f32 %s390, %s391
    %s393 = sld [smem:[#allocation9 + $0x3]]
    %s394 = sld [smem:[#allocation3 + $0x4]]
    %s395 = sld [smem:[#allocation6 + $0x4]]
    %s396 = smul.f32 %s394, %s395
    %s397 = smul.f32 %s394, %s394
    %s398 = smul.f32 %s336, %s397
    %s399 = sadd.f32 %s398, 1e-05
    %v400 = vstv %s399
    %v401 = vrsqrt.pop %v400
    %s402 = vtos %v401
    %s403 = smul.f32 %s396, %s402
    %s404 = sld [smem:[#allocation8 + $0x4]]
    %s405 = smul.f32 %s316, %s403
    %s406 = ssub.f32 %s404, %s405
    %s407 = sld [smem:[#allocation9 + $0x4]]
    %s408 = sld [smem:[#allocation3 + $0x5]]
    %s409 = sld [smem:[#allocation6 + $0x5]]
    %s410 = smul.f32 %s408, %s409
    %s411 = smul.f32 %s408, %s408
    %s412 = smul.f32 %s336, %s411
    %s413 = sadd.f32 %s412, 1e-05
    %v414 = vstv %s413
    %v415 = vrsqrt.pop %v414
    %s416 = vtos %v415
    %s417 = smul.f32 %s410, %s416
    %s418 = sld [smem:[#allocation8 + $0x5]]
    %s419 = smul.f32 %s316, %s417
    %s420 = ssub.f32 %s418, %s419
    %s421 = sld [smem:[#allocation9 + $0x5]]
    %s422 = sld [smem:[#allocation3 + $0x6]]
    %s423 = sld [smem:[#allocation6 + $0x6]]
    %s424 = smul.f32 %s422, %s423
    %s425 = smul.f32 %s422, %s422
    %s426 = smul.f32 %s336, %s425
    %s427 = sadd.f32 %s426, 1e-05
    %v428 = vstv %s427
    %v429 = vrsqrt.pop %v428
    %s430 = vtos %v429
    %s431 = smul.f32 %s424, %s430
    %s432 = sld [smem:[#allocation8 + $0x6]]
    %s433 = smul.f32 %s316, %s431
    %s434 = ssub.f32 %s432, %s433
    %s435 = sld [smem:[#allocation9 + $0x6]]
    %s436 = sld [smem:[#allocation3 + $0x7]]
    %s437 = sld [smem:[#allocation6 + $0x7]]
    %s438 = smul.f32 %s436, %s437
    %s439 = smul.f32 %s436, %s436
    %s440 = smul.f32 %s336, %s439
    %s441 = sadd.f32 %s440, 1e-05
    %v442 = vstv %s441
    %v443 = vrsqrt.pop %v442
    %s444 = vtos %v443
    %s445 = smul.f32 %s438, %s444
    %s446 = sld [smem:[#allocation8 + $0x7]]
    %s447 = smul.f32 %s316, %s445
    %s448 = ssub.f32 %s446, %s447
    %s449 = sld [smem:[#allocation9 + $0x7]]
    %v450 = vstv %s347
    %v451 = vmul.f32 %v300, %v450
    %v452 = vmul.f32 %v301, %v450
    %v453 = vstv %s350
    %v454 = vadd.f32 %v451, %v453
    %v455 = vadd.f32 %v452, %v453
    %vm456 = vcmp.ge.f32.partialorder %v454, 0.0
    %vm457 = vcmp.ge.f32.partialorder %v455, 0.0
    %v458 = vmul.f32 %v454, 0.01
    %v459 = vmul.f32 %v455, 0.01
    %v460 = vsel %vm456, %v454, %v458
    %v461 = vsel %vm457, %v455, %v459
    %v462 = vstv %s351
    %v463 = vmul.f32 %v460, %v462
    %v464 = vmul.f32 %v461, %v462
    %v465 = vstv %s337
    %v466 = vadd.f32 %v463, %v465
    %v467 = vadd.f32 %v464, %v465
    %v468 = vstv %s361
    %v469 = vmul.f32 %v300, %v468
    %v470 = vmul.f32 %v301, %v468
    %v471 = vstv %s364
    %v472 = vadd.f32 %v469, %v471
    %v473 = vadd.f32 %v470, %v471
    %vm474 = vcmp.ge.f32.partialorder %v472, 0.0
    %vm475 = vcmp.ge.f32.partialorder %v473, 0.0
    %v476 = vmul.f32 %v472, 0.01
    %v477 = vmul.f32 %v473, 0.01
    %v478 = vsel %vm474, %v472, %v476
    %v479 = vsel %vm475, %v473, %v477
    %v480 = vstv %s365
    %v481 = vmul.f32 %v478, %v480
    %v482 = vmul.f32 %v479, %v480
    %v483 = vadd.f32 %v466, %v481
    %v484 = vadd.f32 %v467, %v482
    %v485 = vstv %s375
    %v486 = vmul.f32 %v300, %v485
    %v487 = vmul.f32 %v301, %v485
    %v488 = vstv %s378
    %v489 = vadd.f32 %v486, %v488
    %v490 = vadd.f32 %v487, %v488
    %vm491 = vcmp.ge.f32.partialorder %v489, 0.0
    %vm492 = vcmp.ge.f32.partialorder %v490, 0.0
    %v493 = vmul.f32 %v489, 0.01
    %v494 = vmul.f32 %v490, 0.01
    %v495 = vsel %vm491, %v489, %v493
    %v496 = vsel %vm492, %v490, %v494
    %v497 = vstv %s379
    %v498 = vmul.f32 %v495, %v497
    %v499 = vmul.f32 %v496, %v497
    %v500 = vadd.f32 %v483, %v498
    %v501 = vadd.f32 %v484, %v499
    %v502 = vstv %s389
    %v503 = vmul.f32 %v300, %v502
    %v504 = vmul.f32 %v301, %v502
    %v505 = vstv %s392
    %v506 = vadd.f32 %v503, %v505
    %v507 = vadd.f32 %v504, %v505
    %vm508 = vcmp.ge.f32.partialorder %v506, 0.0
    %vm509 = vcmp.ge.f32.partialorder %v507, 0.0
    %v510 = vmul.f32 %v506, 0.01
    %v511 = vmul.f32 %v507, 0.01
    %v512 = vsel %vm508, %v506, %v510
    %v513 = vsel %vm509, %v507, %v511
    %v514 = vstv %s393
    %v515 = vmul.f32 %v512, %v514
    %v516 = vmul.f32 %v513, %v514
    %v517 = vadd.f32 %v500, %v515
    %v518 = vadd.f32 %v501, %v516
    %v519 = vstv %s403
    %v520 = vmul.f32 %v300, %v519
    %v521 = vmul.f32 %v301, %v519
    %v522 = vstv %s406
    %v523 = vadd.f32 %v520, %v522
    %v524 = vadd.f32 %v521, %v522
    %vm525 = vcmp.ge.f32.partialorder %v523, 0.0
    %vm526 = vcmp.ge.f32.partialorder %v524, 0.0
    %v527 = vmul.f32 %v523, 0.01
    %v528 = vmul.f32 %v524, 0.01
    %v529 = vsel %vm525, %v523, %v527
    %v530 = vsel %vm526, %v524, %v528
    %v531 = vstv %s407
    %v532 = vmul.f32 %v529, %v531
    %v533 = vmul.f32 %v530, %v531
    %v534 = vadd.f32 %v517, %v532
    %v535 = vadd.f32 %v518, %v533
    %v536 = vstv %s417
    %v537 = vmul.f32 %v300, %v536
    %v538 = vmul.f32 %v301, %v536
    %v539 = vstv %s420
    %v540 = vadd.f32 %v537, %v539
    %v541 = vadd.f32 %v538, %v539
    %vm542 = vcmp.ge.f32.partialorder %v540, 0.0
    %vm543 = vcmp.ge.f32.partialorder %v541, 0.0
    %v544 = vmul.f32 %v540, 0.01
    %v545 = vmul.f32 %v541, 0.01
    %v546 = vsel %vm542, %v540, %v544
    %v547 = vsel %vm543, %v541, %v545
    %v548 = vstv %s421
    %v549 = vmul.f32 %v546, %v548
    %v550 = vmul.f32 %v547, %v548
    %v551 = vadd.f32 %v534, %v549
    %v552 = vadd.f32 %v535, %v550
    %v553 = vstv %s431
    %v554 = vmul.f32 %v300, %v553
    %v555 = vmul.f32 %v301, %v553
    %v556 = vstv %s434
    %v557 = vadd.f32 %v554, %v556
    %v558 = vadd.f32 %v555, %v556
    %vm559 = vcmp.ge.f32.partialorder %v557, 0.0
    %vm560 = vcmp.ge.f32.partialorder %v558, 0.0
    %v561 = vmul.f32 %v557, 0.01
    %v562 = vmul.f32 %v558, 0.01
    %v563 = vsel %vm559, %v557, %v561
    %v564 = vsel %vm560, %v558, %v562
    %v565 = vstv %s435
    %v566 = vmul.f32 %v563, %v565
    %v567 = vmul.f32 %v564, %v565
    %v568 = vadd.f32 %v551, %v566
    %v569 = vadd.f32 %v552, %v567
    %v570 = vstv %s445
    %v571 = vmul.f32 %v300, %v570
    %v572 = vmul.f32 %v301, %v570
    %v573 = vstv %s448
    %v574 = vadd.f32 %v571, %v573
    %v575 = vadd.f32 %v572, %v573
    %vm576 = vcmp.ge.f32.partialorder %v574, 0.0
    %vm577 = vcmp.ge.f32.partialorder %v575, 0.0
    %v578 = vmul.f32 %v574, 0.01
    %v579 = vmul.f32 %v575, 0.01
    %v580 = vsel %vm576, %v574, %v578
    %v581 = vsel %vm577, %v575, %v579
    %v582 = vstv %s449
    %v583 = vmul.f32 %v580, %v582
    %v584 = vmul.f32 %v581, %v582
    %v585 = vadd.f32 %v568, %v583
    %v586 = vadd.f32 %v569, %v584
    %v587 = vsel %vm215, 1, 0
    %v588 = vsel %vm216, 1, 0
    %v589 = vlaneseq
    %v590 = vshrl.u32 %v589, 7
    %v591 = vsub.s32 0, %v590
    %v592 = vrot.slane %v587, %v591
    %v593 = vlaneseq
    %v594 = vshrl.u32 %v593, 7
    %v595 = vsub.s32 0, %v594
    %v596 = vrot.slane %v588, %v595
    %vm597 = vcmp.eq.s32.totalorder %v592, 1
    %vm598 = vcmp.eq.s32.totalorder %v596, 1
    %v599 = vsel %vm597, %v585, -9e+08
    %v600 = vsel %vm598, %v586, -9e+08
    %v601 = vsel %vm282, %v599, -inf
    %602 = vmax.xlane.f32.xlu0 %v601
    %v603 = vpop.xlane.xlu0 %602
    %v604 = vsel %vm282, %v600, -inf
    %605 = vmax.xlane.f32.xlu0 %v604
    %v606 = vpop.xlane.xlu0 %605
    %v607 = vsub.f32 %v599, %v603
    %v608 = vsub.f32 %v600, %v606
    %v609 = vmul.f32 %v607, 1.442695
    %v610 = vpow.pop %v609
    %v611 = vmul.f32 %v608, 1.442695
    %v612 = vpow.pop %v611
    %v613 = vsel %vm282, %v610, 0.0
    %614 = vadd.xlane.f32.xlu0 %v613
    %v615 = vpop.xlane.xlu0 %614
    %v616 = vsel %vm282, %v612, 0.0
    %617 = vadd.xlane.f32.xlu0 %v616
    %v618 = vpop.xlane.xlu0 %617
    %v619 = vrcp.pop %v615
    %v620 = vmul.f32 %v610, %v619
    %v621 = vrcp.pop %v618
    %v622 = vmul.f32 %v612, %v621
    %v623 = vsel %vm597, %v620, 0.0
    %v624 = vsel %vm598, %v622, 0.0
    %v625 = vld [vmem:[%s5] sm:$0xff]
    %v626 = vld [vmem:[%s5 + $0x8] sm:$0xff]
    %v627 = vld [vmem:[%s19] sm:$0x3f]
    %vm628 = vcmask 48128
    %v630 = vsel %vm628, %v625, 0
    %v633 = vsel %vm628, %v626, 0
    %vm635 = vcmask 1045504
    %v637 = vsel %vm635, %v627, 0
    %639 = vmatprep.subr.mxu0 0.0
    %640 = vmatpush1.msra.mxu0 %v637
    %641 = vmatprep.subr.mxu0 0.0
    %642 = vmatpush1.msra.mxu0 0.0
    %643 = vmatprep.subr.mxu0 0.0
    %644 = vmatpush1.msra.mxu0 0.0
    %645 = vmatprep.subr.mxu0 0.0
    %646 = vmatpush1.msra.mxu0 0.0
    %647 = vmatprep.subr.mxu0 0.0
    %648 = vmatpush1.msra.mxu0 0.0
    %649 = vmatprep.subr.mxu0 0.0
    %650 = vmatpush1.msra.mxu0 0.0
    %651 = vmatprep.subr.mxu0 0.0
    %652 = vmatpush1.msra.mxu0 0.0
    %653 = vmatprep.subr.mxu0 0.0
    %654 = vmatpush1.msra.mxu0 0.0
    %655 = vmatprep.subr.mxu0 0.0
    %656 = vmatpush1.msra.mxu0 0.0
    %657 = vmatprep.subr.mxu0 0.0
    %658 = vmatpush1.msra.mxu0 0.0
    %659 = vmatprep.subr.mxu0 0.0
    %660 = vmatpush1.msra.mxu0 0.0
    %661 = vmatprep.subr.mxu0 0.0
    %662 = vmatpush1.msra.mxu0 0.0
    %663 = vmatprep.subr.mxu0 0.0
    %664 = vmatpush1.msra.mxu0 0.0
    %665 = vmatprep.subr.mxu0 0.0
    %666 = vmatpush1.msra.mxu0 0.0
    %667 = vmatprep.subr.mxu0 0.0
    %668 = vmatpush1.msra.mxu0 0.0
    %669 = vmatprep.subr.mxu0 0.0
    %670 = vmatpush1.msra.mxu0 0.0
    %671 = vmatprep.subr.mxu0 0.0
    %672 = vmatpush1.msra.mxu0 0.0
    %673 = vmatprep.subr.mxu0 0.0
    %674 = vmatpush1.msra.mxu0 0.0
    %675 = vmatprep.subr.mxu0 0.0
    %676 = vmatpush1.msra.mxu0 0.0
    %677 = vmatprep.subr.mxu0 0.0
    %678 = vmatpush1.msra.mxu0 0.0
    %679 = vmatprep.subr.mxu0 0.0
    %680 = vmatpush1.msra.mxu0 0.0
    %681 = vmatprep.subr.mxu0 0.0
    %682 = vmatpush1.msra.mxu0 0.0
    %683 = vmatprep.subr.mxu0 0.0
    %684 = vmatpush1.msra.mxu0 0.0
    %685 = vmatprep.subr.mxu0 0.0
    %686 = vmatpush1.msra.mxu0 0.0
    %687 = vmatprep.subr.mxu0 0.0
    %688 = vmatpush1.msra.mxu0 0.0
    %689 = vmatprep.subr.mxu0 0.0
    %690 = vmatpush1.msra.mxu0 0.0
    %691 = vmatprep.subr.mxu0 0.0
    %692 = vmatpush1.msra.mxu0 0.0
    %693 = vmatprep.subr.mxu0 0.0
    %694 = vmatpush1.msra.mxu0 0.0
    %695 = vmatprep.subr.mxu0 0.0
    %696 = vmatpush1.msra.mxu0 0.0
    %697 = vmatprep.subr.mxu0 0.0
    %698 = vmatpush1.msra.mxu0 0.0
    %699 = vmatprep.subr.mxu0 0.0
    %700 = vmatpush1.msra.mxu0 0.0
    %701 = vmatprep.subr.mxu0 0.0
    %702 = vmatpush1.msra.mxu0 0.0
    %703 = vmatprep.mubr.f32.mxu0 0.0
    %704 = vmatmul.mubr.f32.gmra.mrb[0].mxu0 %v630
    %v705 = vpop.f32.mrb[0].mxu0
    %v706 = vadd.f32 0.0, %v705
    %v707 = vpop.f32.mrb[0].mxu0
    %708 = vmatprep.mubr.f32.mxu0 0.0
    %709 = vmatmul.mubr.f32.gmra.mrb[0].mxu0 %v633
    %v710 = vpop.f32.mrb[0].mxu0
    %v711 = vadd.f32 0.0, %v710
    %v712 = vpop.f32.mrb[0].mxu0
    %713 = vdwg.mxu0
    %v714 = vld [vmem:[%s21] sm:$0x1]
    %v716 = vlaneseq
    %v717 = vshrl.u32 %v716, 7
    %v718 = vsub.s32 0, %v717
    %v719 = vrot.slane %v714, %v718
    %v721 = vadd.f32 %v706, %v719
    %v722 = vadd.f32 %v711, %v719
    %v723 = vld [vmem:[%s23] sm:$0x1]
    %v724 = vld [vmem:[%s25] sm:$0x1]
    %v725 = vmul.f32 %v721, %v182
    %v726 = vmul.f32 %v722, %v189
    %vm727 = vcmask 130048
    %v728 = vsel %vm727, %v725, 0.0
    %v729 = vsel %vm727, %v726, 0.0
    %v730 = vadd.f32 %v728, %v729
    %v731 = vrot.slane %v730, 4
    %v732 = vadd.f32 %v730, %v731
    %v733 = vrot.slane %v732, 2
    %v734 = vadd.f32 %v732, %v733
    %v735 = vrot.slane %v734, 1
    %v736 = vadd.f32 %v734, %v735
    %v737 = vstv %s231
    %v738 = vmul.f32 %v736, %v737
    %v739 = vsub.f32 %v721, %v738
    %v740 = vsub.f32 %v722, %v738
    %v741 = vmul.f32 %v739, %v739
    %v742 = vmul.f32 %v740, %v740
    %v743 = vmul.f32 %v741, %v182
    %v744 = vmul.f32 %v742, %v189
    %v745 = vsel %vm727, %v743, 0.0
    %v746 = vsel %vm727, %v744, 0.0
    %v747 = vadd.f32 %v745, %v746
    %v748 = vrot.slane %v747, 4
    %v749 = vadd.f32 %v747, %v748
    %v750 = vrot.slane %v749, 2
    %v751 = vadd.f32 %v749, %v750
    %v752 = vrot.slane %v751, 1
    %v753 = vadd.f32 %v751, %v752
    %v754 = vmul.f32 %v753, %v737
    %v755 = vadd.f32 %v754, 1e-05
    %v756 = vrsqrt.pop %v755
    %v757 = vmul.f32 %v756, %v723
    %v758 = vlaneseq
    %v759 = vshrl.u32 %v758, 7
    %v760 = vsub.s32 0, %v759
    %v761 = vrot.slane %v757, %v760
    %v762 = vmul.f32 %v739, %v761
    %v763 = vmul.f32 %v740, %v761
    %v765 = vlaneseq
    %v766 = vshrl.u32 %v765, 7
    %v767 = vsub.s32 0, %v766
    %v768 = vrot.slane %v724, %v767
    %v770 = vadd.f32 %v762, %v768
    %v771 = vadd.f32 %v763, %v768
    %vm772 = vcmp.ge.f32.partialorder %v770, 0.0
    %vm773 = vcmp.ge.f32.partialorder %v771, 0.0
    %v774 = vmul.f32 %v770, 0.01
    %v775 = vmul.f32 %v771, 0.01
    %v776 = vsel %vm772, %v770, %v774
    %v777 = vsel %vm773, %v771, %v775
    %v778 = vld [vmem:[%s7] sm:$0x3]
    %v779 = vld [vmem:[%s27] sm:$0x1f]
    %v780 = vld [vmem:[%s29] sm:$0x1]
    %v782 = vlaneseq
    %v783 = vshrl.u32 %v782, 7
    %v784 = vsub.s32 0, %v783
    %v785 = vrot.slane %v780, %v784
    %vm787 = vcmask 39936
    %v789 = vsel %vm787, %v778, 0
    %vm791 = vcmask 1044480
    %v793 = vsel %vm791, %v779, 0
    %795 = vmatprep.subr.mxu0 0.0
    %796 = vmatpush1.msra.mxu0 %v793
    %797 = vmatprep.subr.mxu0 0.0
    %798 = vmatpush1.msra.mxu0 0.0
    %799 = vmatprep.subr.mxu0 0.0
    %800 = vmatpush1.msra.mxu0 0.0
    %801 = vmatprep.subr.mxu0 0.0
    %802 = vmatpush1.msra.mxu0 0.0
    %803 = vmatprep.subr.mxu0 0.0
    %804 = vmatpush1.msra.mxu0 0.0
    %805 = vmatprep.subr.mxu0 0.0
    %806 = vmatpush1.msra.mxu0 0.0
    %807 = vmatprep.subr.mxu0 0.0
    %808 = vmatpush1.msra.mxu0 0.0
    %809 = vmatprep.subr.mxu0 0.0
    %810 = vmatpush1.msra.mxu0 0.0
    %811 = vmatprep.subr.mxu0 0.0
    %812 = vmatpush1.msra.mxu0 0.0
    %813 = vmatprep.subr.mxu0 0.0
    %814 = vmatpush1.msra.mxu0 0.0
    %815 = vmatprep.subr.mxu0 0.0
    %816 = vmatpush1.msra.mxu0 0.0
    %817 = vmatprep.subr.mxu0 0.0
    %818 = vmatpush1.msra.mxu0 0.0
    %819 = vmatprep.subr.mxu0 0.0
    %820 = vmatpush1.msra.mxu0 0.0
    %821 = vmatprep.subr.mxu0 0.0
    %822 = vmatpush1.msra.mxu0 0.0
    %823 = vmatprep.subr.mxu0 0.0
    %824 = vmatpush1.msra.mxu0 0.0
    %825 = vmatprep.subr.mxu0 0.0
    %826 = vmatpush1.msra.mxu0 0.0
    %827 = vmatprep.subr.mxu0 0.0
    %828 = vmatpush1.msra.mxu0 0.0
    %829 = vmatprep.subr.mxu0 0.0
    %830 = vmatpush1.msra.mxu0 0.0
    %831 = vmatprep.subr.mxu0 0.0
    %832 = vmatpush1.msra.mxu0 0.0
    %833 = vmatprep.subr.mxu0 0.0
    %834 = vmatpush1.msra.mxu0 0.0
    %835 = vmatprep.subr.mxu0 0.0
    %836 = vmatpush1.msra.mxu0 0.0
    %837 = vmatprep.subr.mxu0 0.0
    %838 = vmatpush1.msra.mxu0 0.0
    %839 = vmatprep.subr.mxu0 0.0
    %840 = vmatpush1.msra.mxu0 0.0
    %841 = vmatprep.subr.mxu0 0.0
    %842 = vmatpush1.msra.mxu0 0.0
    %843 = vmatprep.subr.mxu0 0.0
    %844 = vmatpush1.msra.mxu0 0.0
    %845 = vmatprep.subr.mxu0 0.0
    %846 = vmatpush1.msra.mxu0 0.0
    %847 = vmatprep.subr.mxu0 0.0
    %848 = vmatpush1.msra.mxu0 0.0
    %849 = vmatprep.subr.mxu0 0.0
    %850 = vmatpush1.msra.mxu0 0.0
    %851 = vmatprep.subr.mxu0 0.0
    %852 = vmatpush1.msra.mxu0 0.0
    %853 = vmatprep.subr.mxu0 0.0
    %854 = vmatpush1.msra.mxu0 0.0
    %855 = vmatprep.subr.mxu0 0.0
    %856 = vmatpush1.msra.mxu0 0.0
    %857 = vmatprep.subr.mxu0 0.0
    %858 = vmatpush1.msra.mxu0 0.0
    %859 = vmatprep.mubr.f32.mxu0 0.0
    %860 = vmatmul.mubr.f32.gmra.mrb[0].mxu0 %v789
    %v861 = vpop.f32.mrb[0].mxu0
    %v862 = vadd.f32 %v785, %v861
    %v863 = vpop.f32.mrb[0].mxu0
    %864 = vdwg.mxu0
    %v865 = vld [vmem:[%s31] sm:$0x1]
    %v866 = vld [vmem:[%s33] sm:$0x1]
    %v867 = vsel %vm217, %v862, 0.0
    %v868 = vrot.slane %v867, 4
    %v869 = vadd.f32 %v867, %v868
    %v870 = vrot.slane %v869, 2
    %v871 = vadd.f32 %v869, %v870
    %v872 = vrot.slane %v871, 1
    %v873 = vadd.f32 %v871, %v872
    %v874 = vrcp.pop 2.0
    %v875 = vmul.f32 %v873, %v874
    %v876 = vsub.f32 %v862, %v875
    %v877 = vmul.f32 %v876, %v876
    %v878 = vsel %vm217, %v877, 0.0
    %v879 = vrot.slane %v878, 4
    %v880 = vadd.f32 %v878, %v879
    %v881 = vrot.slane %v880, 2
    %v882 = vadd.f32 %v880, %v881
    %v883 = vrot.slane %v882, 1
    %v884 = vadd.f32 %v882, %v883
    %v885 = vmul.f32 %v884, %v874
    %v886 = vadd.f32 %v885, 1e-05
    %v887 = vrsqrt.pop %v886
    %v888 = vmul.f32 %v887, %v865
    %v889 = vlaneseq
    %v890 = vshrl.u32 %v889, 7
    %v891 = vsub.s32 0, %v890
    %v892 = vrot.slane %v888, %v891
    %v893 = vmul.f32 %v876, %v892
    %v895 = vlaneseq
    %v896 = vshrl.u32 %v895, 7
    %v897 = vsub.s32 0, %v896
    %v898 = vrot.slane %v866, %v897
    %v900 = vadd.f32 %v893, %v898
    %vm901 = vcmp.ge.f32.partialorder %v900, 0.0
    %v902 = vmul.f32 %v900, 0.01
    %v903 = vsel %vm901, %v900, %v902
    %v904 = vld [vmem:[%s35] sm:$0xff]
    %v905 = vld [vmem:[%s35 + $0x8] sm:$0xff]
    %v906 = vld [vmem:[%s37] sm:$0xff]
    %v907 = vld [vmem:[%s39] sm:$0x1]
    %v908 = vld [vmem:[%s41] sm:$0x1]
    %v909 = vld [vmem:[%s43] sm:$0x1]
    %v910 = vld [vmem:[%s45] sm:$0xff]
    %v911 = vld [vmem:[%s47] sm:$0x1]
    %v912 = vld [vmem:[%s49] sm:$0x1]
    %v913 = vld [vmem:[%s51] sm:$0x1]
    %v915 = vsel %vm727, %v776, 0
    %v918 = vsel %vm727, %v777, 0
    %920 = vmatprep.subr.mxu0 0.0
    %921 = vmatpush1.msra.mxu0 %v904
    %922 = vmatprep.subr.mxu0 0.0
    %923 = vmatpush1.msra.mxu0 %v905
    %924 = vmatprep.subr.mxu0 0.0
    %925 = vmatpush1.msra.mxu0 0.0
    %926 = vmatprep.subr.mxu0 0.0
    %927 = vmatpush1.msra.mxu0 0.0
    %928 = vmatprep.subr.mxu0 0.0
    %929 = vmatpush1.msra.mxu0 0.0
    %930 = vmatprep.subr.mxu0 0.0
    %931 = vmatpush1.msra.mxu0 0.0
    %932 = vmatprep.subr.mxu0 0.0
    %933 = vmatpush1.msra.mxu0 0.0
    %934 = vmatprep.subr.mxu0 0.0
    %935 = vmatpush1.msra.mxu0 0.0
    %936 = vmatprep.subr.mxu0 0.0
    %937 = vmatpush1.msra.mxu0 0.0
    %938 = vmatprep.subr.mxu0 0.0
    %939 = vmatpush1.msra.mxu0 0.0
    %940 = vmatprep.subr.mxu0 0.0
    %941 = vmatpush1.msra.mxu0 0.0
    %942 = vmatprep.subr.mxu0 0.0
    %943 = vmatpush1.msra.mxu0 0.0
    %944 = vmatprep.subr.mxu0 0.0
    %945 = vmatpush1.msra.mxu0 0.0
    %946 = vmatprep.subr.mxu0 0.0
    %947 = vmatpush1.msra.mxu0 0.0
    %948 = vmatprep.subr.mxu0 0.0
    %949 = vmatpush1.msra.mxu0 0.0
    %950 = vmatprep.subr.mxu0 0.0
    %951 = vmatpush1.msra.mxu0 0.0
    %952 = vmatprep.subr.mxu0 0.0
    %953 = vmatpush1.msra.mxu0 0.0
    %954 = vmatprep.subr.mxu0 0.0
    %955 = vmatpush1.msra.mxu0 0.0
    %956 = vmatprep.subr.mxu0 0.0
    %957 = vmatpush1.msra.mxu0 0.0
    %958 = vmatprep.subr.mxu0 0.0
    %959 = vmatpush1.msra.mxu0 0.0
    %960 = vmatprep.subr.mxu0 0.0
    %961 = vmatpush1.msra.mxu0 0.0
    %962 = vmatprep.subr.mxu0 0.0
    %963 = vmatpush1.msra.mxu0 0.0
    %964 = vmatprep.subr.mxu0 0.0
    %965 = vmatpush1.msra.mxu0 0.0
    %966 = vmatprep.subr.mxu0 0.0
    %967 = vmatpush1.msra.mxu0 0.0
    %968 = vmatprep.subr.mxu0 0.0
    %969 = vmatpush1.msra.mxu0 0.0
    %970 = vmatprep.subr.mxu0 0.0
    %971 = vmatpush1.msra.mxu0 0.0
    %972 = vmatprep.subr.mxu0 0.0
    %973 = vmatpush1.msra.mxu0 0.0
    %974 = vmatprep.subr.mxu0 0.0
    %975 = vmatpush1.msra.mxu0 0.0
    %976 = vmatprep.subr.mxu0 0.0
    %977 = vmatpush1.msra.mxu0 0.0
    %978 = vmatprep.subr.mxu0 0.0
    %979 = vmatpush1.msra.mxu0 0.0
    %980 = vmatprep.subr.mxu0 0.0
    %981 = vmatpush1.msra.mxu0 0.0
    %982 = vmatprep.subr.mxu0 0.0
    %983 = vmatpush1.msra.mxu0 0.0
    %984 = vmatprep.mubr.f32.mxu0 0.0
    %985 = vmatmul.mubr.f32.gmra.mrb[0].mxu0 %v915
    %v986 = vpop.f32.mrb[0].mxu0
    %v987 = vadd.f32 0.0, %v986
    %v988 = vpop.f32.mrb[0].mxu0
    %989 = vmatprep.mubr.f32.mxu0 0.0
    %990 = vmatmul.mubr.f32.gmra.mrb[0].mxu0 %v918
    %v991 = vpop.f32.mrb[0].mxu0
    %v992 = vadd.f32 0.0, %v991
    %v993 = vpop.f32.mrb[0].mxu0
    %994 = vdwg.mxu0
    %v996 = vsel %vm282, %v903, 0
    %998 = vmatprep.subr.mxu0 0.0
    %999 = vmatpush1.msra.mxu0 %v906
    %1000 = vmatprep.subr.mxu0 0.0
    %1001 = vmatpush1.msra.mxu0 0.0
    %1002 = vmatprep.subr.mxu0 0.0
    %1003 = vmatpush1.msra.mxu0 0.0
    %1004 = vmatprep.subr.mxu0 0.0
    %1005 = vmatpush1.msra.mxu0 0.0
    %1006 = vmatprep.subr.mxu0 0.0
    %1007 = vmatpush1.msra.mxu0 0.0
    %1008 = vmatprep.subr.mxu0 0.0
    %1009 = vmatpush1.msra.mxu0 0.0
    %1010 = vmatprep.subr.mxu0 0.0
    %1011 = vmatpush1.msra.mxu0 0.0
    %1012 = vmatprep.subr.mxu0 0.0
    %1013 = vmatpush1.msra.mxu0 0.0
    %1014 = vmatprep.subr.mxu0 0.0
    %1015 = vmatpush1.msra.mxu0 0.0
    %1016 = vmatprep.subr.mxu0 0.0
    %1017 = vmatpush1.msra.mxu0 0.0
    %1018 = vmatprep.subr.mxu0 0.0
    %1019 = vmatpush1.msra.mxu0 0.0
    %1020 = vmatprep.subr.mxu0 0.0
    %1021 = vmatpush1.msra.mxu0 0.0
    %1022 = vmatprep.subr.mxu0 0.0
    %1023 = vmatpush1.msra.mxu0 0.0
    %1024 = vmatprep.subr.mxu0 0.0
    %1025 = vmatpush1.msra.mxu0 0.0
    %1026 = vmatprep.subr.mxu0 0.0
    %1027 = vmatpush1.msra.mxu0 0.0
    %1028 = vmatprep.subr.mxu0 0.0
    %1029 = vmatpush1.msra.mxu0 0.0
    %1030 = vmatprep.subr.mxu0 0.0
    %1031 = vmatpush1.msra.mxu0 0.0
    %1032 = vmatprep.subr.mxu0 0.0
    %1033 = vmatpush1.msra.mxu0 0.0
    %1034 = vmatprep.subr.mxu0 0.0
    %1035 = vmatpush1.msra.mxu0 0.0
    %1036 = vmatprep.subr.mxu0 0.0
    %1037 = vmatpush1.msra.mxu0 0.0
    %1038 = vmatprep.subr.mxu0 0.0
    %1039 = vmatpush1.msra.mxu0 0.0
    %1040 = vmatprep.subr.mxu0 0.0
    %1041 = vmatpush1.msra.mxu0 0.0
    %1042 = vmatprep.subr.mxu0 0.0
    %1043 = vmatpush1.msra.mxu0 0.0
    %1044 = vmatprep.subr.mxu0 0.0
    %1045 = vmatpush1.msra.mxu0 0.0
    %1046 = vmatprep.subr.mxu0 0.0
    %1047 = vmatpush1.msra.mxu0 0.0
    %1048 = vmatprep.subr.mxu0 0.0
    %1049 = vmatpush1.msra.mxu0 0.0
    %1050 = vmatprep.subr.mxu0 0.0
    %1051 = vmatpush1.msra.mxu0 0.0
    %1052 = vmatprep.subr.mxu0 0.0
    %1053 = vmatpush1.msra.mxu0 0.0
    %1054 = vmatprep.subr.mxu0 0.0
    %1055 = vmatpush1.msra.mxu0 0.0
    %1056 = vmatprep.subr.mxu0 0.0
    %1057 = vmatpush1.msra.mxu0 0.0
    %1058 = vmatprep.subr.mxu0 0.0
    %1059 = vmatpush1.msra.mxu0 0.0
    %1060 = vmatprep.subr.mxu0 0.0
    %1061 = vmatpush1.msra.mxu0 0.0
    %1062 = vmatprep.mubr.f32.mxu0 0.0
    %1063 = vmatmul.mubr.f32.gmra.mrb[0].mxu0 %v996
    %v1064 = vpop.f32.mrb[0].mxu0
    %v1065 = vadd.f32 0.0, %v1064
    %v1066 = vpop.f32.mrb[0].mxu0
    %1067 = vdwg.mxu0
    %v1070 = vunpack.c.l.s4 1966171168
    %v1071 = vunpack.c.0.s8 %v1070
    %v1072 = vlaneseq
    %v1073 = vshrl.u32 %v1072, 7
    %v1074 = vsub.s32 %v1071, %v1073
    %v1075 = vrot.slane %v1065, %v1074
    %v1076 = vcombine.high %v1075, %v1075
    %v1078 = vunpack.c.l.s4 1966171168
    %v1079 = vunpack.c.0.s8 %v1078
    %v1080 = vlaneseq
    %v1081 = vshrl.u32 %v1080, 7
    %v1082 = vsub.s32 %v1079, %v1081
    %v1083 = vrot.slane %v1075, %v1082
    %v1085 = vunpack.c.l.s4 1966171168
    %v1086 = vunpack.c.0.s8 %v1085
    %v1087 = vlaneseq
    %v1088 = vshrl.u32 %v1087, 7
    %v1089 = vsub.s32 %v1086, %v1088
    %v1090 = vrot.slane %v1076, %v1089
    %v1091 = vlaneseq
    %v1092 = vshrl.u32 %v1091, 7
    %v1093 = vsub.s32 0, %v1092
    %v1094 = vrot.slane %v1083, %v1093
    %v1095 = vlaneseq
    %v1096 = vshrl.u32 %v1095, 7
    %v1097 = vsub.s32 0, %v1096
    %v1098 = vrot.slane %v1090, %v1097
    %v1101 = vadd.f32 %v987, %v1094
    %v1102 = vadd.f32 %v992, %v1098
    %v1104 = vlaneseq
    %v1105 = vshrl.u32 %v1104, 7
    %v1106 = vsub.s32 0, %v1105
    %v1107 = vrot.slane %v907, %v1106
    %v1109 = vadd.f32 %v1101, %v1107
    %v1110 = vadd.f32 %v1102, %v1107
    %v1111 = vmul.f32 %v1109, %v182
    %v1112 = vmul.f32 %v1110, %v189
    %v1113 = vsel %vm727, %v1111, 0.0
    %v1114 = vsel %vm727, %v1112, 0.0
    %v1115 = vadd.f32 %v1113, %v1114
    %v1116 = vrot.slane %v1115, 4
    %v1117 = vadd.f32 %v1115, %v1116
    %v1118 = vrot.slane %v1117, 2
    %v1119 = vadd.f32 %v1117, %v1118
    %v1120 = vrot.slane %v1119, 1
    %v1121 = vadd.f32 %v1119, %v1120
    %v1122 = vmul.f32 %v1121, %v737
    %v1123 = vsub.f32 %v1109, %v1122
    %v1124 = vsub.f32 %v1110, %v1122
    %v1125 = vmul.f32 %v1123, %v1123
    %v1126 = vmul.f32 %v1124, %v1124
    %v1127 = vmul.f32 %v1125, %v182
    %v1128 = vmul.f32 %v1126, %v189
    %v1129 = vsel %vm727, %v1127, 0.0
    %v1130 = vsel %vm727, %v1128, 0.0
    %v1131 = vadd.f32 %v1129, %v1130
    %v1132 = vrot.slane %v1131, 4
    %v1133 = vadd.f32 %v1131, %v1132
    %v1134 = vrot.slane %v1133, 2
    %v1135 = vadd.f32 %v1133, %v1134
    %v1136 = vrot.slane %v1135, 1
    %v1137 = vadd.f32 %v1135, %v1136
    %v1138 = vmul.f32 %v1137, %v737
    %v1139 = vadd.f32 %v1138, 1e-05
    %v1140 = vrsqrt.pop %v1139
    %v1141 = vmul.f32 %v1140, %v908
    %v1142 = vlaneseq
    %v1143 = vshrl.u32 %v1142, 7
    %v1144 = vsub.s32 0, %v1143
    %v1145 = vrot.slane %v1141, %v1144
    %v1146 = vmul.f32 %v1123, %v1145
    %v1147 = vmul.f32 %v1124, %v1145
    %v1149 = vlaneseq
    %v1150 = vshrl.u32 %v1149, 7
    %v1151 = vsub.s32 0, %v1150
    %v1152 = vrot.slane %v909, %v1151
    %v1154 = vadd.f32 %v1146, %v1152
    %v1155 = vadd.f32 %v1147, %v1152
    %vm1156 = vcmp.ge.f32.partialorder %v1154, 0.0
    %vm1157 = vcmp.ge.f32.partialorder %v1155, 0.0
    %v1158 = vmul.f32 %v1154, 0.01
    %v1159 = vmul.f32 %v1155, 0.01
    %v1160 = vsel %vm1156, %v1154, %v1158
    %v1161 = vsel %vm1157, %v1155, %v1159
    %v1162 = vmul.f32 %v1160, %v182
    %v1163 = vmul.f32 %v1161, %v189
    %v1165 = vsel %vm727, %v1162, 0
    %1167 = vmatprep.subr.mxu0 0.0
    %1168 = vmatpush1.xpose.msra.mxu0 %v1165
    %1169 = vmatprep.subr.mxu0 0.0
    %1170 = vmatpush1.xpose.msra.mxu0 0.0
    %1171 = vmatprep.subr.mxu0 0.0
    %1172 = vmatpush1.xpose.msra.mxu0 0.0
    %1173 = vmatprep.subr.mxu0 0.0
    %1174 = vmatpush1.xpose.msra.mxu0 0.0
    %1175 = vmatprep.subr.mxu0 0.0
    %1176 = vmatpush1.xpose.msra.mxu0 0.0
    %1177 = vmatprep.subr.mxu0 0.0
    %1178 = vmatpush1.xpose.msra.mxu0 0.0
    %1179 = vmatprep.subr.mxu0 0.0
    %1180 = vmatpush1.xpose.msra.mxu0 0.0
    %1181 = vmatprep.subr.mxu0 0.0
    %1182 = vmatpush1.xpose.msra.mxu0 0.0
    %1183 = vmatprep.subr.mxu0 0.0
    %1184 = vmatpush1.xpose.msra.mxu0 0.0
    %1185 = vmatprep.subr.mxu0 0.0
    %1186 = vmatpush1.xpose.msra.mxu0 0.0
    %1187 = vmatprep.subr.mxu0 0.0
    %1188 = vmatpush1.xpose.msra.mxu0 0.0
    %1189 = vmatprep.subr.mxu0 0.0
    %1190 = vmatpush1.xpose.msra.mxu0 0.0
    %1191 = vmatprep.subr.mxu0 0.0
    %1192 = vmatpush1.xpose.msra.mxu0 0.0
    %1193 = vmatprep.subr.mxu0 0.0
    %1194 = vmatpush1.xpose.msra.mxu0 0.0
    %1195 = vmatprep.subr.mxu0 0.0
    %1196 = vmatpush1.xpose.msra.mxu0 0.0
    %1197 = vmatprep.subr.mxu0 0.0
    %1198 = vmatpush1.xpose.msra.mxu0 0.0
    %1199 = vmatprep.subr.mxu0 0.0
    %1200 = vmatpush1.xpose.msra.mxu0 0.0
    %1201 = vmatprep.subr.mxu0 0.0
    %1202 = vmatpush1.xpose.msra.mxu0 0.0
    %1203 = vmatprep.subr.mxu0 0.0
    %1204 = vmatpush1.xpose.msra.mxu0 0.0
    %1205 = vmatprep.subr.mxu0 0.0
    %1206 = vmatpush1.xpose.msra.mxu0 0.0
    %1207 = vmatprep.subr.mxu0 0.0
    %1208 = vmatpush1.xpose.msra.mxu0 0.0
    %1209 = vmatprep.subr.mxu0 0.0
    %1210 = vmatpush1.xpose.msra.mxu0 0.0
    %1211 = vmatprep.subr.mxu0 0.0
    %1212 = vmatpush1.xpose.msra.mxu0 0.0
    %1213 = vmatprep.subr.mxu0 0.0
    %1214 = vmatpush1.xpose.msra.mxu0 0.0
    %1215 = vmatprep.subr.mxu0 0.0
    %1216 = vmatpush1.xpose.msra.mxu0 0.0
    %1217 = vmatprep.subr.mxu0 0.0
    %1218 = vmatpush1.xpose.msra.mxu0 0.0
    %1219 = vmatprep.subr.mxu0 0.0
    %1220 = vmatpush1.xpose.msra.mxu0 0.0
    %1221 = vmatprep.subr.mxu0 0.0
    %1222 = vmatpush1.xpose.msra.mxu0 0.0
    %1223 = vmatprep.subr.mxu0 0.0
    %1224 = vmatpush1.xpose.msra.mxu0 0.0
    %1225 = vmatprep.subr.mxu0 0.0
    %1226 = vmatpush1.xpose.msra.mxu0 0.0
    %1227 = vmatprep.subr.mxu0 0.0
    %1228 = vmatpush1.xpose.msra.mxu0 0.0
    %1229 = vmatprep.subr.mxu0 0.0
    %1230 = vmatpush1.xpose.msra.mxu0 0.0
    %1231 = vmatprep.mubr.f32.mxu0 0.0
    %1232 = vmatmul.mubr.f32.gmra.mrb[0].mxu0 %v1165
    %v1233 = vpop.f32.mrb[0].mxu0
    %v1234 = vadd.f32 0.0, %v1233
    %v1235 = vpop.f32.mrb[0].mxu0
    %1236 = vdwg.mxu0
    %v1238 = vsel %vm727, %v1163, 0
    %1240 = vmatprep.subr.mxu0 0.0
    %1241 = vmatpush1.xpose.msra.mxu0 %v1238
    %1242 = vmatprep.subr.mxu0 0.0
    %1243 = vmatpush1.xpose.msra.mxu0 0.0
    %1244 = vmatprep.subr.mxu0 0.0
    %1245 = vmatpush1.xpose.msra.mxu0 0.0
    %1246 = vmatprep.subr.mxu0 0.0
    %1247 = vmatpush1.xpose.msra.mxu0 0.0
    %1248 = vmatprep.subr.mxu0 0.0
    %1249 = vmatpush1.xpose.msra.mxu0 0.0
    %1250 = vmatprep.subr.mxu0 0.0
    %1251 = vmatpush1.xpose.msra.mxu0 0.0
    %1252 = vmatprep.subr.mxu0 0.0
    %1253 = vmatpush1.xpose.msra.mxu0 0.0
    %1254 = vmatprep.subr.mxu0 0.0
    %1255 = vmatpush1.xpose.msra.mxu0 0.0
    %1256 = vmatprep.subr.mxu0 0.0
    %1257 = vmatpush1.xpose.msra.mxu0 0.0
    %1258 = vmatprep.subr.mxu0 0.0
    %1259 = vmatpush1.xpose.msra.mxu0 0.0
    %1260 = vmatprep.subr.mxu0 0.0
    %1261 = vmatpush1.xpose.msra.mxu0 0.0
    %1262 = vmatprep.subr.mxu0 0.0
    %1263 = vmatpush1.xpose.msra.mxu0 0.0
    %1264 = vmatprep.subr.mxu0 0.0
    %1265 = vmatpush1.xpose.msra.mxu0 0.0
    %1266 = vmatprep.subr.mxu0 0.0
    %1267 = vmatpush1.xpose.msra.mxu0 0.0
    %1268 = vmatprep.subr.mxu0 0.0
    %1269 = vmatpush1.xpose.msra.mxu0 0.0
    %1270 = vmatprep.subr.mxu0 0.0
    %1271 = vmatpush1.xpose.msra.mxu0 0.0
    %1272 = vmatprep.subr.mxu0 0.0
    %1273 = vmatpush1.xpose.msra.mxu0 0.0
    %1274 = vmatprep.subr.mxu0 0.0
    %1275 = vmatpush1.xpose.msra.mxu0 0.0
    %1276 = vmatprep.subr.mxu0 0.0
    %1277 = vmatpush1.xpose.msra.mxu0 0.0
    %1278 = vmatprep.subr.mxu0 0.0
    %1279 = vmatpush1.xpose.msra.mxu0 0.0
    %1280 = vmatprep.subr.mxu0 0.0
    %1281 = vmatpush1.xpose.msra.mxu0 0.0
    %1282 = vmatprep.subr.mxu0 0.0
    %1283 = vmatpush1.xpose.msra.mxu0 0.0
    %1284 = vmatprep.subr.mxu0 0.0
    %1285 = vmatpush1.xpose.msra.mxu0 0.0
    %1286 = vmatprep.subr.mxu0 0.0
    %1287 = vmatpush1.xpose.msra.mxu0 0.0
    %1288 = vmatprep.subr.mxu0 0.0
    %1289 = vmatpush1.xpose.msra.mxu0 0.0
    %1290 = vmatprep.subr.mxu0 0.0
    %1291 = vmatpush1.xpose.msra.mxu0 0.0
    %1292 = vmatprep.subr.mxu0 0.0
    %1293 = vmatpush1.xpose.msra.mxu0 0.0
    %1294 = vmatprep.subr.mxu0 0.0
    %1295 = vmatpush1.xpose.msra.mxu0 0.0
    %1296 = vmatprep.subr.mxu0 0.0
    %1297 = vmatpush1.xpose.msra.mxu0 0.0
    %1298 = vmatprep.subr.mxu0 0.0
    %1299 = vmatpush1.xpose.msra.mxu0 0.0
    %1300 = vmatprep.subr.mxu0 0.0
    %1301 = vmatpush1.xpose.msra.mxu0 0.0
    %1302 = vmatprep.subr.mxu0 0.0
    %1303 = vmatpush1.xpose.msra.mxu0 0.0
    %1304 = vmatprep.mubr.f32.mxu0 0.0
    %1305 = vmatmul.mubr.f32.gmra.mrb[0].mxu0 %v1238
    %v1306 = vpop.f32.mrb[0].mxu0
    %v1307 = vadd.f32 0.0, %v1306
    %v1308 = vpop.f32.mrb[0].mxu0
    %1309 = vdwg.mxu0
    %v1310 = vmul.f32 %v1234, 0.25
    %v1311 = vmul.f32 %v1307, 0.25
    %v1312 = vsel %vm282, %v1310, -inf
    %1313 = vmax.xlane.f32.xlu0 %v1312
    %v1314 = vpop.xlane.xlu0 %1313
    %v1315 = vsel %vm282, %v1311, -inf
    %1316 = vmax.xlane.f32.xlu0 %v1315
    %v1317 = vpop.xlane.xlu0 %1316
    %v1318 = vsub.f32 %v1310, %v1314
    %v1319 = vsub.f32 %v1311, %v1317
    %v1320 = vmul.f32 %v1318, 1.442695
    %v1321 = vpow.pop %v1320
    %v1322 = vmul.f32 %v1319, 1.442695
    %v1323 = vpow.pop %v1322
    %v1324 = vsel %vm282, %v1321, 0.0
    %1325 = vadd.xlane.f32.xlu0 %v1324
    %v1326 = vpop.xlane.xlu0 %1325
    %v1327 = vsel %vm282, %v1323, 0.0
    %1328 = vadd.xlane.f32.xlu0 %v1327
    %v1329 = vpop.xlane.xlu0 %1328
    %v1330 = vrcp.pop %v1326
    %v1331 = vmul.f32 %v1321, %v1330
    %v1332 = vrcp.pop %v1329
    %v1333 = vmul.f32 %v1323, %v1332
    %v1334 = vsel %vm597, %v1331, 0.0
    %v1335 = vsel %vm598, %v1333, 0.0
    %v1336 = vadd.f32 %v1334, %v623
    %v1337 = vadd.f32 %v1335, %v624
    %v1339 = vsel %vm282, %v1336, 0
    %1341 = vmatprep.subr.mxu0 0.0
    %1342 = vmatpush1.msra.mxu0 %v1162
    %1343 = vmatprep.subr.mxu0 0.0
    %1344 = vmatpush1.msra.mxu0 0.0
    %1345 = vmatprep.subr.mxu0 0.0
    %1346 = vmatpush1.msra.mxu0 0.0
    %1347 = vmatprep.subr.mxu0 0.0
    %1348 = vmatpush1.msra.mxu0 0.0
    %1349 = vmatprep.subr.mxu0 0.0
    %1350 = vmatpush1.msra.mxu0 0.0
    %1351 = vmatprep.subr.mxu0 0.0
    %1352 = vmatpush1.msra.mxu0 0.0
    %1353 = vmatprep.subr.mxu0 0.0
    %1354 = vmatpush1.msra.mxu0 0.0
    %1355 = vmatprep.subr.mxu0 0.0
    %1356 = vmatpush1.msra.mxu0 0.0
    %1357 = vmatprep.subr.mxu0 0.0
    %1358 = vmatpush1.msra.mxu0 0.0
    %1359 = vmatprep.subr.mxu0 0.0
    %1360 = vmatpush1.msra.mxu0 0.0
    %1361 = vmatprep.subr.mxu0 0.0
    %1362 = vmatpush1.msra.mxu0 0.0
    %1363 = vmatprep.subr.mxu0 0.0
    %1364 = vmatpush1.msra.mxu0 0.0
    %1365 = vmatprep.subr.mxu0 0.0
    %1366 = vmatpush1.msra.mxu0 0.0
    %1367 = vmatprep.subr.mxu0 0.0
    %1368 = vmatpush1.msra.mxu0 0.0
    %1369 = vmatprep.subr.mxu0 0.0
    %1370 = vmatpush1.msra.mxu0 0.0
    %1371 = vmatprep.subr.mxu0 0.0
    %1372 = vmatpush1.msra.mxu0 0.0
    %1373 = vmatprep.subr.mxu0 0.0
    %1374 = vmatpush1.msra.mxu0 0.0
    %1375 = vmatprep.subr.mxu0 0.0
    %1376 = vmatpush1.msra.mxu0 0.0
    %1377 = vmatprep.subr.mxu0 0.0
    %1378 = vmatpush1.msra.mxu0 0.0
    %1379 = vmatprep.subr.mxu0 0.0
    %1380 = vmatpush1.msra.mxu0 0.0
    %1381 = vmatprep.subr.mxu0 0.0
    %1382 = vmatpush1.msra.mxu0 0.0
    %1383 = vmatprep.subr.mxu0 0.0
    %1384 = vmatpush1.msra.mxu0 0.0
    %1385 = vmatprep.subr.mxu0 0.0
    %1386 = vmatpush1.msra.mxu0 0.0
    %1387 = vmatprep.subr.mxu0 0.0
    %1388 = vmatpush1.msra.mxu0 0.0
    %1389 = vmatprep.subr.mxu0 0.0
    %1390 = vmatpush1.msra.mxu0 0.0
    %1391 = vmatprep.subr.mxu0 0.0
    %1392 = vmatpush1.msra.mxu0 0.0
    %1393 = vmatprep.subr.mxu0 0.0
    %1394 = vmatpush1.msra.mxu0 0.0
    %1395 = vmatprep.subr.mxu0 0.0
    %1396 = vmatpush1.msra.mxu0 0.0
    %1397 = vmatprep.subr.mxu0 0.0
    %1398 = vmatpush1.msra.mxu0 0.0
    %1399 = vmatprep.subr.mxu0 0.0
    %1400 = vmatpush1.msra.mxu0 0.0
    %1401 = vmatprep.subr.mxu0 0.0
    %1402 = vmatpush1.msra.mxu0 0.0
    %1403 = vmatprep.subr.mxu0 0.0
    %1404 = vmatpush1.msra.mxu0 0.0
    %1405 = vmatprep.mubr.f32.mxu0 0.0
    %1406 = vmatmul.mubr.f32.gmra.mrb[0].mxu0 %v1339
    %v1407 = vpop.f32.mrb[0].mxu0
    %v1408 = vadd.f32 0.0, %v1407
    %v1409 = vpop.f32.mrb[0].mxu0
    %1410 = vdwg.mxu0
    %v1412 = vsel %vm282, %v1337, 0
    %1414 = vmatprep.subr.mxu0 0.0
    %1415 = vmatpush1.msra.mxu0 %v1163
    %1416 = vmatprep.subr.mxu0 0.0
    %1417 = vmatpush1.msra.mxu0 0.0
    %1418 = vmatprep.subr.mxu0 0.0
    %1419 = vmatpush1.msra.mxu0 0.0
    %1420 = vmatprep.subr.mxu0 0.0
    %1421 = vmatpush1.msra.mxu0 0.0
    %1422 = vmatprep.subr.mxu0 0.0
    %1423 = vmatpush1.msra.mxu0 0.0
    %1424 = vmatprep.subr.mxu0 0.0
    %1425 = vmatpush1.msra.mxu0 0.0
    %1426 = vmatprep.subr.mxu0 0.0
    %1427 = vmatpush1.msra.mxu0 0.0
    %1428 = vmatprep.subr.mxu0 0.0
    %1429 = vmatpush1.msra.mxu0 0.0
    %1430 = vmatprep.subr.mxu0 0.0
    %1431 = vmatpush1.msra.mxu0 0.0
    %1432 = vmatprep.subr.mxu0 0.0
    %1433 = vmatpush1.msra.mxu0 0.0
    %1434 = vmatprep.subr.mxu0 0.0
    %1435 = vmatpush1.msra.mxu0 0.0
    %1436 = vmatprep.subr.mxu0 0.0
    %1437 = vmatpush1.msra.mxu0 0.0
    %1438 = vmatprep.subr.mxu0 0.0
    %1439 = vmatpush1.msra.mxu0 0.0
    %1440 = vmatprep.subr.mxu0 0.0
    %1441 = vmatpush1.msra.mxu0 0.0
    %1442 = vmatprep.subr.mxu0 0.0
    %1443 = vmatpush1.msra.mxu0 0.0
    %1444 = vmatprep.subr.mxu0 0.0
    %1445 = vmatpush1.msra.mxu0 0.0
    %1446 = vmatprep.subr.mxu0 0.0
    %1447 = vmatpush1.msra.mxu0 0.0
    %1448 = vmatprep.subr.mxu0 0.0
    %1449 = vmatpush1.msra.mxu0 0.0
    %1450 = vmatprep.subr.mxu0 0.0
    %1451 = vmatpush1.msra.mxu0 0.0
    %1452 = vmatprep.subr.mxu0 0.0
    %1453 = vmatpush1.msra.mxu0 0.0
    %1454 = vmatprep.subr.mxu0 0.0
    %1455 = vmatpush1.msra.mxu0 0.0
    %1456 = vmatprep.subr.mxu0 0.0
    %1457 = vmatpush1.msra.mxu0 0.0
    %1458 = vmatprep.subr.mxu0 0.0
    %1459 = vmatpush1.msra.mxu0 0.0
    %1460 = vmatprep.subr.mxu0 0.0
    %1461 = vmatpush1.msra.mxu0 0.0
    %1462 = vmatprep.subr.mxu0 0.0
    %1463 = vmatpush1.msra.mxu0 0.0
    %1464 = vmatprep.subr.mxu0 0.0
    %1465 = vmatpush1.msra.mxu0 0.0
    %1466 = vmatprep.subr.mxu0 0.0
    %1467 = vmatpush1.msra.mxu0 0.0
    %1468 = vmatprep.subr.mxu0 0.0
    %1469 = vmatpush1.msra.mxu0 0.0
    %1470 = vmatprep.subr.mxu0 0.0
    %1471 = vmatpush1.msra.mxu0 0.0
    %1472 = vmatprep.subr.mxu0 0.0
    %1473 = vmatpush1.msra.mxu0 0.0
    %1474 = vmatprep.subr.mxu0 0.0
    %1475 = vmatpush1.msra.mxu0 0.0
    %1476 = vmatprep.subr.mxu0 0.0
    %1477 = vmatpush1.msra.mxu0 0.0
    %1478 = vmatprep.mubr.f32.mxu0 0.0
    %1479 = vmatmul.mubr.f32.gmra.mrb[0].mxu0 %v1412
    %v1480 = vpop.f32.mrb[0].mxu0
    %v1481 = vadd.f32 0.0, %v1480
    %v1482 = vpop.f32.mrb[0].mxu0
    %1483 = vdwg.mxu0
    %v1485 = vlaneseq
    %v1486 = vshrl.u32 %v1485, 7
    %v1487 = vsub.s32 0, %v1486
    %v1488 = vrot.slane %v911, %v1487
    %1490 = vmatprep.subr.mxu0 0.0
    %1491 = vmatpush1.msra.mxu0 %v910
    %1492 = vmatprep.subr.mxu0 0.0
    %1493 = vmatpush1.msra.mxu0 0.0
    %1494 = vmatprep.subr.mxu0 0.0
    %1495 = vmatpush1.msra.mxu0 0.0
    %1496 = vmatprep.subr.mxu0 0.0
    %1497 = vmatpush1.msra.mxu0 0.0
    %1498 = vmatprep.subr.mxu0 0.0
    %1499 = vmatpush1.msra.mxu0 0.0
    %1500 = vmatprep.subr.mxu0 0.0
    %1501 = vmatpush1.msra.mxu0 0.0
    %1502 = vmatprep.subr.mxu0 0.0
    %1503 = vmatpush1.msra.mxu0 0.0
    %1504 = vmatprep.subr.mxu0 0.0
    %1505 = vmatpush1.msra.mxu0 0.0
    %1506 = vmatprep.subr.mxu0 0.0
    %1507 = vmatpush1.msra.mxu0 0.0
    %1508 = vmatprep.subr.mxu0 0.0
    %1509 = vmatpush1.msra.mxu0 0.0
    %1510 = vmatprep.subr.mxu0 0.0
    %1511 = vmatpush1.msra.mxu0 0.0
    %1512 = vmatprep.subr.mxu0 0.0
    %1513 = vmatpush1.msra.mxu0 0.0
    %1514 = vmatprep.subr.mxu0 0.0
    %1515 = vmatpush1.msra.mxu0 0.0
    %1516 = vmatprep.subr.mxu0 0.0
    %1517 = vmatpush1.msra.mxu0 0.0
    %1518 = vmatprep.subr.mxu0 0.0
    %1519 = vmatpush1.msra.mxu0 0.0
    %1520 = vmatprep.subr.mxu0 0.0
    %1521 = vmatpush1.msra.mxu0 0.0
    %1522 = vmatprep.subr.mxu0 0.0
    %1523 = vmatpush1.msra.mxu0 0.0
    %1524 = vmatprep.subr.mxu0 0.0
    %1525 = vmatpush1.msra.mxu0 0.0
    %1526 = vmatprep.subr.mxu0 0.0
    %1527 = vmatpush1.msra.mxu0 0.0
    %1528 = vmatprep.subr.mxu0 0.0
    %1529 = vmatpush1.msra.mxu0 0.0
    %1530 = vmatprep.subr.mxu0 0.0
    %1531 = vmatpush1.msra.mxu0 0.0
    %1532 = vmatprep.subr.mxu0 0.0
    %1533 = vmatpush1.msra.mxu0 0.0
    %1534 = vmatprep.subr.mxu0 0.0
    %1535 = vmatpush1.msra.mxu0 0.0
    %1536 = vmatprep.subr.mxu0 0.0
    %1537 = vmatpush1.msra.mxu0 0.0
    %1538 = vmatprep.subr.mxu0 0.0
    %1539 = vmatpush1.msra.mxu0 0.0
    %1540 = vmatprep.subr.mxu0 0.0
    %1541 = vmatpush1.msra.mxu0 0.0
    %1542 = vmatprep.subr.mxu0 0.0
    %1543 = vmatpush1.msra.mxu0 0.0
    %1544 = vmatprep.subr.mxu0 0.0
    %1545 = vmatpush1.msra.mxu0 0.0
    %1546 = vmatprep.subr.mxu0 0.0
    %1547 = vmatpush1.msra.mxu0 0.0
    %1548 = vmatprep.subr.mxu0 0.0
    %1549 = vmatpush1.msra.mxu0 0.0
    %1550 = vmatprep.subr.mxu0 0.0
    %1551 = vmatpush1.msra.mxu0 0.0
    %1552 = vmatprep.subr.mxu0 0.0
    %1553 = vmatpush1.msra.mxu0 0.0
    %1554 = vmatprep.mubr.f32.mxu0 0.0
    %1555 = vmatmul.mubr.f32.gmra.mrb[0].mxu0 %v996
    %v1556 = vpop.f32.mrb[0].mxu0
    %v1557 = vadd.f32 %v1488, %v1556
    %v1558 = vpop.f32.mrb[0].mxu0
    %1559 = vdwg.mxu0
    %v1560 = vsel %vm217, %v1557, 0.0
    %v1561 = vrot.slane %v1560, 4
    %v1562 = vadd.f32 %v1560, %v1561
    %v1563 = vrot.slane %v1562, 2
    %v1564 = vadd.f32 %v1562, %v1563
    %v1565 = vrot.slane %v1564, 1
    %v1566 = vadd.f32 %v1564, %v1565
    %v1567 = vmul.f32 %v1566, %v874
    %v1568 = vsub.f32 %v1557, %v1567
    %v1569 = vmul.f32 %v1568, %v1568
    %v1570 = vsel %vm217, %v1569, 0.0
    %v1571 = vrot.slane %v1570, 4
    %v1572 = vadd.f32 %v1570, %v1571
    %v1573 = vrot.slane %v1572, 2
    %v1574 = vadd.f32 %v1572, %v1573
    %v1575 = vrot.slane %v1574, 1
    %v1576 = vadd.f32 %v1574, %v1575
    %v1577 = vmul.f32 %v1576, %v874
    %v1578 = vadd.f32 %v1577, 1e-05
    %v1579 = vrsqrt.pop %v1578
    %v1580 = vmul.f32 %v1579, %v912
    %v1581 = vlaneseq
    %v1582 = vshrl.u32 %v1581, 7
    %v1583 = vsub.s32 0, %v1582
    %v1584 = vrot.slane %v1580, %v1583
    %v1585 = vmul.f32 %v1568, %v1584
    %v1587 = vlaneseq
    %v1588 = vshrl.u32 %v1587, 7
    %v1589 = vsub.s32 0, %v1588
    %v1590 = vrot.slane %v913, %v1589
    %v1592 = vadd.f32 %v1585, %v1590
    %vm1593 = vcmp.ge.f32.partialorder %v1592, 0.0
    %v1594 = vmul.f32 %v1592, 0.01
    %v1595 = vsel %vm1593, %v1592, %v1594
    %s1596 = scalar_lea.vmem %s35, 16
    %v1597 = vld [vmem:[%s1596] sm:$0xff]
    %v1598 = vld [vmem:[%s1596 + $0x8] sm:$0xff]
    %s1599 = scalar_lea.vmem %s37, 8
    %v1600 = vld [vmem:[%s1599] sm:$0xff]
    %s1601 = scalar_lea.vmem %s39, 1
    %v1602 = vld [vmem:[%s1601] sm:$0x1]
    %s1603 = scalar_lea.vmem %s41, 1
    %v1604 = vld [vmem:[%s1603] sm:$0x1]
    %s1605 = scalar_lea.vmem %s43, 1
    %v1606 = vld [vmem:[%s1605] sm:$0x1]
    %s1607 = scalar_lea.vmem %s45, 8
    %v1608 = vld [vmem:[%s1607] sm:$0xff]
    %s1609 = scalar_lea.vmem %s47, 1
    %v1610 = vld [vmem:[%s1609] sm:$0x1]
    %s1611 = scalar_lea.vmem %s49, 1
    %v1612 = vld [vmem:[%s1611] sm:$0x1]
    %s1613 = scalar_lea.vmem %s51, 1
    %v1614 = vld [vmem:[%s1613] sm:$0x1]
    %v1616 = vsel %vm727, %v1408, 0
    %v1619 = vsel %vm727, %v1481, 0
    %1621 = vmatprep.subr.mxu0 0.0
    %1622 = vmatpush1.msra.mxu0 %v1597
    %1623 = vmatprep.subr.mxu0 0.0
    %1624 = vmatpush1.msra.mxu0 %v1598
    %1625 = vmatprep.subr.mxu0 0.0
    %1626 = vmatpush1.msra.mxu0 0.0
    %1627 = vmatprep.subr.mxu0 0.0
    %1628 = vmatpush1.msra.mxu0 0.0
    %1629 = vmatprep.subr.mxu0 0.0
    %1630 = vmatpush1.msra.mxu0 0.0
    %1631 = vmatprep.subr.mxu0 0.0
    %1632 = vmatpush1.msra.mxu0 0.0
    %1633 = vmatprep.subr.mxu0 0.0
    %1634 = vmatpush1.msra.mxu0 0.0
    %1635 = vmatprep.subr.mxu0 0.0
    %1636 = vmatpush1.msra.mxu0 0.0
    %1637 = vmatprep.subr.mxu0 0.0
    %1638 = vmatpush1.msra.mxu0 0.0
    %1639 = vmatprep.subr.mxu0 0.0
    %1640 = vmatpush1.msra.mxu0 0.0
    %1641 = vmatprep.subr.mxu0 0.0
    %1642 = vmatpush1.msra.mxu0 0.0
    %1643 = vmatprep.subr.mxu0 0.0
    %1644 = vmatpush1.msra.mxu0 0.0
    %1645 = vmatprep.subr.mxu0 0.0
    %1646 = vmatpush1.msra.mxu0 0.0
    %1647 = vmatprep.subr.mxu0 0.0
    %1648 = vmatpush1.msra.mxu0 0.0
    %1649 = vmatprep.subr.mxu0 0.0
    %1650 = vmatpush1.msra.mxu0 0.0
    %1651 = vmatprep.subr.mxu0 0.0
    %1652 = vmatpush1.msra.mxu0 0.0
    %1653 = vmatprep.subr.mxu0 0.0
    %1654 = vmatpush1.msra.mxu0 0.0
    %1655 = vmatprep.subr.mxu0 0.0
    %1656 = vmatpush1.msra.mxu0 0.0
    %1657 = vmatprep.subr.mxu0 0.0
    %1658 = vmatpush1.msra.mxu0 0.0
    %1659 = vmatprep.subr.mxu0 0.0
    %1660 = vmatpush1.msra.mxu0 0.0
    %1661 = vmatprep.subr.mxu0 0.0
    %1662 = vmatpush1.msra.mxu0 0.0
    %1663 = vmatprep.subr.mxu0 0.0
    %1664 = vmatpush1.msra.mxu0 0.0
    %1665 = vmatprep.subr.mxu0 0.0
    %1666 = vmatpush1.msra.mxu0 0.0
    %1667 = vmatprep.subr.mxu0 0.0
    %1668 = vmatpush1.msra.mxu0 0.0
    %1669 = vmatprep.subr.mxu0 0.0
    %1670 = vmatpush1.msra.mxu0 0.0
    %1671 = vmatprep.subr.mxu0 0.0
    %1672 = vmatpush1.msra.mxu0 0.0
    %1673 = vmatprep.subr.mxu0 0.0
    %1674 = vmatpush1.msra.mxu0 0.0
    %1675 = vmatprep.subr.mxu0 0.0
    %1676 = vmatpush1.msra.mxu0 0.0
    %1677 = vmatprep.subr.mxu0 0.0
    %1678 = vmatpush1.msra.mxu0 0.0
    %1679 = vmatprep.subr.mxu0 0.0
    %1680 = vmatpush1.msra.mxu0 0.0
    %1681 = vmatprep.subr.mxu0 0.0
    %1682 = vmatpush1.msra.mxu0 0.0
    %1683 = vmatprep.subr.mxu0 0.0
    %1684 = vmatpush1.msra.mxu0 0.0
    %1685 = vmatprep.mubr.f32.mxu0 0.0
    %1686 = vmatmul.mubr.f32.gmra.mrb[0].mxu0 %v1616
    %v1687 = vpop.f32.mrb[0].mxu0
    %v1688 = vadd.f32 0.0, %v1687
    %v1689 = vpop.f32.mrb[0].mxu0
    %1690 = vmatprep.mubr.f32.mxu0 0.0
    %1691 = vmatmul.mubr.f32.gmra.mrb[0].mxu0 %v1619
    %v1692 = vpop.f32.mrb[0].mxu0
    %v1693 = vadd.f32 0.0, %v1692
    %v1694 = vpop.f32.mrb[0].mxu0
    %1695 = vdwg.mxu0
    %v1697 = vsel %vm282, %v1595, 0
    %1699 = vmatprep.subr.mxu0 0.0
    %1700 = vmatpush1.msra.mxu0 %v1600
    %1701 = vmatprep.subr.mxu0 0.0
    %1702 = vmatpush1.msra.mxu0 0.0
    %1703 = vmatprep.subr.mxu0 0.0
    %1704 = vmatpush1.msra.mxu0 0.0
    %1705 = vmatprep.subr.mxu0 0.0
    %1706 = vmatpush1.msra.mxu0 0.0
    %1707 = vmatprep.subr.mxu0 0.0
    %1708 = vmatpush1.msra.mxu0 0.0
    %1709 = vmatprep.subr.mxu0 0.0
    %1710 = vmatpush1.msra.mxu0 0.0
    %1711 = vmatprep.subr.mxu0 0.0
    %1712 = vmatpush1.msra.mxu0 0.0
    %1713 = vmatprep.subr.mxu0 0.0
    %1714 = vmatpush1.msra.mxu0 0.0
    %1715 = vmatprep.subr.mxu0 0.0
    %1716 = vmatpush1.msra.mxu0 0.0
    %1717 = vmatprep.subr.mxu0 0.0
    %1718 = vmatpush1.msra.mxu0 0.0
    %1719 = vmatprep.subr.mxu0 0.0
    %1720 = vmatpush1.msra.mxu0 0.0
    %1721 = vmatprep.subr.mxu0 0.0
    %1722 = vmatpush1.msra.mxu0 0.0
    %1723 = vmatprep.subr.mxu0 0.0
    %1724 = vmatpush1.msra.mxu0 0.0
    %1725 = vmatprep.subr.mxu0 0.0
    %1726 = vmatpush1.msra.mxu0 0.0
    %1727 = vmatprep.subr.mxu0 0.0
    %1728 = vmatpush1.msra.mxu0 0.0
    %1729 = vmatprep.subr.mxu0 0.0
    %1730 = vmatpush1.msra.mxu0 0.0
    %1731 = vmatprep.subr.mxu0 0.0
    %1732 = vmatpush1.msra.mxu0 0.0
    %1733 = vmatprep.subr.mxu0 0.0
    %1734 = vmatpush1.msra.mxu0 0.0
    %1735 = vmatprep.subr.mxu0 0.0
    %1736 = vmatpush1.msra.mxu0 0.0
    %1737 = vmatprep.subr.mxu0 0.0
    %1738 = vmatpush1.msra.mxu0 0.0
    %1739 = vmatprep.subr.mxu0 0.0
    %1740 = vmatpush1.msra.mxu0 0.0
    %1741 = vmatprep.subr.mxu0 0.0
    %1742 = vmatpush1.msra.mxu0 0.0
    %1743 = vmatprep.subr.mxu0 0.0
    %1744 = vmatpush1.msra.mxu0 0.0
    %1745 = vmatprep.subr.mxu0 0.0
    %1746 = vmatpush1.msra.mxu0 0.0
    %1747 = vmatprep.subr.mxu0 0.0
    %1748 = vmatpush1.msra.mxu0 0.0
    %1749 = vmatprep.subr.mxu0 0.0
    %1750 = vmatpush1.msra.mxu0 0.0
    %1751 = vmatprep.subr.mxu0 0.0
    %1752 = vmatpush1.msra.mxu0 0.0
    %1753 = vmatprep.subr.mxu0 0.0
    %1754 = vmatpush1.msra.mxu0 0.0
    %1755 = vmatprep.subr.mxu0 0.0
    %1756 = vmatpush1.msra.mxu0 0.0
    %1757 = vmatprep.subr.mxu0 0.0
    %1758 = vmatpush1.msra.mxu0 0.0
    %1759 = vmatprep.subr.mxu0 0.0
    %1760 = vmatpush1.msra.mxu0 0.0
    %1761 = vmatprep.subr.mxu0 0.0
    %1762 = vmatpush1.msra.mxu0 0.0
    %1763 = vmatprep.mubr.f32.mxu0 0.0
    %1764 = vmatmul.mubr.f32.gmra.mrb[0].mxu0 %v1697
    %v1765 = vpop.f32.mrb[0].mxu0
    %v1766 = vadd.f32 0.0, %v1765
    %v1767 = vpop.f32.mrb[0].mxu0
    %1768 = vdwg.mxu0
    %v1771 = vunpack.c.l.s4 1966171168
    %v1772 = vunpack.c.0.s8 %v1771
    %v1773 = vlaneseq
    %v1774 = vshrl.u32 %v1773, 7
    %v1775 = vsub.s32 %v1772, %v1774
    %v1776 = vrot.slane %v1766, %v1775
    %v1777 = vcombine.high %v1776, %v1776
    %v1779 = vunpack.c.l.s4 1966171168
    %v1780 = vunpack.c.0.s8 %v1779
    %v1781 = vlaneseq
    %v1782 = vshrl.u32 %v1781, 7
    %v1783 = vsub.s32 %v1780, %v1782
    %v1784 = vrot.slane %v1776, %v1783
    %v1786 = vunpack.c.l.s4 1966171168
    %v1787 = vunpack.c.0.s8 %v1786
    %v1788 = vlaneseq
    %v1789 = vshrl.u32 %v1788, 7
    %v1790 = vsub.s32 %v1787, %v1789
    %v1791 = vrot.slane %v1777, %v1790
    %v1792 = vlaneseq
    %v1793 = vshrl.u32 %v1792, 7
    %v1794 = vsub.s32 0, %v1793
    %v1795 = vrot.slane %v1784, %v1794
    %v1796 = vlaneseq
    %v1797 = vshrl.u32 %v1796, 7
    %v1798 = vsub.s32 0, %v1797
    %v1799 = vrot.slane %v1791, %v1798
    %v1802 = vadd.f32 %v1688, %v1795
    %v1803 = vadd.f32 %v1693, %v1799
    %v1805 = vlaneseq
    %v1806 = vshrl.u32 %v1805, 7
    %v1807 = vsub.s32 0, %v1806
    %v1808 = vrot.slane %v1602, %v1807
    %v1810 = vadd.f32 %v1802, %v1808
    %v1811 = vadd.f32 %v1803, %v1808
    %v1812 = vmul.f32 %v1810, %v182
    %v1813 = vmul.f32 %v1811, %v189
    %v1814 = vsel %vm727, %v1812, 0.0
    %v1815 = vsel %vm727, %v1813, 0.0
    %v1816 = vadd.f32 %v1814, %v1815
    %v1817 = vrot.slane %v1816, 4
    %v1818 = vadd.f32 %v1816, %v1817
    %v1819 = vrot.slane %v1818, 2
    %v1820 = vadd.f32 %v1818, %v1819
    %v1821 = vrot.slane %v1820, 1
    %v1822 = vadd.f32 %v1820, %v1821
    %v1823 = vmul.f32 %v1822, %v737
    %v1824 = vsub.f32 %v1810, %v1823
    %v1825 = vsub.f32 %v1811, %v1823
    %v1826 = vmul.f32 %v1824, %v1824
    %v1827 = vmul.f32 %v1825, %v1825
    %v1828 = vmul.f32 %v1826, %v182
    %v1829 = vmul.f32 %v1827, %v189
    %v1830 = vsel %vm727, %v1828, 0.0
    %v1831 = vsel %vm727, %v1829, 0.0
    %v1832 = vadd.f32 %v1830, %v1831
    %v1833 = vrot.slane %v1832, 4
    %v1834 = vadd.f32 %v1832, %v1833
    %v1835 = vrot.slane %v1834, 2
    %v1836 = vadd.f32 %v1834, %v1835
    %v1837 = vrot.slane %v1836, 1
    %v1838 = vadd.f32 %v1836, %v1837
    %v1839 = vmul.f32 %v1838, %v737
    %v1840 = vadd.f32 %v1839, 1e-05
    %v1841 = vrsqrt.pop %v1840
    %v1842 = vmul.f32 %v1841, %v1604
    %v1843 = vlaneseq
    %v1844 = vshrl.u32 %v1843, 7
    %v1845 = vsub.s32 0, %v1844
    %v1846 = vrot.slane %v1842, %v1845
    %v1847 = vmul.f32 %v1824, %v1846
    %v1848 = vmul.f32 %v1825, %v1846
    %v1850 = vlaneseq
    %v1851 = vshrl.u32 %v1850, 7
    %v1852 = vsub.s32 0, %v1851
    %v1853 = vrot.slane %v1606, %v1852
    %v1855 = vadd.f32 %v1847, %v1853
    %v1856 = vadd.f32 %v1848, %v1853
    %vm1857 = vcmp.ge.f32.partialorder %v1855, 0.0
    %vm1858 = vcmp.ge.f32.partialorder %v1856, 0.0
    %v1859 = vmul.f32 %v1855, 0.01
    %v1860 = vmul.f32 %v1856, 0.01
    %v1861 = vsel %vm1857, %v1855, %v1859
    %v1862 = vsel %vm1858, %v1856, %v1860
    %v1863 = vmul.f32 %v1861, %v182
    %v1864 = vmul.f32 %v1862, %v189
    %v1866 = vsel %vm727, %v1863, 0
    %1868 = vmatprep.subr.mxu0 0.0
    %1869 = vmatpush1.xpose.msra.mxu0 %v1866
    %1870 = vmatprep.subr.mxu0 0.0
    %1871 = vmatpush1.xpose.msra.mxu0 0.0
    %1872 = vmatprep.subr.mxu0 0.0
    %1873 = vmatpush1.xpose.msra.mxu0 0.0
    %1874 = vmatprep.subr.mxu0 0.0
    %1875 = vmatpush1.xpose.msra.mxu0 0.0
    %1876 = vmatprep.subr.mxu0 0.0
    %1877 = vmatpush1.xpose.msra.mxu0 0.0
    %1878 = vmatprep.subr.mxu0 0.0
    %1879 = vmatpush1.xpose.msra.mxu0 0.0
    %1880 = vmatprep.subr.mxu0 0.0
    %1881 = vmatpush1.xpose.msra.mxu0 0.0
    %1882 = vmatprep.subr.mxu0 0.0
    %1883 = vmatpush1.xpose.msra.mxu0 0.0
    %1884 = vmatprep.subr.mxu0 0.0
    %1885 = vmatpush1.xpose.msra.mxu0 0.0
    %1886 = vmatprep.subr.mxu0 0.0
    %1887 = vmatpush1.xpose.msra.mxu0 0.0
    %1888 = vmatprep.subr.mxu0 0.0
    %1889 = vmatpush1.xpose.msra.mxu0 0.0
    %1890 = vmatprep.subr.mxu0 0.0
    %1891 = vmatpush1.xpose.msra.mxu0 0.0
    %1892 = vmatprep.subr.mxu0 0.0
    %1893 = vmatpush1.xpose.msra.mxu0 0.0
    %1894 = vmatprep.subr.mxu0 0.0
    %1895 = vmatpush1.xpose.msra.mxu0 0.0
    %1896 = vmatprep.subr.mxu0 0.0
    %1897 = vmatpush1.xpose.msra.mxu0 0.0
    %1898 = vmatprep.subr.mxu0 0.0
    %1899 = vmatpush1.xpose.msra.mxu0 0.0
    %1900 = vmatprep.subr.mxu0 0.0
    %1901 = vmatpush1.xpose.msra.mxu0 0.0
    %1902 = vmatprep.subr.mxu0 0.0
    %1903 = vmatpush1.xpose.msra.mxu0 0.0
    %1904 = vmatprep.subr.mxu0 0.0
    %1905 = vmatpush1.xpose.msra.mxu0 0.0
    %1906 = vmatprep.subr.mxu0 0.0
    %1907 = vmatpush1.xpose.msra.mxu0 0.0
    %1908 = vmatprep.subr.mxu0 0.0
    %1909 = vmatpush1.xpose.msra.mxu0 0.0
    %1910 = vmatprep.subr.mxu0 0.0
    %1911 = vmatpush1.xpose.msra.mxu0 0.0
    %1912 = vmatprep.subr.mxu0 0.0
    %1913 = vmatpush1.xpose.msra.mxu0 0.0
    %1914 = vmatprep.subr.mxu0 0.0
    %1915 = vmatpush1.xpose.msra.mxu0 0.0
    %1916 = vmatprep.subr.mxu0 0.0
    %1917 = vmatpush1.xpose.msra.mxu0 0.0
    %1918 = vmatprep.subr.mxu0 0.0
    %1919 = vmatpush1.xpose.msra.mxu0 0.0
    %1920 = vmatprep.subr.mxu0 0.0
    %1921 = vmatpush1.xpose.msra.mxu0 0.0
    %1922 = vmatprep.subr.mxu0 0.0
    %1923 = vmatpush1.xpose.msra.mxu0 0.0
    %1924 = vmatprep.subr.mxu0 0.0
    %1925 = vmatpush1.xpose.msra.mxu0 0.0
    %1926 = vmatprep.subr.mxu0 0.0
    %1927 = vmatpush1.xpose.msra.mxu0 0.0
    %1928 = vmatprep.subr.mxu0 0.0
    %1929 = vmatpush1.xpose.msra.mxu0 0.0
    %1930 = vmatprep.subr.mxu0 0.0
    %1931 = vmatpush1.xpose.msra.mxu0 0.0
    %1932 = vmatprep.mubr.f32.mxu0 0.0
    %1933 = vmatmul.mubr.f32.gmra.mrb[0].mxu0 %v1866
    %v1934 = vpop.f32.mrb[0].mxu0
    %v1935 = vadd.f32 0.0, %v1934
    %v1936 = vpop.f32.mrb[0].mxu0
    %1937 = vdwg.mxu0
    %v1939 = vsel %vm727, %v1864, 0
    %1941 = vmatprep.subr.mxu0 0.0
    %1942 = vmatpush1.xpose.msra.mxu0 %v1939
    %1943 = vmatprep.subr.mxu0 0.0
    %1944 = vmatpush1.xpose.msra.mxu0 0.0
    %1945 = vmatprep.subr.mxu0 0.0
    %1946 = vmatpush1.xpose.msra.mxu0 0.0
    %1947 = vmatprep.subr.mxu0 0.0
    %1948 = vmatpush1.xpose.msra.mxu0 0.0
    %1949 = vmatprep.subr.mxu0 0.0
    %1950 = vmatpush1.xpose.msra.mxu0 0.0
    %1951 = vmatprep.subr.mxu0 0.0
    %1952 = vmatpush1.xpose.msra.mxu0 0.0
    %1953 = vmatprep.subr.mxu0 0.0
    %1954 = vmatpush1.xpose.msra.mxu0 0.0
    %1955 = vmatprep.subr.mxu0 0.0
    %1956 = vmatpush1.xpose.msra.mxu0 0.0
    %1957 = vmatprep.subr.mxu0 0.0
    %1958 = vmatpush1.xpose.msra.mxu0 0.0
    %1959 = vmatprep.subr.mxu0 0.0
    %1960 = vmatpush1.xpose.msra.mxu0 0.0
    %1961 = vmatprep.subr.mxu0 0.0
    %1962 = vmatpush1.xpose.msra.mxu0 0.0
    %1963 = vmatprep.subr.mxu0 0.0
    %1964 = vmatpush1.xpose.msra.mxu0 0.0
    %1965 = vmatprep.subr.mxu0 0.0
    %1966 = vmatpush1.xpose.msra.mxu0 0.0
    %1967 = vmatprep.subr.mxu0 0.0
    %1968 = vmatpush1.xpose.msra.mxu0 0.0
    %1969 = vmatprep.subr.mxu0 0.0
    %1970 = vmatpush1.xpose.msra.mxu0 0.0
    %1971 = vmatprep.subr.mxu0 0.0
    %1972 = vmatpush1.xpose.msra.mxu0 0.0
    %1973 = vmatprep.subr.mxu0 0.0
    %1974 = vmatpush1.xpose.msra.mxu0 0.0
    %1975 = vmatprep.subr.mxu0 0.0
    %1976 = vmatpush1.xpose.msra.mxu0 0.0
    %1977 = vmatprep.subr.mxu0 0.0
    %1978 = vmatpush1.xpose.msra.mxu0 0.0
    %1979 = vmatprep.subr.mxu0 0.0
    %1980 = vmatpush1.xpose.msra.mxu0 0.0
    %1981 = vmatprep.subr.mxu0 0.0
    %1982 = vmatpush1.xpose.msra.mxu0 0.0
    %1983 = vmatprep.subr.mxu0 0.0
    %1984 = vmatpush1.xpose.msra.mxu0 0.0
    %1985 = vmatprep.subr.mxu0 0.0
    %1986 = vmatpush1.xpose.msra.mxu0 0.0
    %1987 = vmatprep.subr.mxu0 0.0
    %1988 = vmatpush1.xpose.msra.mxu0 0.0
    %1989 = vmatprep.subr.mxu0 0.0
    %1990 = vmatpush1.xpose.msra.mxu0 0.0
    %1991 = vmatprep.subr.mxu0 0.0
    %1992 = vmatpush1.xpose.msra.mxu0 0.0
    %1993 = vmatprep.subr.mxu0 0.0
    %1994 = vmatpush1.xpose.msra.mxu0 0.0
    %1995 = vmatprep.subr.mxu0 0.0
    %1996 = vmatpush1.xpose.msra.mxu0 0.0
    %1997 = vmatprep.subr.mxu0 0.0
    %1998 = vmatpush1.xpose.msra.mxu0 0.0
    %1999 = vmatprep.subr.mxu0 0.0
    %2000 = vmatpush1.xpose.msra.mxu0 0.0
    %2001 = vmatprep.subr.mxu0 0.0
    %2002 = vmatpush1.xpose.msra.mxu0 0.0
    %2003 = vmatprep.subr.mxu0 0.0
    %2004 = vmatpush1.xpose.msra.mxu0 0.0
    %2005 = vmatprep.mubr.f32.mxu0 0.0
    %2006 = vmatmul.mubr.f32.gmra.mrb[0].mxu0 %v1939
    %v2007 = vpop.f32.mrb[0].mxu0
    %v2008 = vadd.f32 0.0, %v2007
    %v2009 = vpop.f32.mrb[0].mxu0
    %2010 = vdwg.mxu0
    %v2011 = vmul.f32 %v1935, 0.25
    %v2012 = vmul.f32 %v2008, 0.25
    %v2013 = vsel %vm282, %v2011, -inf
    %2014 = vmax.xlane.f32.xlu0 %v2013
    %v2015 = vpop.xlane.xlu0 %2014
    %v2016 = vsel %vm282, %v2012, -inf
    %2017 = vmax.xlane.f32.xlu0 %v2016
    %v2018 = vpop.xlane.xlu0 %2017
    %v2019 = vsub.f32 %v2011, %v2015
    %v2020 = vsub.f32 %v2012, %v2018
    %v2021 = vmul.f32 %v2019, 1.442695
    %v2022 = vpow.pop %v2021
    %v2023 = vmul.f32 %v2020, 1.442695
    %v2024 = vpow.pop %v2023
    %v2025 = vsel %vm282, %v2022, 0.0
    %2026 = vadd.xlane.f32.xlu0 %v2025
    %v2027 = vpop.xlane.xlu0 %2026
    %v2028 = vsel %vm282, %v2024, 0.0
    %2029 = vadd.xlane.f32.xlu0 %v2028
    %v2030 = vpop.xlane.xlu0 %2029
    %v2031 = vrcp.pop %v2027
    %v2032 = vmul.f32 %v2022, %v2031
    %v2033 = vrcp.pop %v2030
    %v2034 = vmul.f32 %v2024, %v2033
    %v2035 = vsel %vm597, %v2032, 0.0
    %v2036 = vsel %vm598, %v2034, 0.0
    %v2037 = vadd.f32 %v2035, %v623
    %v2038 = vadd.f32 %v2036, %v624
    %v2040 = vsel %vm282, %v2037, 0
    %2042 = vmatprep.subr.mxu0 0.0
    %2043 = vmatpush1.msra.mxu0 %v1863
    %2044 = vmatprep.subr.mxu0 0.0
    %2045 = vmatpush1.msra.mxu0 0.0
    %2046 = vmatprep.subr.mxu0 0.0
    %2047 = vmatpush1.msra.mxu0 0.0
    %2048 = vmatprep.subr.mxu0 0.0
    %2049 = vmatpush1.msra.mxu0 0.0
    %2050 = vmatprep.subr.mxu0 0.0
    %2051 = vmatpush1.msra.mxu0 0.0
    %2052 = vmatprep.subr.mxu0 0.0
    %2053 = vmatpush1.msra.mxu0 0.0
    %2054 = vmatprep.subr.mxu0 0.0
    %2055 = vmatpush1.msra.mxu0 0.0
    %2056 = vmatprep.subr.mxu0 0.0
    %2057 = vmatpush1.msra.mxu0 0.0
    %2058 = vmatprep.subr.mxu0 0.0
    %2059 = vmatpush1.msra.mxu0 0.0
    %2060 = vmatprep.subr.mxu0 0.0
    %2061 = vmatpush1.msra.mxu0 0.0
    %2062 = vmatprep.subr.mxu0 0.0
    %2063 = vmatpush1.msra.mxu0 0.0
    %2064 = vmatprep.subr.mxu0 0.0
    %2065 = vmatpush1.msra.mxu0 0.0
    %2066 = vmatprep.subr.mxu0 0.0
    %2067 = vmatpush1.msra.mxu0 0.0
    %2068 = vmatprep.subr.mxu0 0.0
    %2069 = vmatpush1.msra.mxu0 0.0
    %2070 = vmatprep.subr.mxu0 0.0
    %2071 = vmatpush1.msra.mxu0 0.0
    %2072 = vmatprep.subr.mxu0 0.0
    %2073 = vmatpush1.msra.mxu0 0.0
    %2074 = vmatprep.subr.mxu0 0.0
    %2075 = vmatpush1.msra.mxu0 0.0
    %2076 = vmatprep.subr.mxu0 0.0
    %2077 = vmatpush1.msra.mxu0 0.0
    %2078 = vmatprep.subr.mxu0 0.0
    %2079 = vmatpush1.msra.mxu0 0.0
    %2080 = vmatprep.subr.mxu0 0.0
    %2081 = vmatpush1.msra.mxu0 0.0
    %2082 = vmatprep.subr.mxu0 0.0
    %2083 = vmatpush1.msra.mxu0 0.0
    %2084 = vmatprep.subr.mxu0 0.0
    %2085 = vmatpush1.msra.mxu0 0.0
    %2086 = vmatprep.subr.mxu0 0.0
    %2087 = vmatpush1.msra.mxu0 0.0
    %2088 = vmatprep.subr.mxu0 0.0
    %2089 = vmatpush1.msra.mxu0 0.0
    %2090 = vmatprep.subr.mxu0 0.0
    %2091 = vmatpush1.msra.mxu0 0.0
    %2092 = vmatprep.subr.mxu0 0.0
    %2093 = vmatpush1.msra.mxu0 0.0
    %2094 = vmatprep.subr.mxu0 0.0
    %2095 = vmatpush1.msra.mxu0 0.0
    %2096 = vmatprep.subr.mxu0 0.0
    %2097 = vmatpush1.msra.mxu0 0.0
    %2098 = vmatprep.subr.mxu0 0.0
    %2099 = vmatpush1.msra.mxu0 0.0
    %2100 = vmatprep.subr.mxu0 0.0
    %2101 = vmatpush1.msra.mxu0 0.0
    %2102 = vmatprep.subr.mxu0 0.0
    %2103 = vmatpush1.msra.mxu0 0.0
    %2104 = vmatprep.subr.mxu0 0.0
    %2105 = vmatpush1.msra.mxu0 0.0
    %2106 = vmatprep.mubr.f32.mxu0 0.0
    %2107 = vmatmul.mubr.f32.gmra.mrb[0].mxu0 %v2040
    %v2108 = vpop.f32.mrb[0].mxu0
    %v2109 = vadd.f32 0.0, %v2108
    %v2110 = vpop.f32.mrb[0].mxu0
    %2111 = vdwg.mxu0
    %v2113 = vsel %vm282, %v2038, 0
    %2115 = vmatprep.subr.mxu0 0.0
    %2116 = vmatpush1.msra.mxu0 %v1864
    %2117 = vmatprep.subr.mxu0 0.0
    %2118 = vmatpush1.msra.mxu0 0.0
    %2119 = vmatprep.subr.mxu0 0.0
    %2120 = vmatpush1.msra.mxu0 0.0
    %2121 = vmatprep.subr.mxu0 0.0
    %2122 = vmatpush1.msra.mxu0 0.0
    %2123 = vmatprep.subr.mxu0 0.0
    %2124 = vmatpush1.msra.mxu0 0.0
    %2125 = vmatprep.subr.mxu0 0.0
    %2126 = vmatpush1.msra.mxu0 0.0
    %2127 = vmatprep.subr.mxu0 0.0
    %2128 = vmatpush1.msra.mxu0 0.0
    %2129 = vmatprep.subr.mxu0 0.0
    %2130 = vmatpush1.msra.mxu0 0.0
    %2131 = vmatprep.subr.mxu0 0.0
    %2132 = vmatpush1.msra.mxu0 0.0
    %2133 = vmatprep.subr.mxu0 0.0
    %2134 = vmatpush1.msra.mxu0 0.0
    %2135 = vmatprep.subr.mxu0 0.0
    %2136 = vmatpush1.msra.mxu0 0.0
    %2137 = vmatprep.subr.mxu0 0.0
    %2138 = vmatpush1.msra.mxu0 0.0
    %2139 = vmatprep.subr.mxu0 0.0
    %2140 = vmatpush1.msra.mxu0 0.0
    %2141 = vmatprep.subr.mxu0 0.0
    %2142 = vmatpush1.msra.mxu0 0.0
    %2143 = vmatprep.subr.mxu0 0.0
    %2144 = vmatpush1.msra.mxu0 0.0
    %2145 = vmatprep.subr.mxu0 0.0
    %2146 = vmatpush1.msra.mxu0 0.0
    %2147 = vmatprep.subr.mxu0 0.0
    %2148 = vmatpush1.msra.mxu0 0.0
    %2149 = vmatprep.subr.mxu0 0.0
    %2150 = vmatpush1.msra.mxu0 0.0
    %2151 = vmatprep.subr.mxu0 0.0
    %2152 = vmatpush1.msra.mxu0 0.0
    %2153 = vmatprep.subr.mxu0 0.0
    %2154 = vmatpush1.msra.mxu0 0.0
    %2155 = vmatprep.subr.mxu0 0.0
    %2156 = vmatpush1.msra.mxu0 0.0
    %2157 = vmatprep.subr.mxu0 0.0
    %2158 = vmatpush1.msra.mxu0 0.0
    %2159 = vmatprep.subr.mxu0 0.0
    %2160 = vmatpush1.msra.mxu0 0.0
    %2161 = vmatprep.subr.mxu0 0.0
    %2162 = vmatpush1.msra.mxu0 0.0
    %2163 = vmatprep.subr.mxu0 0.0
    %2164 = vmatpush1.msra.mxu0 0.0
    %2165 = vmatprep.subr.mxu0 0.0
    %2166 = vmatpush1.msra.mxu0 0.0
    %2167 = vmatprep.subr.mxu0 0.0
    %2168 = vmatpush1.msra.mxu0 0.0
    %2169 = vmatprep.subr.mxu0 0.0
    %2170 = vmatpush1.msra.mxu0 0.0
    %2171 = vmatprep.subr.mxu0 0.0
    %2172 = vmatpush1.msra.mxu0 0.0
    %2173 = vmatprep.subr.mxu0 0.0
    %2174 = vmatpush1.msra.mxu0 0.0
    %2175 = vmatprep.subr.mxu0 0.0
    %2176 = vmatpush1.msra.mxu0 0.0
    %2177 = vmatprep.subr.mxu0 0.0
    %2178 = vmatpush1.msra.mxu0 0.0
    %2179 = vmatprep.mubr.f32.mxu0 0.0
    %2180 = vmatmul.mubr.f32.gmra.mrb[0].mxu0 %v2113
    %v2181 = vpop.f32.mrb[0].mxu0
    %v2182 = vadd.f32 0.0, %v2181
    %v2183 = vpop.f32.mrb[0].mxu0
    %2184 = vdwg.mxu0
    %v2186 = vlaneseq
    %v2187 = vshrl.u32 %v2186, 7
    %v2188 = vsub.s32 0, %v2187
    %v2189 = vrot.slane %v1610, %v2188
    %2191 = vmatprep.subr.mxu0 0.0
    %2192 = vmatpush1.msra.mxu0 %v1608
    %2193 = vmatprep.subr.mxu0 0.0
    %2194 = vmatpush1.msra.mxu0 0.0
    %2195 = vmatprep.subr.mxu0 0.0
    %2196 = vmatpush1.msra.mxu0 0.0
    %2197 = vmatprep.subr.mxu0 0.0
    %2198 = vmatpush1.msra.mxu0 0.0
    %2199 = vmatprep.subr.mxu0 0.0
    %2200 = vmatpush1.msra.mxu0 0.0
    %2201 = vmatprep.subr.mxu0 0.0
    %2202 = vmatpush1.msra.mxu0 0.0
    %2203 = vmatprep.subr.mxu0 0.0
    %2204 = vmatpush1.msra.mxu0 0.0
    %2205 = vmatprep.subr.mxu0 0.0
    %2206 = vmatpush1.msra.mxu0 0.0
    %2207 = vmatprep.subr.mxu0 0.0
    %2208 = vmatpush1.msra.mxu0 0.0
    %2209 = vmatprep.subr.mxu0 0.0
    %2210 = vmatpush1.msra.mxu0 0.0
    %2211 = vmatprep.subr.mxu0 0.0
    %2212 = vmatpush1.msra.mxu0 0.0
    %2213 = vmatprep.subr.mxu0 0.0
    %2214 = vmatpush1.msra.mxu0 0.0
    %2215 = vmatprep.subr.mxu0 0.0
    %2216 = vmatpush1.msra.mxu0 0.0
    %2217 = vmatprep.subr.mxu0 0.0
    %2218 = vmatpush1.msra.mxu0 0.0
    %2219 = vmatprep.subr.mxu0 0.0
    %2220 = vmatpush1.msra.mxu0 0.0
    %2221 = vmatprep.subr.mxu0 0.0
    %2222 = vmatpush1.msra.mxu0 0.0
    %2223 = vmatprep.subr.mxu0 0.0
    %2224 = vmatpush1.msra.mxu0 0.0
    %2225 = vmatprep.subr.mxu0 0.0
    %2226 = vmatpush1.msra.mxu0 0.0
    %2227 = vmatprep.subr.mxu0 0.0
    %2228 = vmatpush1.msra.mxu0 0.0
    %2229 = vmatprep.subr.mxu0 0.0
    %2230 = vmatpush1.msra.mxu0 0.0
    %2231 = vmatprep.subr.mxu0 0.0
    %2232 = vmatpush1.msra.mxu0 0.0
    %2233 = vmatprep.subr.mxu0 0.0
    %2234 = vmatpush1.msra.mxu0 0.0
    %2235 = vmatprep.subr.mxu0 0.0
    %2236 = vmatpush1.msra.mxu0 0.0
    %2237 = vmatprep.subr.mxu0 0.0
    %2238 = vmatpush1.msra.mxu0 0.0
    %2239 = vmatprep.subr.mxu0 0.0
    %2240 = vmatpush1.msra.mxu0 0.0
    %2241 = vmatprep.subr.mxu0 0.0
    %2242 = vmatpush1.msra.mxu0 0.0
    %2243 = vmatprep.subr.mxu0 0.0
    %2244 = vmatpush1.msra.mxu0 0.0
    %2245 = vmatprep.subr.mxu0 0.0
    %2246 = vmatpush1.msra.mxu0 0.0
    %2247 = vmatprep.subr.mxu0 0.0
    %2248 = vmatpush1.msra.mxu0 0.0
    %2249 = vmatprep.subr.mxu0 0.0
    %2250 = vmatpush1.msra.mxu0 0.0
    %2251 = vmatprep.subr.mxu0 0.0
    %2252 = vmatpush1.msra.mxu0 0.0
    %2253 = vmatprep.subr.mxu0 0.0
    %2254 = vmatpush1.msra.mxu0 0.0
    %2255 = vmatprep.mubr.f32.mxu0 0.0
    %2256 = vmatmul.mubr.f32.gmra.mrb[0].mxu0 %v1697
    %v2257 = vpop.f32.mrb[0].mxu0
    %v2258 = vadd.f32 %v2189, %v2257
    %v2259 = vpop.f32.mrb[0].mxu0
    %2260 = vdwg.mxu0
    %v2261 = vsel %vm217, %v2258, 0.0
    %v2262 = vrot.slane %v2261, 4
    %v2263 = vadd.f32 %v2261, %v2262
    %v2264 = vrot.slane %v2263, 2
    %v2265 = vadd.f32 %v2263, %v2264
    %v2266 = vrot.slane %v2265, 1
    %v2267 = vadd.f32 %v2265, %v2266
    %v2268 = vmul.f32 %v2267, %v874
    %v2269 = vsub.f32 %v2258, %v2268
    %v2270 = vmul.f32 %v2269, %v2269
    %v2271 = vsel %vm217, %v2270, 0.0
    %v2272 = vrot.slane %v2271, 4
    %v2273 = vadd.f32 %v2271, %v2272
    %v2274 = vrot.slane %v2273, 2
    %v2275 = vadd.f32 %v2273, %v2274
    %v2276 = vrot.slane %v2275, 1
    %v2277 = vadd.f32 %v2275, %v2276
    %v2278 = vmul.f32 %v2277, %v874
    %v2279 = vadd.f32 %v2278, 1e-05
    %v2280 = vrsqrt.pop %v2279
    %v2281 = vmul.f32 %v2280, %v1612
    %v2282 = vlaneseq
    %v2283 = vshrl.u32 %v2282, 7
    %v2284 = vsub.s32 0, %v2283
    %v2285 = vrot.slane %v2281, %v2284
    %v2286 = vmul.f32 %v2269, %v2285
    %v2288 = vlaneseq
    %v2289 = vshrl.u32 %v2288, 7
    %v2290 = vsub.s32 0, %v2289
    %v2291 = vrot.slane %v1614, %v2290
    %v2293 = vadd.f32 %v2286, %v2291
    %vm2294 = vcmp.ge.f32.partialorder %v2293, 0.0
    %v2295 = vmul.f32 %v2293, 0.01
    %v2296 = vsel %vm2294, %v2293, %v2295
    %v2297 = vld [vmem:[%s53] sm:$0xff]
    %v2298 = vld [vmem:[%s53 + $0x8] sm:$0xff]
    %v2300 = vsel %vm727, %v2109, 0
    %v2303 = vsel %vm727, %v2182, 0
    %2305 = vmatprep.subr.mxu0 0.0
    %2306 = vmatpush1.msra.mxu0 %v2297
    %2307 = vmatprep.subr.mxu0 0.0
    %2308 = vmatpush1.msra.mxu0 %v2298
    %2309 = vmatprep.subr.mxu0 0.0
    %2310 = vmatpush1.msra.mxu0 0.0
    %2311 = vmatprep.subr.mxu0 0.0
    %2312 = vmatpush1.msra.mxu0 0.0
    %2313 = vmatprep.subr.mxu0 0.0
    %2314 = vmatpush1.msra.mxu0 0.0
    %2315 = vmatprep.subr.mxu0 0.0
    %2316 = vmatpush1.msra.mxu0 0.0
    %2317 = vmatprep.subr.mxu0 0.0
    %2318 = vmatpush1.msra.mxu0 0.0
    %2319 = vmatprep.subr.mxu0 0.0
    %2320 = vmatpush1.msra.mxu0 0.0
    %2321 = vmatprep.subr.mxu0 0.0
    %2322 = vmatpush1.msra.mxu0 0.0
    %2323 = vmatprep.subr.mxu0 0.0
    %2324 = vmatpush1.msra.mxu0 0.0
    %2325 = vmatprep.subr.mxu0 0.0
    %2326 = vmatpush1.msra.mxu0 0.0
    %2327 = vmatprep.subr.mxu0 0.0
    %2328 = vmatpush1.msra.mxu0 0.0
    %2329 = vmatprep.subr.mxu0 0.0
    %2330 = vmatpush1.msra.mxu0 0.0
    %2331 = vmatprep.subr.mxu0 0.0
    %2332 = vmatpush1.msra.mxu0 0.0
    %2333 = vmatprep.subr.mxu0 0.0
    %2334 = vmatpush1.msra.mxu0 0.0
    %2335 = vmatprep.subr.mxu0 0.0
    %2336 = vmatpush1.msra.mxu0 0.0
    %2337 = vmatprep.subr.mxu0 0.0
    %2338 = vmatpush1.msra.mxu0 0.0
    %2339 = vmatprep.subr.mxu0 0.0
    %2340 = vmatpush1.msra.mxu0 0.0
    %2341 = vmatprep.subr.mxu0 0.0
    %2342 = vmatpush1.msra.mxu0 0.0
    %2343 = vmatprep.subr.mxu0 0.0
    %2344 = vmatpush1.msra.mxu0 0.0
    %2345 = vmatprep.subr.mxu0 0.0
    %2346 = vmatpush1.msra.mxu0 0.0
    %2347 = vmatprep.subr.mxu0 0.0
    %2348 = vmatpush1.msra.mxu0 0.0
    %2349 = vmatprep.subr.mxu0 0.0
    %2350 = vmatpush1.msra.mxu0 0.0
    %2351 = vmatprep.subr.mxu0 0.0
    %2352 = vmatpush1.msra.mxu0 0.0
    %2353 = vmatprep.subr.mxu0 0.0
    %2354 = vmatpush1.msra.mxu0 0.0
    %2355 = vmatprep.subr.mxu0 0.0
    %2356 = vmatpush1.msra.mxu0 0.0
    %2357 = vmatprep.subr.mxu0 0.0
    %2358 = vmatpush1.msra.mxu0 0.0
    %2359 = vmatprep.subr.mxu0 0.0
    %2360 = vmatpush1.msra.mxu0 0.0
    %2361 = vmatprep.subr.mxu0 0.0
    %2362 = vmatpush1.msra.mxu0 0.0
    %2363 = vmatprep.subr.mxu0 0.0
    %2364 = vmatpush1.msra.mxu0 0.0
    %2365 = vmatprep.subr.mxu0 0.0
    %2366 = vmatpush1.msra.mxu0 0.0
    %2367 = vmatprep.subr.mxu0 0.0
    %2368 = vmatpush1.msra.mxu0 0.0
    %2369 = vmatprep.mubr.f32.mxu0 0.0
    %2370 = vmatmul.mubr.f32.gmra.mrb[0].mxu0 %v2300
    %v2371 = vpop.f32.mrb[0].mxu0
    %v2372 = vadd.f32 0.0, %v2371
    %v2373 = vpop.f32.mrb[0].mxu0
    %2374 = vmatprep.mubr.f32.mxu0 0.0
    %2375 = vmatmul.mubr.f32.gmra.mrb[0].mxu0 %v2303
    %v2376 = vpop.f32.mrb[0].mxu0
    %v2377 = vadd.f32 0.0, %v2376
    %v2378 = vpop.f32.mrb[0].mxu0
    %2379 = vdwg.mxu0
    %v2380 = vld [vmem:[%s55] sm:$0xff]
    %v2382 = vsel %vm282, %v2296, 0
    %2384 = vmatprep.subr.mxu0 0.0
    %2385 = vmatpush1.msra.mxu0 %v2380
    %2386 = vmatprep.subr.mxu0 0.0
    %2387 = vmatpush1.msra.mxu0 0.0
    %2388 = vmatprep.subr.mxu0 0.0
    %2389 = vmatpush1.msra.mxu0 0.0
    %2390 = vmatprep.subr.mxu0 0.0
    %2391 = vmatpush1.msra.mxu0 0.0
    %2392 = vmatprep.subr.mxu0 0.0
    %2393 = vmatpush1.msra.mxu0 0.0
    %2394 = vmatprep.subr.mxu0 0.0
    %2395 = vmatpush1.msra.mxu0 0.0
    %2396 = vmatprep.subr.mxu0 0.0
    %2397 = vmatpush1.msra.mxu0 0.0
    %2398 = vmatprep.subr.mxu0 0.0
    %2399 = vmatpush1.msra.mxu0 0.0
    %2400 = vmatprep.subr.mxu0 0.0
    %2401 = vmatpush1.msra.mxu0 0.0
    %2402 = vmatprep.subr.mxu0 0.0
    %2403 = vmatpush1.msra.mxu0 0.0
    %2404 = vmatprep.subr.mxu0 0.0
    %2405 = vmatpush1.msra.mxu0 0.0
    %2406 = vmatprep.subr.mxu0 0.0
    %2407 = vmatpush1.msra.mxu0 0.0
    %2408 = vmatprep.subr.mxu0 0.0
    %2409 = vmatpush1.msra.mxu0 0.0
    %2410 = vmatprep.subr.mxu0 0.0
    %2411 = vmatpush1.msra.mxu0 0.0
    %2412 = vmatprep.subr.mxu0 0.0
    %2413 = vmatpush1.msra.mxu0 0.0
    %2414 = vmatprep.subr.mxu0 0.0
    %2415 = vmatpush1.msra.mxu0 0.0
    %2416 = vmatprep.subr.mxu0 0.0
    %2417 = vmatpush1.msra.mxu0 0.0
    %2418 = vmatprep.subr.mxu0 0.0
    %2419 = vmatpush1.msra.mxu0 0.0
    %2420 = vmatprep.subr.mxu0 0.0
    %2421 = vmatpush1.msra.mxu0 0.0
    %2422 = vmatprep.subr.mxu0 0.0
    %2423 = vmatpush1.msra.mxu0 0.0
    %2424 = vmatprep.subr.mxu0 0.0
    %2425 = vmatpush1.msra.mxu0 0.0
    %2426 = vmatprep.subr.mxu0 0.0
    %2427 = vmatpush1.msra.mxu0 0.0
    %2428 = vmatprep.subr.mxu0 0.0
    %2429 = vmatpush1.msra.mxu0 0.0
    %2430 = vmatprep.subr.mxu0 0.0
    %2431 = vmatpush1.msra.mxu0 0.0
    %2432 = vmatprep.subr.mxu0 0.0
    %2433 = vmatpush1.msra.mxu0 0.0
    %2434 = vmatprep.subr.mxu0 0.0
    %2435 = vmatpush1.msra.mxu0 0.0
    %2436 = vmatprep.subr.mxu0 0.0
    %2437 = vmatpush1.msra.mxu0 0.0
    %2438 = vmatprep.subr.mxu0 0.0
    %2439 = vmatpush1.msra.mxu0 0.0
    %2440 = vmatprep.subr.mxu0 0.0
    %2441 = vmatpush1.msra.mxu0 0.0
    %2442 = vmatprep.subr.mxu0 0.0
    %2443 = vmatpush1.msra.mxu0 0.0
    %2444 = vmatprep.subr.mxu0 0.0
    %2445 = vmatpush1.msra.mxu0 0.0
    %2446 = vmatprep.subr.mxu0 0.0
    %2447 = vmatpush1.msra.mxu0 0.0
    %2448 = vmatprep.mubr.f32.mxu0 0.0
    %2449 = vmatmul.mubr.f32.gmra.mrb[0].mxu0 %v2382
    %v2450 = vpop.f32.mrb[0].mxu0
    %v2451 = vadd.f32 0.0, %v2450
    %v2452 = vpop.f32.mrb[0].mxu0
    %2453 = vdwg.mxu0
    %v2456 = vunpack.c.l.s4 1966171168
    %v2457 = vunpack.c.0.s8 %v2456
    %v2458 = vlaneseq
    %v2459 = vshrl.u32 %v2458, 7
    %v2460 = vsub.s32 %v2457, %v2459
    %v2461 = vrot.slane %v2451, %v2460
    %v2462 = vcombine.high %v2461, %v2461
    %v2464 = vunpack.c.l.s4 1966171168
    %v2465 = vunpack.c.0.s8 %v2464
    %v2466 = vlaneseq
    %v2467 = vshrl.u32 %v2466, 7
    %v2468 = vsub.s32 %v2465, %v2467
    %v2469 = vrot.slane %v2461, %v2468
    %v2471 = vunpack.c.l.s4 1966171168
    %v2472 = vunpack.c.0.s8 %v2471
    %v2473 = vlaneseq
    %v2474 = vshrl.u32 %v2473, 7
    %v2475 = vsub.s32 %v2472, %v2474
    %v2476 = vrot.slane %v2462, %v2475
    %v2477 = vlaneseq
    %v2478 = vshrl.u32 %v2477, 7
    %v2479 = vsub.s32 0, %v2478
    %v2480 = vrot.slane %v2469, %v2479
    %v2481 = vlaneseq
    %v2482 = vshrl.u32 %v2481, 7
    %v2483 = vsub.s32 0, %v2482
    %v2484 = vrot.slane %v2476, %v2483
    %v2487 = vadd.f32 %v2372, %v2480
    %v2488 = vadd.f32 %v2377, %v2484
    %v2489 = vld [vmem:[%s57] sm:$0x1]
    %v2491 = vlaneseq
    %v2492 = vshrl.u32 %v2491, 7
    %v2493 = vsub.s32 0, %v2492
    %v2494 = vrot.slane %v2489, %v2493
    %v2496 = vadd.f32 %v2487, %v2494
    %v2497 = vadd.f32 %v2488, %v2494
    %2498 = vst [vmem:[%s59] sm:$0xff] %v2496
    %2499 = vst [vmem:[%s59 + $0x8] sm:$0xff] %v2497
    %v2500 = vlaneseq
    %v2501 = vand.u32 %v2500, 127
    %vm2502 = vcmp.eq.s32.totalorder %v2501, 1
    %v2503 = vsel %vm2502, 1, 0
    %v2504 = vcvt.s32.f32 %v2503
    %vm2505 = vcmp.eq.s32.totalorder %v2501, 0
    %v2506 = vsel %vm2505, 1, 0
    %v2507 = vcvt.s32.f32 %v2506
    %v2508 = vsub.f32 %v2504, %v2507
    %v2509 = vmul.f32 %v2496, %v2508
    %v2510 = vmul.f32 %v2497, %v2508
    %2511 = vadd.xlane.f32.xlu0 %v2509
    %v2512 = vpop.xlane.xlu0 %2511
    %2513 = vadd.xlane.f32.xlu0 %v2510
    %v2514 = vpop.xlane.xlu0 %2513
    %vm2515 = vcmp.gt.f32.partialorder %v175, 0.0
    %v2518 = vlaneseq
    %v2519 = vshrl.u32 %v2518, 7
    %v2520 = vsub.s32 %v2501, %v2519
    %v2521 = vrot.slane %v2512, %v2520
    %v2522 = vlaneseq
    %v2523 = vshrl.u32 %v2522, 7
    %v2524 = vsub.s32 %v2501, %v2523
    %v2525 = vrot.slane %v2514, %v2524
    %vm2526 = vcmask 1041409
    %v2527 = vsel %vm2526, %v2525, %v2521
    %v2529 = vsel %vm2515, %v2527, -3e+38
    %v2530 = vsel %vm217, %v2529, -inf
    %2531 = vmax.xlane.f32.xlu0 %v2530
    %v2532 = vpop.xlane.xlu0 %2531
    %v2533 = vcvt.s32.f32 %v2501
    %vm2534 = vcmp.ge.f32.partialorder %v2529, %v2532
    %v2535 = vsel %vm2534, %v2533, 8.0
    %v2536 = vsel %vm217, %v2535, inf
    %2537 = vmin.xlane.f32.xlu0 %v2536
    %v2538 = vpop.xlane.xlu0 %2537
    %vm2539 = vcmp.eq.f32.partialorder %v2533, %v2538
    %v2540 = vsel %vm2539, 1, 0
    %v2541 = vcvt.s32.f32 %v2540
    %v2542 = vlaneseq
    %v2543 = vshrl.u32 %v2542, 7
    %v2544 = vsub.s32 0, %v2543
    %v2545 = vrot.slane %v2541, %v2544
    %2547 = vbcast.lane.b32.xlu0 %v2545, 256
    %v2548 = vpop.permute.xlu0 %2547
    %v2549 = vlaneseq
    %v2550 = vshrl.u32 %v2549, 7
    %v2551 = vsub.s32 1, %v2550
    %v2552 = vrot.slane %v2541, %v2551
    %2554 = vbcast.lane.b32.xlu0 %v2552, 256
    %v2555 = vpop.permute.xlu0 %2554
    %v2556 = vmul.f32 %v2496, %v2548
    %v2557 = vmul.f32 %v2497, %v2555
    %v2558 = vrot.slane %v2556, 4
    %v2559 = vadd.f32 %v2556, %v2558
    %v2560 = vrot.slane %v2559, 2
    %v2561 = vadd.f32 %v2559, %v2560
    %v2562 = vrot.slane %v2561, 1
    %v2563 = vadd.f32 %v2561, %v2562
    %v2564 = vrot.slane %v2557, 4
    %v2565 = vadd.f32 %v2557, %v2564
    %v2566 = vrot.slane %v2565, 2
    %v2567 = vadd.f32 %v2565, %v2566
    %v2568 = vrot.slane %v2567, 1
    %v2569 = vadd.f32 %v2567, %v2568
    %v2572 = vsel %vm2526, %v2569, %v2563
    %2574 = vst [vmem:[#allocation11] sm:$0x3] %v2572
    // Predicated region
    $region134: #{_lambda_.1} parent=1 // pred_check
      _
    $region135: #{_lambda_.1} parent=1 // pred_check_branch
      %2576 = sbr.rel (0) target = $region137
    $region136: #{_lambda_.1} parent=1 // pred_region
      _
    $region137: #{_lambda_.1} parent=1 // pred_fallthru
      _
    // Predicated region
    $region138: #{_lambda_.1} parent=1 // pred_check
      _
    $region139: #{_lambda_.1} parent=1 // pred_check_branch
      %2578 = sbr.rel (0) target = $region141
    $region140: #{_lambda_.1} parent=1 // pred_region
      %s2580 = ssub.s32 32, 32
      %2581 = vsyncadd [#allocation4], %s2580
      %s2583 = sshll.u32 [#allocation11], 4
      %s2584 = int_to_ptr.vmem [resolvable:$true] %s2583
      %2586 = dma.vmem_to_hbm [thread:$0]  %s2584, 32, %s61, [#allocation4]
    $region141: #{_lambda_.1} parent=1 // pred_fallthru
      _
    // Predicated region
    $region142: #{_lambda_.1} parent=1 // pred_check
      _
    $region143: #{_lambda_.1} parent=1 // pred_check_branch
      %2588 = sbr.rel (0) target = $region145
    $region144: #{_lambda_.1} parent=1 // pred_region
      _
    $region145: #{_lambda_.1} parent=1 // pred_fallthru
      _
    // Predicated region
    $region146: #{_lambda_.1} parent=1 // pred_check
      _
    $region147: #{_lambda_.1} parent=1 // pred_check_branch
      %2590 = sbr.rel (0) target = $region149
    $region148: #{_lambda_.1} parent=1 // pred_region
      %2591 = dma.done [#allocation4], 32
    $region149: #{_lambda_.1} parent=1 // pred_fallthru
      _
    %2592 = vsyncpa [#allocation4], 1
    %2593 = vsyncpa [#allocation5], 1
    %2594 = vsyncpa [#allocation7], 1
    %2595 = vsyncpa [#allocation10], 1

</llo_original>
